<compile_context>
chip_gen: v7x
topology: tpu7x:2x2x1
jax: 0.10.0
libtpu: 0.0.40
codegen_flags: <defaults>
</compile_context>

<pallas_src>
import functools

import jax
import jax.numpy as jnp
from jax.experimental import pallas as pl
from jax.experimental.pallas import tpu as pltpu


# ---------------------------------------------------------------------------
# Fused Pallas kernel: conv3x3 -> LReLU -> conv3x3 -> LReLU -> + x
# ---------------------------------------------------------------------------
def _upres_block_kernel(xp_ref, w1_ref, b1_ref, w2_ref, b2_ref, o_ref, pad_ref,
                        *, H, W, C, neg_slope, col0):
    """One batch element per grid step.

    xp_ref : (H+2, W+2, C)        input, zero-padded by 1 (conv1 SAME padding)
    w*_ref : (9*C, C)             lane-dense im2col weights (HWIO flattened)
    b*_ref : (1, C)               biases
    o_ref  : (H, W, C)            output block
    pad_ref: (H+2, W+2*col0, C)   VMEM scratch: zero-padded conv1 activation
    """
    f32 = jnp.float32

    # ---- conv1 + bias + LeakyReLU: 9 taps fused into one K=9*C MXU matmul ----
    # Operands stay in the native dtype; only the accumulator is f32.
    taps = [xp_ref[dy:dy + H, dx:dx + W, :]
            for dy in range(3) for dx in range(3)]
    slab = jnp.concatenate(taps, axis=-1)                        # (H, W, 9C)
    h = jnp.dot(slab.reshape(H * W, 9 * C), w1_ref[...],
                preferred_element_type=f32)                      # (H*W, C) f32
    h = h + b1_ref[...].astype(f32)
    h = jnp.where(h >= 0.0, h, neg_slope * h)                    # LeakyReLU

    # ---- zero-padded intermediate for conv2 (Conv2d padding=1) --------------
    # Stored at a sublane-aligned column offset so the centre store is
    # unmasked; the zeroed border supplies conv2's SAME padding.
    pad_ref[...] = jnp.zeros_like(pad_ref)
    pad_ref[1:1 + H, col0:col0 + W, :] = h.reshape(H, W, C).astype(pad_ref.dtype)

    # ---- conv2 + bias + LeakyReLU: again one fused K=9*C matmul --------------
    taps2 = [pad_ref[dy:dy + H, col0 - 1 + dx:col0 - 1 + dx + W, :]
             for dy in range(3) for dx in range(3)]
    slab2 = jnp.concatenate(taps2, axis=-1)                      # (H, W, 9C)
    u = jnp.dot(slab2.reshape(H * W, 9 * C), w2_ref[...],
                preferred_element_type=f32)                      # (H*W, C) f32
    u = u + b2_ref[...].astype(f32)
    u = jnp.where(u >= 0.0, u, neg_slope * u)                    # LeakyReLU

    # ---- residual add from the centre of the already-resident padded input --
    res = xp_ref[1:1 + H, 1:1 + W, :].astype(f32)                # == x
    o_ref[...] = (res + u.reshape(H, W, C)).astype(o_ref.dtype)


def upres_block(x, params, *, neg_slope=0.2):
    """x: (N, H, W, C) NHWC.  params['conv1'/'conv2'] = (w_hwio(3,3,C,C), b(C,))."""
    N, H, W, C = x.shape
    w1, b1 = params["conv1"]
    w2, b2 = params["conv2"]
    assert w1.shape == (3, 3, C, C) and w2.shape == (3, 3, C, C)

    # Single zero-pad of the input (conv1 SAME padding).  conv2's padding is
    # produced inside the kernel; the residual is read from this same buffer.
    xp = jnp.pad(x, ((0, 0), (1, 1), (1, 1), (0, 0)))
    Hp, Wp = H + 2, W + 2

    # Lane-dense im2col weights / biases (host-side, once).
    w1f = w1.reshape(9 * C, C)
    w2f = w2.reshape(9 * C, C)
    b1f = b1.reshape(1, C)
    b2f = b2.reshape(1, C)

    col0 = 8  # sublane-aligned column offset of the activation inside the scratch

    kernel = functools.partial(_upres_block_kernel,
                               H=H, W=W, C=C, neg_slope=neg_slope, col0=col0)

    flops = int(2 * N * (H * W) * (9 * C) * C * 2)               # two 3x3 convs
    bytes_accessed = int((xp.size + x.size + 2 * 9 * C * C + 2 * C)
                         * x.dtype.itemsize)

    return pl.pallas_call(
        kernel,
        out_shape=jax.ShapeDtypeStruct((N, H, W, C), x.dtype),
        grid=(N,),
        in_specs=[
            pl.BlockSpec((None, Hp, Wp, C), lambda n: (n, 0, 0, 0)),
            pl.BlockSpec((9 * C, C), lambda n: (0, 0)),
            pl.BlockSpec((1, C), lambda n: (0, 0)),
            pl.BlockSpec((9 * C, C), lambda n: (0, 0)),
            pl.BlockSpec((1, C), lambda n: (0, 0)),
        ],
        out_specs=pl.BlockSpec((None, H, W, C), lambda n: (n, 0, 0, 0)),
        scratch_shapes=[pltpu.VMEM((H + 2, W + 2 * col0, C), x.dtype)],
        compiler_params=pltpu.CompilerParams(
            dimension_semantics=("parallel",)),
        cost_estimate=pl.CostEstimate(
            flops=flops, transcendentals=0, bytes_accessed=bytes_accessed),
    )(xp, w1f, b1f, w2f, b2f)


# ---------------------------------------------------------------------------
# Parameter construction (spectral norm applied once to the weights)
# ---------------------------------------------------------------------------
def _spectral_normalize(w_hwio):
    # PyTorch spectral_norm divides W viewed as (Cout, Cin*K*K) by its largest
    # singular value (power iteration at convergence -> exact sigma here).
    k1, k2, cin, cout = w_hwio.shape
    mat = jnp.transpose(w_hwio, (3, 2, 0, 1)).reshape(cout, cin * k1 * k2)
    sigma = jnp.linalg.norm(mat, ord=2)
    return w_hwio / sigma


def make_upres_params(key, dim, dtype=jnp.float32):
    keys = jax.random.split(key, 4)

    def conv(kw, kb):
        w = jax.random.normal(kw, (3, 3, dim, dim), jnp.float32) * 0.1
        w = _spectral_normalize(w)
        b = jax.random.normal(kb, (dim,), jnp.float32) * 0.01
        return w.astype(dtype), b.astype(dtype)

    return {"conv1": conv(keys[0], keys[1]),
            "conv2": conv(keys[2], keys[3])}


# ---------------------------------------------------------------------------
# Pure-JAX reference (for correctness check)
# ---------------------------------------------------------------------------
def upres_block_ref(x, params, neg_slope=0.2):
    def conv(h, w, b):
        y = jax.lax.conv_general_dilated(
            h, w, window_strides=(1, 1), padding=[(1, 1), (1, 1)],
            dimension_numbers=("NHWC", "HWIO", "NHWC"))
        y = y + b
        return jnp.where(y >= 0.0, y, neg_slope * y)

    h = conv(x, *params["conv1"])
    h = conv(h, *params["conv2"])
    return x + h


# ---------------------------------------------------------------------------
if __name__ == "__main__":
    N, C, H, W = 2, 4, 16, 16                    # UpResBlock(dim=4)

    key = jax.random.PRNGKey(0)
    kp, kx = jax.random.split(key)
    params = make_upres_params(kp, C)

    x_nchw = jax.random.normal(kx, (N, C, H, W), jnp.float32)   # PyTorch NCHW
    x = jnp.transpose(x_nchw, (0, 2, 3, 1))                     # -> NHWC

    out = jax.block_until_ready(upres_block(x, params))
    ref = upres_block_ref(x, params)

    assert out.shape == (N, H, W, C)
    err = float(jnp.max(jnp.abs(out - ref)))
    assert err < 2e-3, f"mismatch vs JAX reference: {err}"
    print("KERNEL_OK")
</pallas_src>

<mosaic_0001>
module attributes {stable_mosaic.version = 11 : i64} {
  func.func @_upres_block_kernel(%arg0: i32, %arg1: memref<1x18x18x4xf32, #tpu.memory_space<vmem>>, %arg2: memref<36x4xf32, #tpu.memory_space<vmem>>, %arg3: memref<1x4xf32, #tpu.memory_space<vmem>>, %arg4: memref<36x4xf32, #tpu.memory_space<vmem>>, %arg5: memref<1x4xf32, #tpu.memory_space<vmem>>, %arg6: memref<1x16x16x4xf32, #tpu.memory_space<vmem>>, %arg7: memref<18x32x4xf32, #tpu.memory_space<vmem>>) attributes {dimension_semantics = [#tpu.dimension_semantics<parallel>], iteration_bounds = array<i64: 2>, scalar_prefetch = 0 : i64, scratch_operands = 1 : i64, tpu.core_type = #tpu.core_type<tc>, window_params = [{transform_indices = @transform_0, window_bounds = array<i64: 1, 18, 18, 4>}, {pipeline_mode = #tpu.pipeline_mode<synchronous>, transform_indices = @transform_1, window_bounds = array<i64: 36, 4>}, {pipeline_mode = #tpu.pipeline_mode<synchronous>, transform_indices = @transform_2, window_bounds = array<i64: 1, 4>}, {pipeline_mode = #tpu.pipeline_mode<synchronous>, transform_indices = @transform_3, window_bounds = array<i64: 36, 4>}, {pipeline_mode = #tpu.pipeline_mode<synchronous>, transform_indices = @transform_4, window_bounds = array<i64: 1, 4>}, {transform_indices = @transform_5, window_bounds = array<i64: 1, 16, 16, 4>}]} {
    %c0 = arith.constant 0 : index
    %c0_0 = arith.constant 0 : index
    %c0_1 = arith.constant 0 : index
    %c0_2 = arith.constant 0 : index
    %0 = vector.load %arg1[%c0, %c0_0, %c0_1, %c0_2] : memref<1x18x18x4xf32, #tpu.memory_space<vmem>>, vector<1x16x16x4xf32>
    %1 = vector.shape_cast %0 : vector<1x16x16x4xf32> to vector<16x16x4xf32>
    %c0_3 = arith.constant 0 : index
    %c0_4 = arith.constant 0 : index
    %c1 = arith.constant 1 : index
    %c0_5 = arith.constant 0 : index
    %2 = vector.load %arg1[%c0_3, %c0_4, %c1, %c0_5] : memref<1x18x18x4xf32, #tpu.memory_space<vmem>>, vector<1x16x16x4xf32>
    %3 = vector.shape_cast %2 : vector<1x16x16x4xf32> to vector<16x16x4xf32>
    %c0_6 = arith.constant 0 : index
    %c0_7 = arith.constant 0 : index
    %c2 = arith.constant 2 : index
    %c0_8 = arith.constant 0 : index
    %4 = vector.load %arg1[%c0_6, %c0_7, %c2, %c0_8] : memref<1x18x18x4xf32, #tpu.memory_space<vmem>>, vector<1x16x16x4xf32>
    %5 = vector.shape_cast %4 : vector<1x16x16x4xf32> to vector<16x16x4xf32>
    %c0_9 = arith.constant 0 : index
    %c1_10 = arith.constant 1 : index
    %c0_11 = arith.constant 0 : index
    %c0_12 = arith.constant 0 : index
    %6 = vector.load %arg1[%c0_9, %c1_10, %c0_11, %c0_12] : memref<1x18x18x4xf32, #tpu.memory_space<vmem>>, vector<1x16x16x4xf32>
    %7 = vector.shape_cast %6 : vector<1x16x16x4xf32> to vector<16x16x4xf32>
    %c0_13 = arith.constant 0 : index
    %c1_14 = arith.constant 1 : index
    %c1_15 = arith.constant 1 : index
    %c0_16 = arith.constant 0 : index
    %8 = vector.load %arg1[%c0_13, %c1_14, %c1_15, %c0_16] : memref<1x18x18x4xf32, #tpu.memory_space<vmem>>, vector<1x16x16x4xf32>
    %9 = vector.shape_cast %8 : vector<1x16x16x4xf32> to vector<16x16x4xf32>
    %c0_17 = arith.constant 0 : index
    %c1_18 = arith.constant 1 : index
    %c2_19 = arith.constant 2 : index
    %c0_20 = arith.constant 0 : index
    %10 = vector.load %arg1[%c0_17, %c1_18, %c2_19, %c0_20] : memref<1x18x18x4xf32, #tpu.memory_space<vmem>>, vector<1x16x16x4xf32>
    %11 = vector.shape_cast %10 : vector<1x16x16x4xf32> to vector<16x16x4xf32>
    %c0_21 = arith.constant 0 : index
    %c2_22 = arith.constant 2 : index
    %c0_23 = arith.constant 0 : index
    %c0_24 = arith.constant 0 : index
    %12 = vector.load %arg1[%c0_21, %c2_22, %c0_23, %c0_24] : memref<1x18x18x4xf32, #tpu.memory_space<vmem>>, vector<1x16x16x4xf32>
    %13 = vector.shape_cast %12 : vector<1x16x16x4xf32> to vector<16x16x4xf32>
    %c0_25 = arith.constant 0 : index
    %c2_26 = arith.constant 2 : index
    %c1_27 = arith.constant 1 : index
    %c0_28 = arith.constant 0 : index
    %14 = vector.load %arg1[%c0_25, %c2_26, %c1_27, %c0_28] : memref<1x18x18x4xf32, #tpu.memory_space<vmem>>, vector<1x16x16x4xf32>
    %15 = vector.shape_cast %14 : vector<1x16x16x4xf32> to vector<16x16x4xf32>
    %c0_29 = arith.constant 0 : index
    %c2_30 = arith.constant 2 : index
    %c2_31 = arith.constant 2 : index
    %c0_32 = arith.constant 0 : index
    %16 = vector.load %arg1[%c0_29, %c2_30, %c2_31, %c0_32] : memref<1x18x18x4xf32, #tpu.memory_space<vmem>>, vector<1x16x16x4xf32>
    %17 = vector.shape_cast %16 : vector<1x16x16x4xf32> to vector<16x16x4xf32>
    %18 = tpu.concatenate %1, %3, %5, %7, %9, %11, %13, %15, %17 in 2 : vector<16x16x4xf32>, vector<16x16x4xf32>, vector<16x16x4xf32>, vector<16x16x4xf32>, vector<16x16x4xf32>, vector<16x16x4xf32>, vector<16x16x4xf32>, vector<16x16x4xf32>, vector<16x16x4xf32> -> vector<16x16x36xf32>
    %19 = vector.shape_cast %18 : vector<16x16x36xf32> to vector<256x36xf32>
    %c0_33 = arith.constant 0 : index
    %c0_34 = arith.constant 0 : index
    %20 = vector.load %arg2[%c0_33, %c0_34] : memref<36x4xf32, #tpu.memory_space<vmem>>, vector<36x4xf32>
    %cst = arith.constant dense<0.000000e+00> : vector<256x4xf32>
    %21 = tpu.matmul %19, %20, %cst {dimension_numbers = #tpu.dot_dimension_numbers<[1], [0], [0], [1], [0, 0, 1, 1], [], []>} : vector<256x36xf32>, vector<36x4xf32>, vector<256x4xf32> -> vector<256x4xf32>
    %c0_35 = arith.constant 0 : index
    %c0_36 = arith.constant 0 : index
    %22 = vector.load %arg3[%c0_35, %c0_36] : memref<1x4xf32, #tpu.memory_space<vmem>>, vector<1x4xf32>
    %23 = vector.broadcast %22 : vector<1x4xf32> to vector<256x4xf32>
    %24 = arith.addf %21, %23 : vector<256x4xf32>
    %cst_37 = arith.constant 0.000000e+00 : f32
    %25 = vector.broadcast %cst_37 : f32 to vector<256x4xf32>
    %26 = arith.cmpf oge, %24, %25 : vector<256x4xf32>
    %cst_38 = arith.constant 2.000000e-01 : f32
    %27 = vector.broadcast %cst_38 : f32 to vector<256x4xf32>
    %28 = arith.mulf %27, %24 : vector<256x4xf32>
    %29 = arith.select %26, %24, %28 : vector<256x4xi1>, vector<256x4xf32>
    %cst_39 = arith.constant 0.000000e+00 : f32
    %30 = vector.broadcast %cst_39 : f32 to vector<18x32x4xf32>
    %c0_40 = arith.constant 0 : index
    %c0_41 = arith.constant 0 : index
    %c0_42 = arith.constant 0 : index
    %31 = vector.load %arg7[%c0_40, %c0_41, %c0_42] : memref<18x32x4xf32, #tpu.memory_space<vmem>>, vector<18x32x4xf32>
    tpu.vector_store %arg7[%c0_40, %c0_41, %c0_42], %30 {strides = array<i32>} : memref<18x32x4xf32, #tpu.memory_space<vmem>>, vector<18x32x4xf32>,
    %32 = vector.shape_cast %29 : vector<256x4xf32> to vector<16x16x4xf32>
    %c1_43 = arith.constant 1 : index
    %c8 = arith.constant 8 : index
    %c0_44 = arith.constant 0 : index
    %33 = vector.load %arg7[%c1_43, %c8, %c0_44] : memref<18x32x4xf32, #tpu.memory_space<vmem>>, vector<16x16x4xf32>
    tpu.vector_store %arg7[%c1_43, %c8, %c0_44], %32 {strides = array<i32>} : memref<18x32x4xf32, #tpu.memory_space<vmem>>, vector<16x16x4xf32>,
    %c0_45 = arith.constant 0 : index
    %c7 = arith.constant 7 : index
    %c0_46 = arith.constant 0 : index
    %34 = vector.load %arg7[%c0_45, %c7, %c0_46] : memref<18x32x4xf32, #tpu.memory_space<vmem>>, vector<16x16x4xf32>
    %c0_47 = arith.constant 0 : index
    %c8_48 = arith.constant 8 : index
    %c0_49 = arith.constant 0 : index
    %35 = vector.load %arg7[%c0_47, %c8_48, %c0_49] : memref<18x32x4xf32, #tpu.memory_space<vmem>>, vector<16x16x4xf32>
    %c0_50 = arith.constant 0 : index
    %c9 = arith.constant 9 : index
    %c0_51 = arith.constant 0 : index
    %36 = vector.load %arg7[%c0_50, %c9, %c0_51] : memref<18x32x4xf32, #tpu.memory_space<vmem>>, vector<16x16x4xf32>
    %c1_52 = arith.constant 1 : index
    %c7_53 = arith.constant 7 : index
    %c0_54 = arith.constant 0 : index
    %37 = vector.load %arg7[%c1_52, %c7_53, %c0_54] : memref<18x32x4xf32, #tpu.memory_space<vmem>>, vector<16x16x4xf32>
    %c1_55 = arith.constant 1 : index
    %c8_56 = arith.constant 8 : index
    %c0_57 = arith.constant 0 : index
    %38 = vector.load %arg7[%c1_55, %c8_56, %c0_57] : memref<18x32x4xf32, #tpu.memory_space<vmem>>, vector<16x16x4xf32>
    %c1_58 = arith.constant 1 : index
    %c9_59 = arith.constant 9 : index
    %c0_60 = arith.constant 0 : index
    %39 = vector.load %arg7[%c1_58, %c9_59, %c0_60] : memref<18x32x4xf32, #tpu.memory_space<vmem>>, vector<16x16x4xf32>
    %c2_61 = arith.constant 2 : index
    %c7_62 = arith.constant 7 : index
    %c0_63 = arith.constant 0 : index
    %40 = vector.load %arg7[%c2_61, %c7_62, %c0_63] : memref<18x32x4xf32, #tpu.memory_space<vmem>>, vector<16x16x4xf32>
    %c2_64 = arith.constant 2 : index
    %c8_65 = arith.constant 8 : index
    %c0_66 = arith.constant 0 : index
    %41 = vector.load %arg7[%c2_64, %c8_65, %c0_66] : memref<18x32x4xf32, #tpu.memory_space<vmem>>, vector<16x16x4xf32>
    %c2_67 = arith.constant 2 : index
    %c9_68 = arith.constant 9 : index
    %c0_69 = arith.constant 0 : index
    %42 = vector.load %arg7[%c2_67, %c9_68, %c0_69] : memref<18x32x4xf32, #tpu.memory_space<vmem>>, vector<16x16x4xf32>
    %43 = tpu.concatenate %34, %35, %36, %37, %38, %39, %40, %41, %42 in 2 : vector<16x16x4xf32>, vector<16x16x4xf32>, vector<16x16x4xf32>, vector<16x16x4xf32>, vector<16x16x4xf32>, vector<16x16x4xf32>, vector<16x16x4xf32>, vector<16x16x4xf32>, vector<16x16x4xf32> -> vector<16x16x36xf32>
    %44 = vector.shape_cast %43 : vector<16x16x36xf32> to vector<256x36xf32>
    %c0_70 = arith.constant 0 : index
    %c0_71 = arith.constant 0 : index
    %45 = vector.load %arg4[%c0_70, %c0_71] : memref<36x4xf32, #tpu.memory_space<vmem>>, vector<36x4xf32>
    %cst_72 = arith.constant dense<0.000000e+00> : vector<256x4xf32>
    %46 = tpu.matmul %44, %45, %cst_72 {dimension_numbers = #tpu.dot_dimension_numbers<[1], [0], [0], [1], [0, 0, 1, 1], [], []>} : vector<256x36xf32>, vector<36x4xf32>, vector<256x4xf32> -> vector<256x4xf32>
    %c0_73 = arith.constant 0 : index
    %c0_74 = arith.constant 0 : index
    %47 = vector.load %arg5[%c0_73, %c0_74] : memref<1x4xf32, #tpu.memory_space<vmem>>, vector<1x4xf32>
    %48 = vector.broadcast %47 : vector<1x4xf32> to vector<256x4xf32>
    %49 = arith.addf %46, %48 : vector<256x4xf32>
    %cst_75 = arith.constant 0.000000e+00 : f32
    %50 = vector.broadcast %cst_75 : f32 to vector<256x4xf32>
    %51 = arith.cmpf oge, %49, %50 : vector<256x4xf32>
    %cst_76 = arith.constant 2.000000e-01 : f32
    %52 = vector.broadcast %cst_76 : f32 to vector<256x4xf32>
    %53 = arith.mulf %52, %49 : vector<256x4xf32>
    %54 = arith.select %51, %49, %53 : vector<256x4xi1>, vector<256x4xf32>
    %c0_77 = arith.constant 0 : index
    %c1_78 = arith.constant 1 : index
    %c1_79 = arith.constant 1 : index
    %c0_80 = arith.constant 0 : index
    %55 = vector.load %arg1[%c0_77, %c1_78, %c1_79, %c0_80] : memref<1x18x18x4xf32, #tpu.memory_space<vmem>>, vector<1x16x16x4xf32>
    %56 = vector.shape_cast %55 : vector<1x16x16x4xf32> to vector<16x16x4xf32>
    %57 = vector.shape_cast %54 : vector<256x4xf32> to vector<16x16x4xf32>
    %58 = arith.addf %56, %57 : vector<16x16x4xf32>
    %c0_81 = arith.constant 0 : index
    %c0_82 = arith.constant 0 : index
    %c0_83 = arith.constant 0 : index
    %c0_84 = arith.constant 0 : index
    %59 = vector.load %arg6[%c0_81, %c0_82, %c0_83, %c0_84] : memref<1x16x16x4xf32, #tpu.memory_space<vmem>>, vector<1x16x16x4xf32>
    %60 = vector.shape_cast %59 : vector<1x16x16x4xf32> to vector<16x16x4xf32>
    %61 = vector.shape_cast %58 : vector<16x16x4xf32> to vector<1x16x16x4xf32>
    tpu.vector_store %arg6[%c0_81, %c0_82, %c0_83, %c0_84], %61 {strides = array<i32>} : memref<1x16x16x4xf32, #tpu.memory_space<vmem>>, vector<1x16x16x4xf32>,
    return
  }
  func.func @transform_0(%arg0: i32) -> (i32, i32, i32, i32) {
    %c0_i32 = arith.constant 0 : i32
    %c0_i32_0 = arith.constant 0 : i32
    %c0_i32_1 = arith.constant 0 : i32
    %c0_i32_2 = arith.constant 0 : i32
    return %arg0, %c0_i32, %c0_i32_0, %c0_i32_1 : i32, i32, i32, i32
  }
  func.func @transform_1(%arg0: i32) -> (i32, i32) {
    %c0_i32 = arith.constant 0 : i32
    %c0_i32_0 = arith.constant 0 : i32
    %c0_i32_1 = arith.constant 0 : i32
    return %c0_i32, %c0_i32_0 : i32, i32
  }
  func.func @transform_2(%arg0: i32) -> (i32, i32) {
    %c0_i32 = arith.constant 0 : i32
    %c0_i32_0 = arith.constant 0 : i32
    %c0_i32_1 = arith.constant 0 : i32
    return %c0_i32, %c0_i32_0 : i32, i32
  }
  func.func @transform_3(%arg0: i32) -> (i32, i32) {
    %c0_i32 = arith.constant 0 : i32
    %c0_i32_0 = arith.constant 0 : i32
    %c0_i32_1 = arith.constant 0 : i32
    return %c0_i32, %c0_i32_0 : i32, i32
  }
  func.func @transform_4(%arg0: i32) -> (i32, i32) {
    %c0_i32 = arith.constant 0 : i32
    %c0_i32_0 = arith.constant 0 : i32
    %c0_i32_1 = arith.constant 0 : i32
    return %c0_i32, %c0_i32_0 : i32, i32
  }
  func.func @transform_5(%arg0: i32) -> (i32, i32, i32, i32) {
    %c0_i32 = arith.constant 0 : i32
    %c0_i32_0 = arith.constant 0 : i32
    %c0_i32_1 = arith.constant 0 : i32
    %c0_i32_2 = arith.constant 0 : i32
    return %arg0, %c0_i32, %c0_i32_0, %c0_i32_1 : i32, i32, i32, i32
  }
}

</mosaic_0001>

<llo_original>
// kernel: tpu_custom_call.1
$region0: #{tpu_custom_call.1}
  #allocation0 [shape = 'u32[]', space=smem, size = 0x4, offset = 0x4, fixed_abs, tag = 'smem constant byte address 0x4 - core index']
  #allocation1 [shape = 'u32[144,128]{1,0:T(1,128)}', space=vmem, size = 0x12000, scoped, tag = 'internal scratch']
  #allocation2 [shape = 'f32[18,32,4]{2,1,0:T(8,128)}', space=vmem, size = 0x48000, scoped, tag = 'scratch operand']
  %s0 = inlined_call_operand.vmem [shape: f32[2,18,18,4], index: 0, kind: input, shape index: {}]
  %s1 = inlined_call_operand.vmem [shape: f32[36,4], index: 1, kind: input, shape index: {}]
  %s2 = inlined_call_operand.vmem [shape: f32[1,4], index: 2, kind: input, shape index: {}]
  %s3 = inlined_call_operand.vmem [shape: f32[36,4], index: 3, kind: input, shape index: {}]
  %s4 = inlined_call_operand.vmem [shape: f32[1,4], index: 4, kind: input, shape index: {}]
  %s5 = inlined_call_operand.vmem [shape: f32[2,16,16,4], index: 5, kind: output, shape index: {}]
  %s6 = sld [smem:[#allocation0]]
  $region53: #{tpu_custom_call.1} parent=0
    _
  %s8 = ssub.s32 1, %s6
  %s9 = scalar_select 0, %s8, %s6
  loop: start=0, step=1, limit=4
  $region2: #{tpu_custom_call.1} parent=0 // loop_pre_header
    _
  $region3: #{tpu_custom_call.1} parent=0 // loop_header
    %s11 = sphi 0, %s15
    %p12 = scmp.ge.s32.totalorder %s11, 4
    %s21 = sphi 0, %s23
    %s24 = sphi 0, %s21
    %s25 = sphi 0, %s24
    %s41 = sphi 0, %s25
    %s45 = sphi 0, %s45
    %s47 = sphi 0, %s45
    %s48 = sphi 0, %s47
    %s62 = sphi 0, %s48
    %s66 = sphi 0, %s66
    %s68 = sphi 0, %s66
    %s69 = sphi 0, %s68
    %s83 = sphi 0, %s69
    %s87 = sphi 0, %s87
    %s89 = sphi 0, %s87
    %s90 = sphi 0, %s89
    %s104 = sphi 0, %s90
    %s108 = sphi 0, %s108
    %s110 = sphi 0, %s108
    %s111 = sphi 0, %s110
    %s125 = sphi 0, %s111
    %s131 = sphi 0, %s133
    %s134 = sphi 0, %s131
    %s135 = sphi 0, %s134
    %s151 = sphi 0, %s135
  $region4: #{tpu_custom_call.1} parent=0 // loop_header_branch
    %14 = sbr.rel (%p12) target = $region8
  $region5: #{tpu_custom_call.1} parent=0 // loop_body
    %s16 = ssub.s32 %s11, 1
    %s17 = ssub.s32 %s11, 2
    %s18 = sadd.s32 %s11, 1
    %s19 = ssub.s32 %s11, %s18
    %p20 = scmp.eq.s32.totalorder %s19, 0
    %s22 = sadd.s32 %s21, 1
    %s23 = scalar_select %p20, %s21, %s22
    %p26 = pneg %p20
    %p27 = scmp.eq.s32.totalorder %s11, 1
    %p28 = por %p26, %p27
    %p29 = scmp.ne.s32.totalorder %s21, %s24
    %p30 = scmp.eq.s32.totalorder %s11, 0
    %p31 = por %p29, %p30
    %p32 = scmp.ne.s32.totalorder %s21, %s24
    %p33 = scmp.eq.s32.totalorder %s16, 1
    %p34 = por %p32, %p33
    %p35 = scmp.ne.s32.totalorder %s24, %s25
    %p36 = scmp.eq.s32.totalorder %s16, 0
    %p37 = por %p35, %p36
    %p38 = scmp.ne.s32.totalorder %s24, %s25
    %p39 = scmp.eq.s32.totalorder %s17, 1
    %p40 = por %p38, %p39
    %p42 = scmp.ne.s32.totalorder %s25, %s41
    %p43 = scmp.eq.s32.totalorder %s17, 0
    %p44 = por %p42, %p43
    %s46 = sadd.s32 %s45, 1
    %p49 = scmp.eq.s32.totalorder %s11, 1
    %p50 = scmp.ne.s32.totalorder %s45, %s47
    %p51 = scmp.eq.s32.totalorder %s11, 0
    %p52 = por %p50, %p51
    %p53 = scmp.ne.s32.totalorder %s45, %s47
    %p54 = scmp.eq.s32.totalorder %s16, 1
    %p55 = por %p53, %p54
    %p56 = scmp.ne.s32.totalorder %s47, %s48
    %p57 = scmp.eq.s32.totalorder %s16, 0
    %p58 = por %p56, %p57
    %p59 = scmp.ne.s32.totalorder %s47, %s48
    %p60 = scmp.eq.s32.totalorder %s17, 1
    %p61 = por %p59, %p60
    %p63 = scmp.ne.s32.totalorder %s48, %s62
    %p64 = scmp.eq.s32.totalorder %s17, 0
    %p65 = por %p63, %p64
    %s67 = sadd.s32 %s66, 1
    %p70 = scmp.eq.s32.totalorder %s11, 1
    %p71 = scmp.ne.s32.totalorder %s66, %s68
    %p72 = scmp.eq.s32.totalorder %s11, 0
    %p73 = por %p71, %p72
    %p74 = scmp.ne.s32.totalorder %s66, %s68
    %p75 = scmp.eq.s32.totalorder %s16, 1
    %p76 = por %p74, %p75
    %p77 = scmp.ne.s32.totalorder %s68, %s69
    %p78 = scmp.eq.s32.totalorder %s16, 0
    %p79 = por %p77, %p78
    %p80 = scmp.ne.s32.totalorder %s68, %s69
    %p81 = scmp.eq.s32.totalorder %s17, 1
    %p82 = por %p80, %p81
    %p84 = scmp.ne.s32.totalorder %s69, %s83
    %p85 = scmp.eq.s32.totalorder %s17, 0
    %p86 = por %p84, %p85
    %s88 = sadd.s32 %s87, 1
    %p91 = scmp.eq.s32.totalorder %s11, 1
    %p92 = scmp.ne.s32.totalorder %s87, %s89
    %p93 = scmp.eq.s32.totalorder %s11, 0
    %p94 = por %p92, %p93
    %p95 = scmp.ne.s32.totalorder %s87, %s89
    %p96 = scmp.eq.s32.totalorder %s16, 1
    %p97 = por %p95, %p96
    %p98 = scmp.ne.s32.totalorder %s89, %s90
    %p99 = scmp.eq.s32.totalorder %s16, 0
    %p100 = por %p98, %p99
    %p101 = scmp.ne.s32.totalorder %s89, %s90
    %p102 = scmp.eq.s32.totalorder %s17, 1
    %p103 = por %p101, %p102
    %p105 = scmp.ne.s32.totalorder %s90, %s104
    %p106 = scmp.eq.s32.totalorder %s17, 0
    %p107 = por %p105, %p106
    %s109 = sadd.s32 %s108, 1
    %p112 = scmp.eq.s32.totalorder %s11, 1
    %p113 = scmp.ne.s32.totalorder %s108, %s110
    %p114 = scmp.eq.s32.totalorder %s11, 0
    %p115 = por %p113, %p114
    %p116 = scmp.ne.s32.totalorder %s108, %s110
    %p117 = scmp.eq.s32.totalorder %s16, 1
    %p118 = por %p116, %p117
    %p119 = scmp.ne.s32.totalorder %s110, %s111
    %p120 = scmp.eq.s32.totalorder %s16, 0
    %p121 = por %p119, %p120
    %p122 = scmp.ne.s32.totalorder %s110, %s111
    %p123 = scmp.eq.s32.totalorder %s17, 1
    %p124 = por %p122, %p123
    %p126 = scmp.ne.s32.totalorder %s111, %s125
    %p127 = scmp.eq.s32.totalorder %s17, 0
    %p128 = por %p126, %p127
    %s129 = ssub.s32 %s11, %s18
    %p130 = scmp.eq.s32.totalorder %s129, 0
    %s132 = sadd.s32 %s131, 1
    %s133 = scalar_select %p130, %s131, %s132
    %p136 = pneg %p130
    %p137 = scmp.eq.s32.totalorder %s11, 1
    %p138 = por %p136, %p137
    %p139 = scmp.ne.s32.totalorder %s131, %s134
    %p140 = scmp.eq.s32.totalorder %s11, 0
    %p141 = por %p139, %p140
    %p142 = scmp.ne.s32.totalorder %s131, %s134
    %p143 = scmp.eq.s32.totalorder %s16, 1
    %p144 = por %p142, %p143
    %p145 = scmp.ne.s32.totalorder %s134, %s135
    %p146 = scmp.eq.s32.totalorder %s16, 0
    %p147 = por %p145, %p146
    %p148 = scmp.ne.s32.totalorder %s134, %s135
    %p149 = scmp.eq.s32.totalorder %s17, 1
    %p150 = por %p148, %p149
    %p152 = scmp.ne.s32.totalorder %s135, %s151
    %p153 = scmp.eq.s32.totalorder %s17, 0
    %p154 = por %p152, %p153
    %p155 = scmp.le.s32.totalorder 1, %s11
    %p156 = scmp.lt.s32.totalorder %s11, 3
    %p157 = pnand %p155, %p156
    %p158 = pneg %p157
    // Predicated region
    $region9: #{tpu_custom_call.1} parent=5 // pred_check
      _
    $region10: #{tpu_custom_call.1} parent=5 // pred_check_branch
      %160 = sbr.rel (%p157) target = $region12
    $region11: #{tpu_custom_call.1} parent=5 // pred_region
      %s161 = ssub.s32 %s11, 1
      // Predicated region
      $region13: #{tpu_custom_call.1} parent=11 // pred_check
        %p162 = pneg %p58
      $region14: #{tpu_custom_call.1} parent=11 // pred_check_branch
        %164 = sbr.rel (%p162) target = $region16
      $region15: #{tpu_custom_call.1} parent=11 // pred_region
        _
      $region16: #{tpu_custom_call.1} parent=11 // pred_fallthru
        _
      // Predicated region
      $region17: #{tpu_custom_call.1} parent=11 // pred_check
        %p165 = pneg %p79
      $region18: #{tpu_custom_call.1} parent=11 // pred_check_branch
        %167 = sbr.rel (%p165) target = $region20
      $region19: #{tpu_custom_call.1} parent=11 // pred_region
        _
      $region20: #{tpu_custom_call.1} parent=11 // pred_fallthru
        _
      // Predicated region
      $region21: #{tpu_custom_call.1} parent=11 // pred_check
        %p168 = pneg %p100
      $region22: #{tpu_custom_call.1} parent=11 // pred_check_branch
        %170 = sbr.rel (%p168) target = $region24
      $region23: #{tpu_custom_call.1} parent=11 // pred_region
        _
      $region24: #{tpu_custom_call.1} parent=11 // pred_fallthru
        _
      // Predicated region
      $region25: #{tpu_custom_call.1} parent=11 // pred_check
        %p171 = pneg %p121
      $region26: #{tpu_custom_call.1} parent=11 // pred_check_branch
        %173 = sbr.rel (%p171) target = $region28
      $region27: #{tpu_custom_call.1} parent=11 // pred_region
        _
      $region28: #{tpu_custom_call.1} parent=11 // pred_fallthru
        _
    $region12: #{tpu_custom_call.1} parent=5 // pred_fallthru
      _
    %p174 = scmp.lt.s32.totalorder %s11, 2
    // Predicated region
    $region29: #{tpu_custom_call.1} parent=5 // pred_check
      %p175 = pneg %p174
    $region30: #{tpu_custom_call.1} parent=5 // pred_check_branch
      %177 = sbr.rel (%p175) target = $region32
    $region31: #{tpu_custom_call.1} parent=5 // pred_region
      // Predicated region
      $region33: #{tpu_custom_call.1} parent=31 // pred_check
        %p178 = pneg %p31
      $region34: #{tpu_custom_call.1} parent=31 // pred_check_branch
        %180 = sbr.rel (%p178) target = $region36
      $region35: #{tpu_custom_call.1} parent=31 // pred_region
        %p181 = scmp.lt.s32.totalorder %s11, 1
        %s182 = scalar_select %p181, %s11, 1
        %s183 = smul.addr %s182, 54
        %s184 = smul.addr %s183, 8
        %s185 = scalar_lea.vmem %s0, %s184
      $region36: #{tpu_custom_call.1} parent=31 // pred_fallthru
        _
    $region32: #{tpu_custom_call.1} parent=5 // pred_fallthru
      _
    %p186 = scmp.le.s32.totalorder 1, %s11
    %p187 = scmp.lt.s32.totalorder %s11, 3
    %p188 = pnand %p186, %p187
    %p189 = pneg %p188
    // Predicated region
    $region37: #{tpu_custom_call.1} parent=5 // pred_check
      _
    $region38: #{tpu_custom_call.1} parent=5 // pred_check_branch
      %191 = sbr.rel (%p188) target = $region40
    $region39: #{tpu_custom_call.1} parent=5 // pred_region
      %s192 = ssub.s32 %s11, 1
      %p193 = scmp.lt.s32.totalorder %s16, 1
      %s194 = scalar_select %p193, %s16, 1
      %s195 = smul.addr %s194, 54
      %s196 = smul.addr %s195, 8
      %s197 = scalar_lea.vmem %s0, %s196
      %p198 = pneg %p37
      %p199 = pneg %p34
      %p200 = pneg %p58
      %p201 = pneg %p55
      %p202 = pneg %p79
      %p203 = pneg %p76
      %p204 = pneg %p100
      %p205 = pneg %p97
      %p206 = pneg %p121
      %p207 = pneg %p118
      %p208 = pneg %p147
      %p209 = pneg %p144
      %p210 = scmp.lt.s32.totalorder %s16, 1
      %s211 = scalar_select %p210, %s16, 1
      %s212 = smul.addr %s211, 32
      %s213 = smul.addr %s212, 8
      %s214 = scalar_lea.vmem %s5, %s213
      %p215 = scmp.lt.s32.totalorder %s16, 1
      %s216 = scalar_select %p215, %s16, 1
      %s217 = smul.addr %s216, 54
      %s218 = smul.addr %s217, 8
      %s219 = scalar_lea.vmem %s0, %s218
      %p220 = scmp.lt.s32.totalorder %s16, 1
      %s221 = scalar_select %p220, %s16, 1
      %s222 = smul.addr %s221, 32
      %s223 = smul.addr %s222, 8
      %s224 = scalar_lea.vmem %s5, %s223
      %v225 = vld [vmem:[%s219] sm:$0xff]
      %v226 = vld [vmem:[%s219 + $0x8] sm:$0xff]
      %v227 = vld [vmem:[%s219 + $0x18] sm:$0xff]
      %v228 = vld [vmem:[%s219 + $0x20] sm:$0xff]
      %v229 = vld [vmem:[%s219 + $0x30] sm:$0xff]
      %v230 = vld [vmem:[%s219 + $0x38] sm:$0xff]
      %v231 = vld [vmem:[%s219 + $0x48] sm:$0xff]
      %v232 = vld [vmem:[%s219 + $0x50] sm:$0xff]
      %v233 = vld [vmem:[%s219 + $0x60] sm:$0xff]
      %v234 = vld [vmem:[%s219 + $0x68] sm:$0xff]
      %v235 = vld [vmem:[%s219 + $0x78] sm:$0xff]
      %v236 = vld [vmem:[%s219 + $0x80] sm:$0xff]
      %v237 = vld [vmem:[%s219 + $0x90] sm:$0xff]
      %v238 = vld [vmem:[%s219 + $0x98] sm:$0xff]
      %v239 = vld [vmem:[%s219 + $0xa8] sm:$0xff]
      %v240 = vld [vmem:[%s219 + $0xb0] sm:$0xff]
      %v241 = vld [vmem:[%s219 + $0xc0] sm:$0xff]
      %v242 = vld [vmem:[%s219 + $0xc8] sm:$0xff]
      %v243 = vld [vmem:[%s219 + $0xd8] sm:$0xff]
      %v244 = vld [vmem:[%s219 + $0xe0] sm:$0xff]
      %v245 = vld [vmem:[%s219 + $0xf0] sm:$0xff]
      %v246 = vld [vmem:[%s219 + $0xf8] sm:$0xff]
      %v247 = vld [vmem:[%s219 + $0x108] sm:$0xff]
      %v248 = vld [vmem:[%s219 + $0x110] sm:$0xff]
      %v249 = vld [vmem:[%s219 + $0x120] sm:$0xff]
      %v250 = vld [vmem:[%s219 + $0x128] sm:$0xff]
      %v251 = vld [vmem:[%s219 + $0x138] sm:$0xff]
      %v252 = vld [vmem:[%s219 + $0x140] sm:$0xff]
      %v253 = vld [vmem:[%s219 + $0x150] sm:$0xff]
      %v254 = vld [vmem:[%s219 + $0x158] sm:$0xff]
      %v255 = vld [vmem:[%s219 + $0x168] sm:$0xff]
      %v256 = vld [vmem:[%s219 + $0x170] sm:$0xff]
      %v257 = vld [vmem:[%s219 + $0x1] sm:$0xff]
      %v258 = vld [vmem:[%s219 + $0x9] sm:$0xff]
      %v259 = vld [vmem:[%s219 + $0x19] sm:$0xff]
      %v260 = vld [vmem:[%s219 + $0x21] sm:$0xff]
      %v261 = vld [vmem:[%s219 + $0x31] sm:$0xff]
      %v262 = vld [vmem:[%s219 + $0x39] sm:$0xff]
      %v263 = vld [vmem:[%s219 + $0x49] sm:$0xff]
      %v264 = vld [vmem:[%s219 + $0x51] sm:$0xff]
      %v265 = vld [vmem:[%s219 + $0x61] sm:$0xff]
      %v266 = vld [vmem:[%s219 + $0x69] sm:$0xff]
      %v267 = vld [vmem:[%s219 + $0x79] sm:$0xff]
      %v268 = vld [vmem:[%s219 + $0x81] sm:$0xff]
      %v269 = vld [vmem:[%s219 + $0x91] sm:$0xff]
      %v270 = vld [vmem:[%s219 + $0x99] sm:$0xff]
      %v271 = vld [vmem:[%s219 + $0xa9] sm:$0xff]
      %v272 = vld [vmem:[%s219 + $0xb1] sm:$0xff]
      %v273 = vld [vmem:[%s219 + $0xc1] sm:$0xff]
      %v274 = vld [vmem:[%s219 + $0xc9] sm:$0xff]
      %v275 = vld [vmem:[%s219 + $0xd9] sm:$0xff]
      %v276 = vld [vmem:[%s219 + $0xe1] sm:$0xff]
      %v277 = vld [vmem:[%s219 + $0xf1] sm:$0xff]
      %v278 = vld [vmem:[%s219 + $0xf9] sm:$0xff]
      %v279 = vld [vmem:[%s219 + $0x109] sm:$0xff]
      %v280 = vld [vmem:[%s219 + $0x111] sm:$0xff]
      %v281 = vld [vmem:[%s219 + $0x121] sm:$0xff]
      %v282 = vld [vmem:[%s219 + $0x129] sm:$0xff]
      %v283 = vld [vmem:[%s219 + $0x139] sm:$0xff]
      %v284 = vld [vmem:[%s219 + $0x141] sm:$0xff]
      %v285 = vld [vmem:[%s219 + $0x151] sm:$0xff]
      %v286 = vld [vmem:[%s219 + $0x159] sm:$0xff]
      %v287 = vld [vmem:[%s219 + $0x169] sm:$0xff]
      %v288 = vld [vmem:[%s219 + $0x171] sm:$0xff]
      %v289 = vld [vmem:[%s219 + $0x2] sm:$0xff]
      %v290 = vld [vmem:[%s219 + $0xa] sm:$0xff]
      %v291 = vld [vmem:[%s219 + $0x1a] sm:$0xff]
      %v292 = vld [vmem:[%s219 + $0x22] sm:$0xff]
      %v293 = vld [vmem:[%s219 + $0x32] sm:$0xff]
      %v294 = vld [vmem:[%s219 + $0x3a] sm:$0xff]
      %v295 = vld [vmem:[%s219 + $0x4a] sm:$0xff]
      %v296 = vld [vmem:[%s219 + $0x52] sm:$0xff]
      %v297 = vld [vmem:[%s219 + $0x62] sm:$0xff]
      %v298 = vld [vmem:[%s219 + $0x6a] sm:$0xff]
      %v299 = vld [vmem:[%s219 + $0x7a] sm:$0xff]
      %v300 = vld [vmem:[%s219 + $0x82] sm:$0xff]
      %v301 = vld [vmem:[%s219 + $0x92] sm:$0xff]
      %v302 = vld [vmem:[%s219 + $0x9a] sm:$0xff]
      %v303 = vld [vmem:[%s219 + $0xaa] sm:$0xff]
      %v304 = vld [vmem:[%s219 + $0xb2] sm:$0xff]
      %v305 = vld [vmem:[%s219 + $0xc2] sm:$0xff]
      %v306 = vld [vmem:[%s219 + $0xca] sm:$0xff]
      %v307 = vld [vmem:[%s219 + $0xda] sm:$0xff]
      %v308 = vld [vmem:[%s219 + $0xe2] sm:$0xff]
      %v309 = vld [vmem:[%s219 + $0xf2] sm:$0xff]
      %v310 = vld [vmem:[%s219 + $0xfa] sm:$0xff]
      %v311 = vld [vmem:[%s219 + $0x10a] sm:$0xff]
      %v312 = vld [vmem:[%s219 + $0x112] sm:$0xff]
      %v313 = vld [vmem:[%s219 + $0x122] sm:$0xff]
      %v314 = vld [vmem:[%s219 + $0x12a] sm:$0xff]
      %v315 = vld [vmem:[%s219 + $0x13a] sm:$0xff]
      %v316 = vld [vmem:[%s219 + $0x142] sm:$0xff]
      %v317 = vld [vmem:[%s219 + $0x152] sm:$0xff]
      %v318 = vld [vmem:[%s219 + $0x15a] sm:$0xff]
      %v319 = vld [vmem:[%s219 + $0x16a] sm:$0xff]
      %v320 = vld [vmem:[%s219 + $0x172] sm:$0xff]
      %s321 = scalar_lea.vmem %s219, 24
      %v322 = vld [vmem:[%s321] sm:$0xff]
      %v323 = vld [vmem:[%s321 + $0x8] sm:$0xff]
      %v324 = vld [vmem:[%s321 + $0x18] sm:$0xff]
      %v325 = vld [vmem:[%s321 + $0x20] sm:$0xff]
      %v326 = vld [vmem:[%s321 + $0x30] sm:$0xff]
      %v327 = vld [vmem:[%s321 + $0x38] sm:$0xff]
      %v328 = vld [vmem:[%s321 + $0x48] sm:$0xff]
      %v329 = vld [vmem:[%s321 + $0x50] sm:$0xff]
      %v330 = vld [vmem:[%s321 + $0x60] sm:$0xff]
      %v331 = vld [vmem:[%s321 + $0x68] sm:$0xff]
      %v332 = vld [vmem:[%s321 + $0x78] sm:$0xff]
      %v333 = vld [vmem:[%s321 + $0x80] sm:$0xff]
      %v334 = vld [vmem:[%s321 + $0x90] sm:$0xff]
      %v335 = vld [vmem:[%s321 + $0x98] sm:$0xff]
      %v336 = vld [vmem:[%s321 + $0xa8] sm:$0xff]
      %v337 = vld [vmem:[%s321 + $0xb0] sm:$0xff]
      %v338 = vld [vmem:[%s321 + $0xc0] sm:$0xff]
      %v339 = vld [vmem:[%s321 + $0xc8] sm:$0xff]
      %v340 = vld [vmem:[%s321 + $0xd8] sm:$0xff]
      %v341 = vld [vmem:[%s321 + $0xe0] sm:$0xff]
      %v342 = vld [vmem:[%s321 + $0xf0] sm:$0xff]
      %v343 = vld [vmem:[%s321 + $0xf8] sm:$0xff]
      %v344 = vld [vmem:[%s321 + $0x108] sm:$0xff]
      %v345 = vld [vmem:[%s321 + $0x110] sm:$0xff]
      %v346 = vld [vmem:[%s321 + $0x120] sm:$0xff]
      %v347 = vld [vmem:[%s321 + $0x128] sm:$0xff]
      %v348 = vld [vmem:[%s321 + $0x138] sm:$0xff]
      %v349 = vld [vmem:[%s321 + $0x140] sm:$0xff]
      %v350 = vld [vmem:[%s321 + $0x150] sm:$0xff]
      %v351 = vld [vmem:[%s321 + $0x158] sm:$0xff]
      %v352 = vld [vmem:[%s321 + $0x168] sm:$0xff]
      %v353 = vld [vmem:[%s321 + $0x170] sm:$0xff]
      %v354 = vld [vmem:[%s321 + $0x1] sm:$0xff]
      %v355 = vld [vmem:[%s321 + $0x9] sm:$0xff]
      %v356 = vld [vmem:[%s321 + $0x19] sm:$0xff]
      %v357 = vld [vmem:[%s321 + $0x21] sm:$0xff]
      %v358 = vld [vmem:[%s321 + $0x31] sm:$0xff]
      %v359 = vld [vmem:[%s321 + $0x39] sm:$0xff]
      %v360 = vld [vmem:[%s321 + $0x49] sm:$0xff]
      %v361 = vld [vmem:[%s321 + $0x51] sm:$0xff]
      %v362 = vld [vmem:[%s321 + $0x61] sm:$0xff]
      %v363 = vld [vmem:[%s321 + $0x69] sm:$0xff]
      %v364 = vld [vmem:[%s321 + $0x79] sm:$0xff]
      %v365 = vld [vmem:[%s321 + $0x81] sm:$0xff]
      %v366 = vld [vmem:[%s321 + $0x91] sm:$0xff]
      %v367 = vld [vmem:[%s321 + $0x99] sm:$0xff]
      %v368 = vld [vmem:[%s321 + $0xa9] sm:$0xff]
      %v369 = vld [vmem:[%s321 + $0xb1] sm:$0xff]
      %v370 = vld [vmem:[%s321 + $0xc1] sm:$0xff]
      %v371 = vld [vmem:[%s321 + $0xc9] sm:$0xff]
      %v372 = vld [vmem:[%s321 + $0xd9] sm:$0xff]
      %v373 = vld [vmem:[%s321 + $0xe1] sm:$0xff]
      %v374 = vld [vmem:[%s321 + $0xf1] sm:$0xff]
      %v375 = vld [vmem:[%s321 + $0xf9] sm:$0xff]
      %v376 = vld [vmem:[%s321 + $0x109] sm:$0xff]
      %v377 = vld [vmem:[%s321 + $0x111] sm:$0xff]
      %v378 = vld [vmem:[%s321 + $0x121] sm:$0xff]
      %v379 = vld [vmem:[%s321 + $0x129] sm:$0xff]
      %v380 = vld [vmem:[%s321 + $0x139] sm:$0xff]
      %v381 = vld [vmem:[%s321 + $0x141] sm:$0xff]
      %v382 = vld [vmem:[%s321 + $0x151] sm:$0xff]
      %v383 = vld [vmem:[%s321 + $0x159] sm:$0xff]
      %v384 = vld [vmem:[%s321 + $0x169] sm:$0xff]
      %v385 = vld [vmem:[%s321 + $0x171] sm:$0xff]
      %v386 = vld [vmem:[%s321 + $0x2] sm:$0xff]
      %v387 = vld [vmem:[%s321 + $0xa] sm:$0xff]
      %v388 = vld [vmem:[%s321 + $0x1a] sm:$0xff]
      %v389 = vld [vmem:[%s321 + $0x22] sm:$0xff]
      %v390 = vld [vmem:[%s321 + $0x32] sm:$0xff]
      %v391 = vld [vmem:[%s321 + $0x3a] sm:$0xff]
      %v392 = vld [vmem:[%s321 + $0x4a] sm:$0xff]
      %v393 = vld [vmem:[%s321 + $0x52] sm:$0xff]
      %v394 = vld [vmem:[%s321 + $0x62] sm:$0xff]
      %v395 = vld [vmem:[%s321 + $0x6a] sm:$0xff]
      %v396 = vld [vmem:[%s321 + $0x7a] sm:$0xff]
      %v397 = vld [vmem:[%s321 + $0x82] sm:$0xff]
      %v398 = vld [vmem:[%s321 + $0x92] sm:$0xff]
      %v399 = vld [vmem:[%s321 + $0x9a] sm:$0xff]
      %v400 = vld [vmem:[%s321 + $0xaa] sm:$0xff]
      %v401 = vld [vmem:[%s321 + $0xb2] sm:$0xff]
      %v402 = vld [vmem:[%s321 + $0xc2] sm:$0xff]
      %v403 = vld [vmem:[%s321 + $0xca] sm:$0xff]
      %v404 = vld [vmem:[%s321 + $0xda] sm:$0xff]
      %v405 = vld [vmem:[%s321 + $0xe2] sm:$0xff]
      %v406 = vld [vmem:[%s321 + $0xf2] sm:$0xff]
      %v407 = vld [vmem:[%s321 + $0xfa] sm:$0xff]
      %v408 = vld [vmem:[%s321 + $0x10a] sm:$0xff]
      %v409 = vld [vmem:[%s321 + $0x112] sm:$0xff]
      %v410 = vld [vmem:[%s321 + $0x122] sm:$0xff]
      %v411 = vld [vmem:[%s321 + $0x12a] sm:$0xff]
      %v412 = vld [vmem:[%s321 + $0x13a] sm:$0xff]
      %v413 = vld [vmem:[%s321 + $0x142] sm:$0xff]
      %v414 = vld [vmem:[%s321 + $0x152] sm:$0xff]
      %v415 = vld [vmem:[%s321 + $0x15a] sm:$0xff]
      %v416 = vld [vmem:[%s321 + $0x16a] sm:$0xff]
      %v417 = vld [vmem:[%s321 + $0x172] sm:$0xff]
      %s418 = scalar_lea.vmem %s219, 48
      %v419 = vld [vmem:[%s418] sm:$0xff]
      %v420 = vld [vmem:[%s418 + $0x8] sm:$0xff]
      %v421 = vld [vmem:[%s418 + $0x18] sm:$0xff]
      %v422 = vld [vmem:[%s418 + $0x20] sm:$0xff]
      %v423 = vld [vmem:[%s418 + $0x30] sm:$0xff]
      %v424 = vld [vmem:[%s418 + $0x38] sm:$0xff]
      %v425 = vld [vmem:[%s418 + $0x48] sm:$0xff]
      %v426 = vld [vmem:[%s418 + $0x50] sm:$0xff]
      %v427 = vld [vmem:[%s418 + $0x60] sm:$0xff]
      %v428 = vld [vmem:[%s418 + $0x68] sm:$0xff]
      %v429 = vld [vmem:[%s418 + $0x78] sm:$0xff]
      %v430 = vld [vmem:[%s418 + $0x80] sm:$0xff]
      %v431 = vld [vmem:[%s418 + $0x90] sm:$0xff]
      %v432 = vld [vmem:[%s418 + $0x98] sm:$0xff]
      %v433 = vld [vmem:[%s418 + $0xa8] sm:$0xff]
      %v434 = vld [vmem:[%s418 + $0xb0] sm:$0xff]
      %v435 = vld [vmem:[%s418 + $0xc0] sm:$0xff]
      %v436 = vld [vmem:[%s418 + $0xc8] sm:$0xff]
      %v437 = vld [vmem:[%s418 + $0xd8] sm:$0xff]
      %v438 = vld [vmem:[%s418 + $0xe0] sm:$0xff]
      %v439 = vld [vmem:[%s418 + $0xf0] sm:$0xff]
      %v440 = vld [vmem:[%s418 + $0xf8] sm:$0xff]
      %v441 = vld [vmem:[%s418 + $0x108] sm:$0xff]
      %v442 = vld [vmem:[%s418 + $0x110] sm:$0xff]
      %v443 = vld [vmem:[%s418 + $0x120] sm:$0xff]
      %v444 = vld [vmem:[%s418 + $0x128] sm:$0xff]
      %v445 = vld [vmem:[%s418 + $0x138] sm:$0xff]
      %v446 = vld [vmem:[%s418 + $0x140] sm:$0xff]
      %v447 = vld [vmem:[%s418 + $0x150] sm:$0xff]
      %v448 = vld [vmem:[%s418 + $0x158] sm:$0xff]
      %v449 = vld [vmem:[%s418 + $0x168] sm:$0xff]
      %v450 = vld [vmem:[%s418 + $0x170] sm:$0xff]
      %v451 = vld [vmem:[%s418 + $0x1] sm:$0xff]
      %v452 = vld [vmem:[%s418 + $0x9] sm:$0xff]
      %v453 = vld [vmem:[%s418 + $0x19] sm:$0xff]
      %v454 = vld [vmem:[%s418 + $0x21] sm:$0xff]
      %v455 = vld [vmem:[%s418 + $0x31] sm:$0xff]
      %v456 = vld [vmem:[%s418 + $0x39] sm:$0xff]
      %v457 = vld [vmem:[%s418 + $0x49] sm:$0xff]
      %v458 = vld [vmem:[%s418 + $0x51] sm:$0xff]
      %v459 = vld [vmem:[%s418 + $0x61] sm:$0xff]
      %v460 = vld [vmem:[%s418 + $0x69] sm:$0xff]
      %v461 = vld [vmem:[%s418 + $0x79] sm:$0xff]
      %v462 = vld [vmem:[%s418 + $0x81] sm:$0xff]
      %v463 = vld [vmem:[%s418 + $0x91] sm:$0xff]
      %v464 = vld [vmem:[%s418 + $0x99] sm:$0xff]
      %v465 = vld [vmem:[%s418 + $0xa9] sm:$0xff]
      %v466 = vld [vmem:[%s418 + $0xb1] sm:$0xff]
      %v467 = vld [vmem:[%s418 + $0xc1] sm:$0xff]
      %v468 = vld [vmem:[%s418 + $0xc9] sm:$0xff]
      %v469 = vld [vmem:[%s418 + $0xd9] sm:$0xff]
      %v470 = vld [vmem:[%s418 + $0xe1] sm:$0xff]
      %v471 = vld [vmem:[%s418 + $0xf1] sm:$0xff]
      %v472 = vld [vmem:[%s418 + $0xf9] sm:$0xff]
      %v473 = vld [vmem:[%s418 + $0x109] sm:$0xff]
      %v474 = vld [vmem:[%s418 + $0x111] sm:$0xff]
      %v475 = vld [vmem:[%s418 + $0x121] sm:$0xff]
      %v476 = vld [vmem:[%s418 + $0x129] sm:$0xff]
      %v477 = vld [vmem:[%s418 + $0x139] sm:$0xff]
      %v478 = vld [vmem:[%s418 + $0x141] sm:$0xff]
      %v479 = vld [vmem:[%s418 + $0x151] sm:$0xff]
      %v480 = vld [vmem:[%s418 + $0x159] sm:$0xff]
      %v481 = vld [vmem:[%s418 + $0x169] sm:$0xff]
      %v482 = vld [vmem:[%s418 + $0x171] sm:$0xff]
      %v483 = vld [vmem:[%s418 + $0x2] sm:$0xff]
      %v484 = vld [vmem:[%s418 + $0xa] sm:$0xff]
      %v485 = vld [vmem:[%s418 + $0x1a] sm:$0xff]
      %v486 = vld [vmem:[%s418 + $0x22] sm:$0xff]
      %v487 = vld [vmem:[%s418 + $0x32] sm:$0xff]
      %v488 = vld [vmem:[%s418 + $0x3a] sm:$0xff]
      %v489 = vld [vmem:[%s418 + $0x4a] sm:$0xff]
      %v490 = vld [vmem:[%s418 + $0x52] sm:$0xff]
      %v491 = vld [vmem:[%s418 + $0x62] sm:$0xff]
      %v492 = vld [vmem:[%s418 + $0x6a] sm:$0xff]
      %v493 = vld [vmem:[%s418 + $0x7a] sm:$0xff]
      %v494 = vld [vmem:[%s418 + $0x82] sm:$0xff]
      %v495 = vld [vmem:[%s418 + $0x92] sm:$0xff]
      %v496 = vld [vmem:[%s418 + $0x9a] sm:$0xff]
      %v497 = vld [vmem:[%s418 + $0xaa] sm:$0xff]
      %v498 = vld [vmem:[%s418 + $0xb2] sm:$0xff]
      %v499 = vld [vmem:[%s418 + $0xc2] sm:$0xff]
      %v500 = vld [vmem:[%s418 + $0xca] sm:$0xff]
      %v501 = vld [vmem:[%s418 + $0xda] sm:$0xff]
      %v502 = vld [vmem:[%s418 + $0xe2] sm:$0xff]
      %v503 = vld [vmem:[%s418 + $0xf2] sm:$0xff]
      %v504 = vld [vmem:[%s418 + $0xfa] sm:$0xff]
      %v505 = vld [vmem:[%s418 + $0x10a] sm:$0xff]
      %v506 = vld [vmem:[%s418 + $0x112] sm:$0xff]
      %v507 = vld [vmem:[%s418 + $0x122] sm:$0xff]
      %v508 = vld [vmem:[%s418 + $0x12a] sm:$0xff]
      %v509 = vld [vmem:[%s418 + $0x13a] sm:$0xff]
      %v510 = vld [vmem:[%s418 + $0x142] sm:$0xff]
      %v511 = vld [vmem:[%s418 + $0x152] sm:$0xff]
      %v512 = vld [vmem:[%s418 + $0x15a] sm:$0xff]
      %v513 = vld [vmem:[%s418 + $0x16a] sm:$0xff]
      %v514 = vld [vmem:[%s418 + $0x172] sm:$0xff]
      %547 = vrot.lane.b32.xlu0 %v257, 4
      %v548 = vpop.permute.xlu0 %547
      %549 = vrot.lane.b32.xlu0 %v258, 4
      %v550 = vpop.permute.xlu0 %549
      %551 = vrot.lane.b32.xlu0 %v259, 4
      %v552 = vpop.permute.xlu0 %551
      %553 = vrot.lane.b32.xlu0 %v260, 4
      %v554 = vpop.permute.xlu0 %553
      %555 = vrot.lane.b32.xlu0 %v261, 4
      %v556 = vpop.permute.xlu0 %555
      %557 = vrot.lane.b32.xlu0 %v262, 4
      %v558 = vpop.permute.xlu0 %557
      %559 = vrot.lane.b32.xlu0 %v263, 4
      %v560 = vpop.permute.xlu0 %559
      %561 = vrot.lane.b32.xlu0 %v264, 4
      %v562 = vpop.permute.xlu0 %561
      %563 = vrot.lane.b32.xlu0 %v265, 4
      %v564 = vpop.permute.xlu0 %563
      %565 = vrot.lane.b32.xlu0 %v266, 4
      %v566 = vpop.permute.xlu0 %565
      %567 = vrot.lane.b32.xlu0 %v267, 4
      %v568 = vpop.permute.xlu0 %567
      %569 = vrot.lane.b32.xlu0 %v268, 4
      %v570 = vpop.permute.xlu0 %569
      %571 = vrot.lane.b32.xlu0 %v269, 4
      %v572 = vpop.permute.xlu0 %571
      %573 = vrot.lane.b32.xlu0 %v270, 4
      %v574 = vpop.permute.xlu0 %573
      %575 = vrot.lane.b32.xlu0 %v271, 4
      %v576 = vpop.permute.xlu0 %575
      %577 = vrot.lane.b32.xlu0 %v272, 4
      %v578 = vpop.permute.xlu0 %577
      %579 = vrot.lane.b32.xlu0 %v273, 4
      %v580 = vpop.permute.xlu0 %579
      %581 = vrot.lane.b32.xlu0 %v274, 4
      %v582 = vpop.permute.xlu0 %581
      %583 = vrot.lane.b32.xlu0 %v275, 4
      %v584 = vpop.permute.xlu0 %583
      %585 = vrot.lane.b32.xlu0 %v276, 4
      %v586 = vpop.permute.xlu0 %585
      %587 = vrot.lane.b32.xlu0 %v277, 4
      %v588 = vpop.permute.xlu0 %587
      %589 = vrot.lane.b32.xlu0 %v278, 4
      %v590 = vpop.permute.xlu0 %589
      %591 = vrot.lane.b32.xlu0 %v279, 4
      %v592 = vpop.permute.xlu0 %591
      %593 = vrot.lane.b32.xlu0 %v280, 4
      %v594 = vpop.permute.xlu0 %593
      %595 = vrot.lane.b32.xlu0 %v281, 4
      %v596 = vpop.permute.xlu0 %595
      %597 = vrot.lane.b32.xlu0 %v282, 4
      %v598 = vpop.permute.xlu0 %597
      %599 = vrot.lane.b32.xlu0 %v283, 4
      %v600 = vpop.permute.xlu0 %599
      %601 = vrot.lane.b32.xlu0 %v284, 4
      %v602 = vpop.permute.xlu0 %601
      %603 = vrot.lane.b32.xlu0 %v285, 4
      %v604 = vpop.permute.xlu0 %603
      %605 = vrot.lane.b32.xlu0 %v286, 4
      %v606 = vpop.permute.xlu0 %605
      %607 = vrot.lane.b32.xlu0 %v287, 4
      %v608 = vpop.permute.xlu0 %607
      %609 = vrot.lane.b32.xlu0 %v288, 4
      %v610 = vpop.permute.xlu0 %609
      %675 = vrot.lane.b32.xlu0 %v289, 8
      %v676 = vpop.permute.xlu0 %675
      %677 = vrot.lane.b32.xlu0 %v290, 8
      %v678 = vpop.permute.xlu0 %677
      %679 = vrot.lane.b32.xlu0 %v291, 8
      %v680 = vpop.permute.xlu0 %679
      %681 = vrot.lane.b32.xlu0 %v292, 8
      %v682 = vpop.permute.xlu0 %681
      %683 = vrot.lane.b32.xlu0 %v293, 8
      %v684 = vpop.permute.xlu0 %683
      %685 = vrot.lane.b32.xlu0 %v294, 8
      %v686 = vpop.permute.xlu0 %685
      %687 = vrot.lane.b32.xlu0 %v295, 8
      %v688 = vpop.permute.xlu0 %687
      %689 = vrot.lane.b32.xlu0 %v296, 8
      %v690 = vpop.permute.xlu0 %689
      %691 = vrot.lane.b32.xlu0 %v297, 8
      %v692 = vpop.permute.xlu0 %691
      %693 = vrot.lane.b32.xlu0 %v298, 8
      %v694 = vpop.permute.xlu0 %693
      %695 = vrot.lane.b32.xlu0 %v299, 8
      %v696 = vpop.permute.xlu0 %695
      %697 = vrot.lane.b32.xlu0 %v300, 8
      %v698 = vpop.permute.xlu0 %697
      %699 = vrot.lane.b32.xlu0 %v301, 8
      %v700 = vpop.permute.xlu0 %699
      %701 = vrot.lane.b32.xlu0 %v302, 8
      %v702 = vpop.permute.xlu0 %701
      %703 = vrot.lane.b32.xlu0 %v303, 8
      %v704 = vpop.permute.xlu0 %703
      %705 = vrot.lane.b32.xlu0 %v304, 8
      %v706 = vpop.permute.xlu0 %705
      %707 = vrot.lane.b32.xlu0 %v305, 8
      %v708 = vpop.permute.xlu0 %707
      %709 = vrot.lane.b32.xlu0 %v306, 8
      %v710 = vpop.permute.xlu0 %709
      %711 = vrot.lane.b32.xlu0 %v307, 8
      %v712 = vpop.permute.xlu0 %711
      %713 = vrot.lane.b32.xlu0 %v308, 8
      %v714 = vpop.permute.xlu0 %713
      %715 = vrot.lane.b32.xlu0 %v309, 8
      %v716 = vpop.permute.xlu0 %715
      %717 = vrot.lane.b32.xlu0 %v310, 8
      %v718 = vpop.permute.xlu0 %717
      %719 = vrot.lane.b32.xlu0 %v311, 8
      %v720 = vpop.permute.xlu0 %719
      %721 = vrot.lane.b32.xlu0 %v312, 8
      %v722 = vpop.permute.xlu0 %721
      %723 = vrot.lane.b32.xlu0 %v313, 8
      %v724 = vpop.permute.xlu0 %723
      %725 = vrot.lane.b32.xlu0 %v314, 8
      %v726 = vpop.permute.xlu0 %725
      %727 = vrot.lane.b32.xlu0 %v315, 8
      %v728 = vpop.permute.xlu0 %727
      %729 = vrot.lane.b32.xlu0 %v316, 8
      %v730 = vpop.permute.xlu0 %729
      %731 = vrot.lane.b32.xlu0 %v317, 8
      %v732 = vpop.permute.xlu0 %731
      %733 = vrot.lane.b32.xlu0 %v318, 8
      %v734 = vpop.permute.xlu0 %733
      %735 = vrot.lane.b32.xlu0 %v319, 8
      %v736 = vpop.permute.xlu0 %735
      %737 = vrot.lane.b32.xlu0 %v320, 8
      %v738 = vpop.permute.xlu0 %737
      %803 = vrot.lane.b32.xlu0 %v322, 12
      %v804 = vpop.permute.xlu0 %803
      %805 = vrot.lane.b32.xlu0 %v323, 12
      %v806 = vpop.permute.xlu0 %805
      %807 = vrot.lane.b32.xlu0 %v324, 12
      %v808 = vpop.permute.xlu0 %807
      %809 = vrot.lane.b32.xlu0 %v325, 12
      %v810 = vpop.permute.xlu0 %809
      %811 = vrot.lane.b32.xlu0 %v326, 12
      %v812 = vpop.permute.xlu0 %811
      %813 = vrot.lane.b32.xlu0 %v327, 12
      %v814 = vpop.permute.xlu0 %813
      %815 = vrot.lane.b32.xlu0 %v328, 12
      %v816 = vpop.permute.xlu0 %815
      %817 = vrot.lane.b32.xlu0 %v329, 12
      %v818 = vpop.permute.xlu0 %817
      %819 = vrot.lane.b32.xlu0 %v330, 12
      %v820 = vpop.permute.xlu0 %819
      %821 = vrot.lane.b32.xlu0 %v331, 12
      %v822 = vpop.permute.xlu0 %821
      %823 = vrot.lane.b32.xlu0 %v332, 12
      %v824 = vpop.permute.xlu0 %823
      %825 = vrot.lane.b32.xlu0 %v333, 12
      %v826 = vpop.permute.xlu0 %825
      %827 = vrot.lane.b32.xlu0 %v334, 12
      %v828 = vpop.permute.xlu0 %827
      %829 = vrot.lane.b32.xlu0 %v335, 12
      %v830 = vpop.permute.xlu0 %829
      %831 = vrot.lane.b32.xlu0 %v336, 12
      %v832 = vpop.permute.xlu0 %831
      %833 = vrot.lane.b32.xlu0 %v337, 12
      %v834 = vpop.permute.xlu0 %833
      %835 = vrot.lane.b32.xlu0 %v338, 12
      %v836 = vpop.permute.xlu0 %835
      %837 = vrot.lane.b32.xlu0 %v339, 12
      %v838 = vpop.permute.xlu0 %837
      %839 = vrot.lane.b32.xlu0 %v340, 12
      %v840 = vpop.permute.xlu0 %839
      %841 = vrot.lane.b32.xlu0 %v341, 12
      %v842 = vpop.permute.xlu0 %841
      %843 = vrot.lane.b32.xlu0 %v342, 12
      %v844 = vpop.permute.xlu0 %843
      %845 = vrot.lane.b32.xlu0 %v343, 12
      %v846 = vpop.permute.xlu0 %845
      %847 = vrot.lane.b32.xlu0 %v344, 12
      %v848 = vpop.permute.xlu0 %847
      %849 = vrot.lane.b32.xlu0 %v345, 12
      %v850 = vpop.permute.xlu0 %849
      %851 = vrot.lane.b32.xlu0 %v346, 12
      %v852 = vpop.permute.xlu0 %851
      %853 = vrot.lane.b32.xlu0 %v347, 12
      %v854 = vpop.permute.xlu0 %853
      %855 = vrot.lane.b32.xlu0 %v348, 12
      %v856 = vpop.permute.xlu0 %855
      %857 = vrot.lane.b32.xlu0 %v349, 12
      %v858 = vpop.permute.xlu0 %857
      %859 = vrot.lane.b32.xlu0 %v350, 12
      %v860 = vpop.permute.xlu0 %859
      %861 = vrot.lane.b32.xlu0 %v351, 12
      %v862 = vpop.permute.xlu0 %861
      %863 = vrot.lane.b32.xlu0 %v352, 12
      %v864 = vpop.permute.xlu0 %863
      %865 = vrot.lane.b32.xlu0 %v353, 12
      %v866 = vpop.permute.xlu0 %865
      %931 = vrot.lane.b32.xlu0 %v354, 16
      %v932 = vpop.permute.xlu0 %931
      %933 = vrot.lane.b32.xlu0 %v355, 16
      %v934 = vpop.permute.xlu0 %933
      %935 = vrot.lane.b32.xlu0 %v356, 16
      %v936 = vpop.permute.xlu0 %935
      %937 = vrot.lane.b32.xlu0 %v357, 16
      %v938 = vpop.permute.xlu0 %937
      %939 = vrot.lane.b32.xlu0 %v358, 16
      %v940 = vpop.permute.xlu0 %939
      %941 = vrot.lane.b32.xlu0 %v359, 16
      %v942 = vpop.permute.xlu0 %941
      %943 = vrot.lane.b32.xlu0 %v360, 16
      %v944 = vpop.permute.xlu0 %943
      %945 = vrot.lane.b32.xlu0 %v361, 16
      %v946 = vpop.permute.xlu0 %945
      %947 = vrot.lane.b32.xlu0 %v362, 16
      %v948 = vpop.permute.xlu0 %947
      %949 = vrot.lane.b32.xlu0 %v363, 16
      %v950 = vpop.permute.xlu0 %949
      %951 = vrot.lane.b32.xlu0 %v364, 16
      %v952 = vpop.permute.xlu0 %951
      %953 = vrot.lane.b32.xlu0 %v365, 16
      %v954 = vpop.permute.xlu0 %953
      %955 = vrot.lane.b32.xlu0 %v366, 16
      %v956 = vpop.permute.xlu0 %955
      %957 = vrot.lane.b32.xlu0 %v367, 16
      %v958 = vpop.permute.xlu0 %957
      %959 = vrot.lane.b32.xlu0 %v368, 16
      %v960 = vpop.permute.xlu0 %959
      %961 = vrot.lane.b32.xlu0 %v369, 16
      %v962 = vpop.permute.xlu0 %961
      %963 = vrot.lane.b32.xlu0 %v370, 16
      %v964 = vpop.permute.xlu0 %963
      %965 = vrot.lane.b32.xlu0 %v371, 16
      %v966 = vpop.permute.xlu0 %965
      %967 = vrot.lane.b32.xlu0 %v372, 16
      %v968 = vpop.permute.xlu0 %967
      %969 = vrot.lane.b32.xlu0 %v373, 16
      %v970 = vpop.permute.xlu0 %969
      %971 = vrot.lane.b32.xlu0 %v374, 16
      %v972 = vpop.permute.xlu0 %971
      %973 = vrot.lane.b32.xlu0 %v375, 16
      %v974 = vpop.permute.xlu0 %973
      %975 = vrot.lane.b32.xlu0 %v376, 16
      %v976 = vpop.permute.xlu0 %975
      %977 = vrot.lane.b32.xlu0 %v377, 16
      %v978 = vpop.permute.xlu0 %977
      %979 = vrot.lane.b32.xlu0 %v378, 16
      %v980 = vpop.permute.xlu0 %979
      %981 = vrot.lane.b32.xlu0 %v379, 16
      %v982 = vpop.permute.xlu0 %981
      %983 = vrot.lane.b32.xlu0 %v380, 16
      %v984 = vpop.permute.xlu0 %983
      %985 = vrot.lane.b32.xlu0 %v381, 16
      %v986 = vpop.permute.xlu0 %985
      %987 = vrot.lane.b32.xlu0 %v382, 16
      %v988 = vpop.permute.xlu0 %987
      %989 = vrot.lane.b32.xlu0 %v383, 16
      %v990 = vpop.permute.xlu0 %989
      %991 = vrot.lane.b32.xlu0 %v384, 16
      %v992 = vpop.permute.xlu0 %991
      %993 = vrot.lane.b32.xlu0 %v385, 16
      %v994 = vpop.permute.xlu0 %993
      %1059 = vrot.lane.b32.xlu0 %v386, 20
      %v1060 = vpop.permute.xlu0 %1059
      %1061 = vrot.lane.b32.xlu0 %v387, 20
      %v1062 = vpop.permute.xlu0 %1061
      %1063 = vrot.lane.b32.xlu0 %v388, 20
      %v1064 = vpop.permute.xlu0 %1063
      %1065 = vrot.lane.b32.xlu0 %v389, 20
      %v1066 = vpop.permute.xlu0 %1065
      %1067 = vrot.lane.b32.xlu0 %v390, 20
      %v1068 = vpop.permute.xlu0 %1067
      %1069 = vrot.lane.b32.xlu0 %v391, 20
      %v1070 = vpop.permute.xlu0 %1069
      %1071 = vrot.lane.b32.xlu0 %v392, 20
      %v1072 = vpop.permute.xlu0 %1071
      %1073 = vrot.lane.b32.xlu0 %v393, 20
      %v1074 = vpop.permute.xlu0 %1073
      %1075 = vrot.lane.b32.xlu0 %v394, 20
      %v1076 = vpop.permute.xlu0 %1075
      %1077 = vrot.lane.b32.xlu0 %v395, 20
      %v1078 = vpop.permute.xlu0 %1077
      %1079 = vrot.lane.b32.xlu0 %v396, 20
      %v1080 = vpop.permute.xlu0 %1079
      %1081 = vrot.lane.b32.xlu0 %v397, 20
      %v1082 = vpop.permute.xlu0 %1081
      %1083 = vrot.lane.b32.xlu0 %v398, 20
      %v1084 = vpop.permute.xlu0 %1083
      %1085 = vrot.lane.b32.xlu0 %v399, 20
      %v1086 = vpop.permute.xlu0 %1085
      %1087 = vrot.lane.b32.xlu0 %v400, 20
      %v1088 = vpop.permute.xlu0 %1087
      %1089 = vrot.lane.b32.xlu0 %v401, 20
      %v1090 = vpop.permute.xlu0 %1089
      %1091 = vrot.lane.b32.xlu0 %v402, 20
      %v1092 = vpop.permute.xlu0 %1091
      %1093 = vrot.lane.b32.xlu0 %v403, 20
      %v1094 = vpop.permute.xlu0 %1093
      %1095 = vrot.lane.b32.xlu0 %v404, 20
      %v1096 = vpop.permute.xlu0 %1095
      %1097 = vrot.lane.b32.xlu0 %v405, 20
      %v1098 = vpop.permute.xlu0 %1097
      %1099 = vrot.lane.b32.xlu0 %v406, 20
      %v1100 = vpop.permute.xlu0 %1099
      %1101 = vrot.lane.b32.xlu0 %v407, 20
      %v1102 = vpop.permute.xlu0 %1101
      %1103 = vrot.lane.b32.xlu0 %v408, 20
      %v1104 = vpop.permute.xlu0 %1103
      %1105 = vrot.lane.b32.xlu0 %v409, 20
      %v1106 = vpop.permute.xlu0 %1105
      %1107 = vrot.lane.b32.xlu0 %v410, 20
      %v1108 = vpop.permute.xlu0 %1107
      %1109 = vrot.lane.b32.xlu0 %v411, 20
      %v1110 = vpop.permute.xlu0 %1109
      %1111 = vrot.lane.b32.xlu0 %v412, 20
      %v1112 = vpop.permute.xlu0 %1111
      %1113 = vrot.lane.b32.xlu0 %v413, 20
      %v1114 = vpop.permute.xlu0 %1113
      %1115 = vrot.lane.b32.xlu0 %v414, 20
      %v1116 = vpop.permute.xlu0 %1115
      %1117 = vrot.lane.b32.xlu0 %v415, 20
      %v1118 = vpop.permute.xlu0 %1117
      %1119 = vrot.lane.b32.xlu0 %v416, 20
      %v1120 = vpop.permute.xlu0 %1119
      %1121 = vrot.lane.b32.xlu0 %v417, 20
      %v1122 = vpop.permute.xlu0 %1121
      %1187 = vrot.lane.b32.xlu0 %v419, 24
      %v1188 = vpop.permute.xlu0 %1187
      %1189 = vrot.lane.b32.xlu0 %v420, 24
      %v1190 = vpop.permute.xlu0 %1189
      %1191 = vrot.lane.b32.xlu0 %v421, 24
      %v1192 = vpop.permute.xlu0 %1191
      %1193 = vrot.lane.b32.xlu0 %v422, 24
      %v1194 = vpop.permute.xlu0 %1193
      %1195 = vrot.lane.b32.xlu0 %v423, 24
      %v1196 = vpop.permute.xlu0 %1195
      %1197 = vrot.lane.b32.xlu0 %v424, 24
      %v1198 = vpop.permute.xlu0 %1197
      %1199 = vrot.lane.b32.xlu0 %v425, 24
      %v1200 = vpop.permute.xlu0 %1199
      %1201 = vrot.lane.b32.xlu0 %v426, 24
      %v1202 = vpop.permute.xlu0 %1201
      %1203 = vrot.lane.b32.xlu0 %v427, 24
      %v1204 = vpop.permute.xlu0 %1203
      %1205 = vrot.lane.b32.xlu0 %v428, 24
      %v1206 = vpop.permute.xlu0 %1205
      %1207 = vrot.lane.b32.xlu0 %v429, 24
      %v1208 = vpop.permute.xlu0 %1207
      %1209 = vrot.lane.b32.xlu0 %v430, 24
      %v1210 = vpop.permute.xlu0 %1209
      %1211 = vrot.lane.b32.xlu0 %v431, 24
      %v1212 = vpop.permute.xlu0 %1211
      %1213 = vrot.lane.b32.xlu0 %v432, 24
      %v1214 = vpop.permute.xlu0 %1213
      %1215 = vrot.lane.b32.xlu0 %v433, 24
      %v1216 = vpop.permute.xlu0 %1215
      %1217 = vrot.lane.b32.xlu0 %v434, 24
      %v1218 = vpop.permute.xlu0 %1217
      %1219 = vrot.lane.b32.xlu0 %v435, 24
      %v1220 = vpop.permute.xlu0 %1219
      %1221 = vrot.lane.b32.xlu0 %v436, 24
      %v1222 = vpop.permute.xlu0 %1221
      %1223 = vrot.lane.b32.xlu0 %v437, 24
      %v1224 = vpop.permute.xlu0 %1223
      %1225 = vrot.lane.b32.xlu0 %v438, 24
      %v1226 = vpop.permute.xlu0 %1225
      %1227 = vrot.lane.b32.xlu0 %v439, 24
      %v1228 = vpop.permute.xlu0 %1227
      %1229 = vrot.lane.b32.xlu0 %v440, 24
      %v1230 = vpop.permute.xlu0 %1229
      %1231 = vrot.lane.b32.xlu0 %v441, 24
      %v1232 = vpop.permute.xlu0 %1231
      %1233 = vrot.lane.b32.xlu0 %v442, 24
      %v1234 = vpop.permute.xlu0 %1233
      %1235 = vrot.lane.b32.xlu0 %v443, 24
      %v1236 = vpop.permute.xlu0 %1235
      %1237 = vrot.lane.b32.xlu0 %v444, 24
      %v1238 = vpop.permute.xlu0 %1237
      %1239 = vrot.lane.b32.xlu0 %v445, 24
      %v1240 = vpop.permute.xlu0 %1239
      %1241 = vrot.lane.b32.xlu0 %v446, 24
      %v1242 = vpop.permute.xlu0 %1241
      %1243 = vrot.lane.b32.xlu0 %v447, 24
      %v1244 = vpop.permute.xlu0 %1243
      %1245 = vrot.lane.b32.xlu0 %v448, 24
      %v1246 = vpop.permute.xlu0 %1245
      %1247 = vrot.lane.b32.xlu0 %v449, 24
      %v1248 = vpop.permute.xlu0 %1247
      %1249 = vrot.lane.b32.xlu0 %v450, 24
      %v1250 = vpop.permute.xlu0 %1249
      %1315 = vrot.lane.b32.xlu0 %v451, 28
      %v1316 = vpop.permute.xlu0 %1315
      %1317 = vrot.lane.b32.xlu0 %v452, 28
      %v1318 = vpop.permute.xlu0 %1317
      %1319 = vrot.lane.b32.xlu0 %v453, 28
      %v1320 = vpop.permute.xlu0 %1319
      %1321 = vrot.lane.b32.xlu0 %v454, 28
      %v1322 = vpop.permute.xlu0 %1321
      %1323 = vrot.lane.b32.xlu0 %v455, 28
      %v1324 = vpop.permute.xlu0 %1323
      %1325 = vrot.lane.b32.xlu0 %v456, 28
      %v1326 = vpop.permute.xlu0 %1325
      %1327 = vrot.lane.b32.xlu0 %v457, 28
      %v1328 = vpop.permute.xlu0 %1327
      %1329 = vrot.lane.b32.xlu0 %v458, 28
      %v1330 = vpop.permute.xlu0 %1329
      %1331 = vrot.lane.b32.xlu0 %v459, 28
      %v1332 = vpop.permute.xlu0 %1331
      %1333 = vrot.lane.b32.xlu0 %v460, 28
      %v1334 = vpop.permute.xlu0 %1333
      %1335 = vrot.lane.b32.xlu0 %v461, 28
      %v1336 = vpop.permute.xlu0 %1335
      %1337 = vrot.lane.b32.xlu0 %v462, 28
      %v1338 = vpop.permute.xlu0 %1337
      %1339 = vrot.lane.b32.xlu0 %v463, 28
      %v1340 = vpop.permute.xlu0 %1339
      %1341 = vrot.lane.b32.xlu0 %v464, 28
      %v1342 = vpop.permute.xlu0 %1341
      %1343 = vrot.lane.b32.xlu0 %v465, 28
      %v1344 = vpop.permute.xlu0 %1343
      %1345 = vrot.lane.b32.xlu0 %v466, 28
      %v1346 = vpop.permute.xlu0 %1345
      %1347 = vrot.lane.b32.xlu0 %v467, 28
      %v1348 = vpop.permute.xlu0 %1347
      %1349 = vrot.lane.b32.xlu0 %v468, 28
      %v1350 = vpop.permute.xlu0 %1349
      %1351 = vrot.lane.b32.xlu0 %v469, 28
      %v1352 = vpop.permute.xlu0 %1351
      %1353 = vrot.lane.b32.xlu0 %v470, 28
      %v1354 = vpop.permute.xlu0 %1353
      %1355 = vrot.lane.b32.xlu0 %v471, 28
      %v1356 = vpop.permute.xlu0 %1355
      %1357 = vrot.lane.b32.xlu0 %v472, 28
      %v1358 = vpop.permute.xlu0 %1357
      %1359 = vrot.lane.b32.xlu0 %v473, 28
      %v1360 = vpop.permute.xlu0 %1359
      %1361 = vrot.lane.b32.xlu0 %v474, 28
      %v1362 = vpop.permute.xlu0 %1361
      %1363 = vrot.lane.b32.xlu0 %v475, 28
      %v1364 = vpop.permute.xlu0 %1363
      %1365 = vrot.lane.b32.xlu0 %v476, 28
      %v1366 = vpop.permute.xlu0 %1365
      %1367 = vrot.lane.b32.xlu0 %v477, 28
      %v1368 = vpop.permute.xlu0 %1367
      %1369 = vrot.lane.b32.xlu0 %v478, 28
      %v1370 = vpop.permute.xlu0 %1369
      %1371 = vrot.lane.b32.xlu0 %v479, 28
      %v1372 = vpop.permute.xlu0 %1371
      %1373 = vrot.lane.b32.xlu0 %v480, 28
      %v1374 = vpop.permute.xlu0 %1373
      %1375 = vrot.lane.b32.xlu0 %v481, 28
      %v1376 = vpop.permute.xlu0 %1375
      %1377 = vrot.lane.b32.xlu0 %v482, 28
      %v1378 = vpop.permute.xlu0 %1377
      %1443 = vrot.lane.b32.xlu0 %v483, 32
      %v1444 = vpop.permute.xlu0 %1443
      %1445 = vrot.lane.b32.xlu0 %v484, 32
      %v1446 = vpop.permute.xlu0 %1445
      %1447 = vrot.lane.b32.xlu0 %v485, 32
      %v1448 = vpop.permute.xlu0 %1447
      %1449 = vrot.lane.b32.xlu0 %v486, 32
      %v1450 = vpop.permute.xlu0 %1449
      %1451 = vrot.lane.b32.xlu0 %v487, 32
      %v1452 = vpop.permute.xlu0 %1451
      %1453 = vrot.lane.b32.xlu0 %v488, 32
      %v1454 = vpop.permute.xlu0 %1453
      %1455 = vrot.lane.b32.xlu0 %v489, 32
      %v1456 = vpop.permute.xlu0 %1455
      %1457 = vrot.lane.b32.xlu0 %v490, 32
      %v1458 = vpop.permute.xlu0 %1457
      %1459 = vrot.lane.b32.xlu0 %v491, 32
      %v1460 = vpop.permute.xlu0 %1459
      %1461 = vrot.lane.b32.xlu0 %v492, 32
      %v1462 = vpop.permute.xlu0 %1461
      %1463 = vrot.lane.b32.xlu0 %v493, 32
      %v1464 = vpop.permute.xlu0 %1463
      %1465 = vrot.lane.b32.xlu0 %v494, 32
      %v1466 = vpop.permute.xlu0 %1465
      %1467 = vrot.lane.b32.xlu0 %v495, 32
      %v1468 = vpop.permute.xlu0 %1467
      %1469 = vrot.lane.b32.xlu0 %v496, 32
      %v1470 = vpop.permute.xlu0 %1469
      %1471 = vrot.lane.b32.xlu0 %v497, 32
      %v1472 = vpop.permute.xlu0 %1471
      %1473 = vrot.lane.b32.xlu0 %v498, 32
      %v1474 = vpop.permute.xlu0 %1473
      %1475 = vrot.lane.b32.xlu0 %v499, 32
      %v1476 = vpop.permute.xlu0 %1475
      %1477 = vrot.lane.b32.xlu0 %v500, 32
      %v1478 = vpop.permute.xlu0 %1477
      %1479 = vrot.lane.b32.xlu0 %v501, 32
      %v1480 = vpop.permute.xlu0 %1479
      %1481 = vrot.lane.b32.xlu0 %v502, 32
      %v1482 = vpop.permute.xlu0 %1481
      %1483 = vrot.lane.b32.xlu0 %v503, 32
      %v1484 = vpop.permute.xlu0 %1483
      %1485 = vrot.lane.b32.xlu0 %v504, 32
      %v1486 = vpop.permute.xlu0 %1485
      %1487 = vrot.lane.b32.xlu0 %v505, 32
      %v1488 = vpop.permute.xlu0 %1487
      %1489 = vrot.lane.b32.xlu0 %v506, 32
      %v1490 = vpop.permute.xlu0 %1489
      %1491 = vrot.lane.b32.xlu0 %v507, 32
      %v1492 = vpop.permute.xlu0 %1491
      %1493 = vrot.lane.b32.xlu0 %v508, 32
      %v1494 = vpop.permute.xlu0 %1493
      %1495 = vrot.lane.b32.xlu0 %v509, 32
      %v1496 = vpop.permute.xlu0 %1495
      %1497 = vrot.lane.b32.xlu0 %v510, 32
      %v1498 = vpop.permute.xlu0 %1497
      %1499 = vrot.lane.b32.xlu0 %v511, 32
      %v1500 = vpop.permute.xlu0 %1499
      %1501 = vrot.lane.b32.xlu0 %v512, 32
      %v1502 = vpop.permute.xlu0 %1501
      %1503 = vrot.lane.b32.xlu0 %v513, 32
      %v1504 = vpop.permute.xlu0 %1503
      %1505 = vrot.lane.b32.xlu0 %v514, 32
      %v1506 = vpop.permute.xlu0 %1505
      %vm1539 = vcmask 31744
      %v1540 = vsel %vm1539, %v225, %v548
      %v1541 = vsel %vm1539, %v226, %v550
      %v1542 = vsel %vm1539, %v227, %v552
      %v1543 = vsel %vm1539, %v228, %v554
      %v1544 = vsel %vm1539, %v229, %v556
      %v1545 = vsel %vm1539, %v230, %v558
      %v1546 = vsel %vm1539, %v231, %v560
      %v1547 = vsel %vm1539, %v232, %v562
      %v1548 = vsel %vm1539, %v233, %v564
      %v1549 = vsel %vm1539, %v234, %v566
      %v1550 = vsel %vm1539, %v235, %v568
      %v1551 = vsel %vm1539, %v236, %v570
      %v1552 = vsel %vm1539, %v237, %v572
      %v1553 = vsel %vm1539, %v238, %v574
      %v1554 = vsel %vm1539, %v239, %v576
      %v1555 = vsel %vm1539, %v240, %v578
      %v1556 = vsel %vm1539, %v241, %v580
      %v1557 = vsel %vm1539, %v242, %v582
      %v1558 = vsel %vm1539, %v243, %v584
      %v1559 = vsel %vm1539, %v244, %v586
      %v1560 = vsel %vm1539, %v245, %v588
      %v1561 = vsel %vm1539, %v246, %v590
      %v1562 = vsel %vm1539, %v247, %v592
      %v1563 = vsel %vm1539, %v248, %v594
      %v1564 = vsel %vm1539, %v249, %v596
      %v1565 = vsel %vm1539, %v250, %v598
      %v1566 = vsel %vm1539, %v251, %v600
      %v1567 = vsel %vm1539, %v252, %v602
      %v1568 = vsel %vm1539, %v253, %v604
      %v1569 = vsel %vm1539, %v254, %v606
      %v1570 = vsel %vm1539, %v255, %v608
      %v1571 = vsel %vm1539, %v256, %v610
      %vm1572 = vcmask 64512
      %v1573 = vsel %vm1572, %v1540, %v676
      %v1574 = vsel %vm1572, %v1541, %v678
      %v1575 = vsel %vm1572, %v1542, %v680
      %v1576 = vsel %vm1572, %v1543, %v682
      %v1577 = vsel %vm1572, %v1544, %v684
      %v1578 = vsel %vm1572, %v1545, %v686
      %v1579 = vsel %vm1572, %v1546, %v688
      %v1580 = vsel %vm1572, %v1547, %v690
      %v1581 = vsel %vm1572, %v1548, %v692
      %v1582 = vsel %vm1572, %v1549, %v694
      %v1583 = vsel %vm1572, %v1550, %v696
      %v1584 = vsel %vm1572, %v1551, %v698
      %v1585 = vsel %vm1572, %v1552, %v700
      %v1586 = vsel %vm1572, %v1553, %v702
      %v1587 = vsel %vm1572, %v1554, %v704
      %v1588 = vsel %vm1572, %v1555, %v706
      %v1589 = vsel %vm1572, %v1556, %v708
      %v1590 = vsel %vm1572, %v1557, %v710
      %v1591 = vsel %vm1572, %v1558, %v712
      %v1592 = vsel %vm1572, %v1559, %v714
      %v1593 = vsel %vm1572, %v1560, %v716
      %v1594 = vsel %vm1572, %v1561, %v718
      %v1595 = vsel %vm1572, %v1562, %v720
      %v1596 = vsel %vm1572, %v1563, %v722
      %v1597 = vsel %vm1572, %v1564, %v724
      %v1598 = vsel %vm1572, %v1565, %v726
      %v1599 = vsel %vm1572, %v1566, %v728
      %v1600 = vsel %vm1572, %v1567, %v730
      %v1601 = vsel %vm1572, %v1568, %v732
      %v1602 = vsel %vm1572, %v1569, %v734
      %v1603 = vsel %vm1572, %v1570, %v736
      %v1604 = vsel %vm1572, %v1571, %v738
      %vm1605 = vcmask 97280
      %v1606 = vsel %vm1605, %v1573, %v804
      %v1607 = vsel %vm1605, %v1574, %v806
      %v1608 = vsel %vm1605, %v1575, %v808
      %v1609 = vsel %vm1605, %v1576, %v810
      %v1610 = vsel %vm1605, %v1577, %v812
      %v1611 = vsel %vm1605, %v1578, %v814
      %v1612 = vsel %vm1605, %v1579, %v816
      %v1613 = vsel %vm1605, %v1580, %v818
      %v1614 = vsel %vm1605, %v1581, %v820
      %v1615 = vsel %vm1605, %v1582, %v822
      %v1616 = vsel %vm1605, %v1583, %v824
      %v1617 = vsel %vm1605, %v1584, %v826
      %v1618 = vsel %vm1605, %v1585, %v828
      %v1619 = vsel %vm1605, %v1586, %v830
      %v1620 = vsel %vm1605, %v1587, %v832
      %v1621 = vsel %vm1605, %v1588, %v834
      %v1622 = vsel %vm1605, %v1589, %v836
      %v1623 = vsel %vm1605, %v1590, %v838
      %v1624 = vsel %vm1605, %v1591, %v840
      %v1625 = vsel %vm1605, %v1592, %v842
      %v1626 = vsel %vm1605, %v1593, %v844
      %v1627 = vsel %vm1605, %v1594, %v846
      %v1628 = vsel %vm1605, %v1595, %v848
      %v1629 = vsel %vm1605, %v1596, %v850
      %v1630 = vsel %vm1605, %v1597, %v852
      %v1631 = vsel %vm1605, %v1598, %v854
      %v1632 = vsel %vm1605, %v1599, %v856
      %v1633 = vsel %vm1605, %v1600, %v858
      %v1634 = vsel %vm1605, %v1601, %v860
      %v1635 = vsel %vm1605, %v1602, %v862
      %v1636 = vsel %vm1605, %v1603, %v864
      %v1637 = vsel %vm1605, %v1604, %v866
      %vm1638 = vcmask 130048
      %v1639 = vsel %vm1638, %v1606, %v932
      %v1640 = vsel %vm1638, %v1607, %v934
      %v1641 = vsel %vm1638, %v1608, %v936
      %v1642 = vsel %vm1638, %v1609, %v938
      %v1643 = vsel %vm1638, %v1610, %v940
      %v1644 = vsel %vm1638, %v1611, %v942
      %v1645 = vsel %vm1638, %v1612, %v944
      %v1646 = vsel %vm1638, %v1613, %v946
      %v1647 = vsel %vm1638, %v1614, %v948
      %v1648 = vsel %vm1638, %v1615, %v950
      %v1649 = vsel %vm1638, %v1616, %v952
      %v1650 = vsel %vm1638, %v1617, %v954
      %v1651 = vsel %vm1638, %v1618, %v956
      %v1652 = vsel %vm1638, %v1619, %v958
      %v1653 = vsel %vm1638, %v1620, %v960
      %v1654 = vsel %vm1638, %v1621, %v962
      %v1655 = vsel %vm1638, %v1622, %v964
      %v1656 = vsel %vm1638, %v1623, %v966
      %v1657 = vsel %vm1638, %v1624, %v968
      %v1658 = vsel %vm1638, %v1625, %v970
      %v1659 = vsel %vm1638, %v1626, %v972
      %v1660 = vsel %vm1638, %v1627, %v974
      %v1661 = vsel %vm1638, %v1628, %v976
      %v1662 = vsel %vm1638, %v1629, %v978
      %v1663 = vsel %vm1638, %v1630, %v980
      %v1664 = vsel %vm1638, %v1631, %v982
      %v1665 = vsel %vm1638, %v1632, %v984
      %v1666 = vsel %vm1638, %v1633, %v986
      %v1667 = vsel %vm1638, %v1634, %v988
      %v1668 = vsel %vm1638, %v1635, %v990
      %v1669 = vsel %vm1638, %v1636, %v992
      %v1670 = vsel %vm1638, %v1637, %v994
      %vm1671 = vcmask 162816
      %v1672 = vsel %vm1671, %v1639, %v1060
      %v1673 = vsel %vm1671, %v1640, %v1062
      %v1674 = vsel %vm1671, %v1641, %v1064
      %v1675 = vsel %vm1671, %v1642, %v1066
      %v1676 = vsel %vm1671, %v1643, %v1068
      %v1677 = vsel %vm1671, %v1644, %v1070
      %v1678 = vsel %vm1671, %v1645, %v1072
      %v1679 = vsel %vm1671, %v1646, %v1074
      %v1680 = vsel %vm1671, %v1647, %v1076
      %v1681 = vsel %vm1671, %v1648, %v1078
      %v1682 = vsel %vm1671, %v1649, %v1080
      %v1683 = vsel %vm1671, %v1650, %v1082
      %v1684 = vsel %vm1671, %v1651, %v1084
      %v1685 = vsel %vm1671, %v1652, %v1086
      %v1686 = vsel %vm1671, %v1653, %v1088
      %v1687 = vsel %vm1671, %v1654, %v1090
      %v1688 = vsel %vm1671, %v1655, %v1092
      %v1689 = vsel %vm1671, %v1656, %v1094
      %v1690 = vsel %vm1671, %v1657, %v1096
      %v1691 = vsel %vm1671, %v1658, %v1098
      %v1692 = vsel %vm1671, %v1659, %v1100
      %v1693 = vsel %vm1671, %v1660, %v1102
      %v1694 = vsel %vm1671, %v1661, %v1104
      %v1695 = vsel %vm1671, %v1662, %v1106
      %v1696 = vsel %vm1671, %v1663, %v1108
      %v1697 = vsel %vm1671, %v1664, %v1110
      %v1698 = vsel %vm1671, %v1665, %v1112
      %v1699 = vsel %vm1671, %v1666, %v1114
      %v1700 = vsel %vm1671, %v1667, %v1116
      %v1701 = vsel %vm1671, %v1668, %v1118
      %v1702 = vsel %vm1671, %v1669, %v1120
      %v1703 = vsel %vm1671, %v1670, %v1122
      %vm1704 = vcmask 195584
      %v1705 = vsel %vm1704, %v1672, %v1188
      %v1706 = vsel %vm1704, %v1673, %v1190
      %v1707 = vsel %vm1704, %v1674, %v1192
      %v1708 = vsel %vm1704, %v1675, %v1194
      %v1709 = vsel %vm1704, %v1676, %v1196
      %v1710 = vsel %vm1704, %v1677, %v1198
      %v1711 = vsel %vm1704, %v1678, %v1200
      %v1712 = vsel %vm1704, %v1679, %v1202
      %v1713 = vsel %vm1704, %v1680, %v1204
      %v1714 = vsel %vm1704, %v1681, %v1206
      %v1715 = vsel %vm1704, %v1682, %v1208
      %v1716 = vsel %vm1704, %v1683, %v1210
      %v1717 = vsel %vm1704, %v1684, %v1212
      %v1718 = vsel %vm1704, %v1685, %v1214
      %v1719 = vsel %vm1704, %v1686, %v1216
      %v1720 = vsel %vm1704, %v1687, %v1218
      %v1721 = vsel %vm1704, %v1688, %v1220
      %v1722 = vsel %vm1704, %v1689, %v1222
      %v1723 = vsel %vm1704, %v1690, %v1224
      %v1724 = vsel %vm1704, %v1691, %v1226
      %v1725 = vsel %vm1704, %v1692, %v1228
      %v1726 = vsel %vm1704, %v1693, %v1230
      %v1727 = vsel %vm1704, %v1694, %v1232
      %v1728 = vsel %vm1704, %v1695, %v1234
      %v1729 = vsel %vm1704, %v1696, %v1236
      %v1730 = vsel %vm1704, %v1697, %v1238
      %v1731 = vsel %vm1704, %v1698, %v1240
      %v1732 = vsel %vm1704, %v1699, %v1242
      %v1733 = vsel %vm1704, %v1700, %v1244
      %v1734 = vsel %vm1704, %v1701, %v1246
      %v1735 = vsel %vm1704, %v1702, %v1248
      %v1736 = vsel %vm1704, %v1703, %v1250
      %vm1737 = vcmask 228352
      %v1738 = vsel %vm1737, %v1705, %v1316
      %v1739 = vsel %vm1737, %v1706, %v1318
      %v1740 = vsel %vm1737, %v1707, %v1320
      %v1741 = vsel %vm1737, %v1708, %v1322
      %v1742 = vsel %vm1737, %v1709, %v1324
      %v1743 = vsel %vm1737, %v1710, %v1326
      %v1744 = vsel %vm1737, %v1711, %v1328
      %v1745 = vsel %vm1737, %v1712, %v1330
      %v1746 = vsel %vm1737, %v1713, %v1332
      %v1747 = vsel %vm1737, %v1714, %v1334
      %v1748 = vsel %vm1737, %v1715, %v1336
      %v1749 = vsel %vm1737, %v1716, %v1338
      %v1750 = vsel %vm1737, %v1717, %v1340
      %v1751 = vsel %vm1737, %v1718, %v1342
      %v1752 = vsel %vm1737, %v1719, %v1344
      %v1753 = vsel %vm1737, %v1720, %v1346
      %v1754 = vsel %vm1737, %v1721, %v1348
      %v1755 = vsel %vm1737, %v1722, %v1350
      %v1756 = vsel %vm1737, %v1723, %v1352
      %v1757 = vsel %vm1737, %v1724, %v1354
      %v1758 = vsel %vm1737, %v1725, %v1356
      %v1759 = vsel %vm1737, %v1726, %v1358
      %v1760 = vsel %vm1737, %v1727, %v1360
      %v1761 = vsel %vm1737, %v1728, %v1362
      %v1762 = vsel %vm1737, %v1729, %v1364
      %v1763 = vsel %vm1737, %v1730, %v1366
      %v1764 = vsel %vm1737, %v1731, %v1368
      %v1765 = vsel %vm1737, %v1732, %v1370
      %v1766 = vsel %vm1737, %v1733, %v1372
      %v1767 = vsel %vm1737, %v1734, %v1374
      %v1768 = vsel %vm1737, %v1735, %v1376
      %v1769 = vsel %vm1737, %v1736, %v1378
      %vm1770 = vcmask 261120
      %v1771 = vsel %vm1770, %v1738, %v1444
      %v1772 = vsel %vm1770, %v1739, %v1446
      %v1773 = vsel %vm1770, %v1740, %v1448
      %v1774 = vsel %vm1770, %v1741, %v1450
      %v1775 = vsel %vm1770, %v1742, %v1452
      %v1776 = vsel %vm1770, %v1743, %v1454
      %v1777 = vsel %vm1770, %v1744, %v1456
      %v1778 = vsel %vm1770, %v1745, %v1458
      %v1779 = vsel %vm1770, %v1746, %v1460
      %v1780 = vsel %vm1770, %v1747, %v1462
      %v1781 = vsel %vm1770, %v1748, %v1464
      %v1782 = vsel %vm1770, %v1749, %v1466
      %v1783 = vsel %vm1770, %v1750, %v1468
      %v1784 = vsel %vm1770, %v1751, %v1470
      %v1785 = vsel %vm1770, %v1752, %v1472
      %v1786 = vsel %vm1770, %v1753, %v1474
      %v1787 = vsel %vm1770, %v1754, %v1476
      %v1788 = vsel %vm1770, %v1755, %v1478
      %v1789 = vsel %vm1770, %v1756, %v1480
      %v1790 = vsel %vm1770, %v1757, %v1482
      %v1791 = vsel %vm1770, %v1758, %v1484
      %v1792 = vsel %vm1770, %v1759, %v1486
      %v1793 = vsel %vm1770, %v1760, %v1488
      %v1794 = vsel %vm1770, %v1761, %v1490
      %v1795 = vsel %vm1770, %v1762, %v1492
      %v1796 = vsel %vm1770, %v1763, %v1494
      %v1797 = vsel %vm1770, %v1764, %v1496
      %v1798 = vsel %vm1770, %v1765, %v1498
      %v1799 = vsel %vm1770, %v1766, %v1500
      %v1800 = vsel %vm1770, %v1767, %v1502
      %v1801 = vsel %vm1770, %v1768, %v1504
      %v1802 = vsel %vm1770, %v1769, %v1506
      %v1803 = vld [vmem:[%s1] sm:$0xff]
      %v1804 = vld [vmem:[%s1 + $0x8] sm:$0xff]
      %v1805 = vld [vmem:[%s1 + $0x10] sm:$0xff]
      %v1806 = vld [vmem:[%s1 + $0x18] sm:$0xff]
      %v1807 = vld [vmem:[%s1 + $0x20] sm:$0xf]
      %v1808 = vld [vmem:[%s2] sm:$0x1]
      %v1810 = vlaneseq
      %v1811 = vshrl.u32 %v1810, 7
      %v1812 = vsub.s32 0, %v1811
      %v1813 = vrot.slane %v1808, %v1812
      %vm1815 = vcmask 293888
      %v1817 = vsel %vm1815, %v1771, 0
      %v1820 = vsel %vm1815, %v1772, 0
      %v1823 = vsel %vm1815, %v1773, 0
      %v1826 = vsel %vm1815, %v1774, 0
      %v1829 = vsel %vm1815, %v1775, 0
      %v1832 = vsel %vm1815, %v1776, 0
      %v1835 = vsel %vm1815, %v1777, 0
      %v1838 = vsel %vm1815, %v1778, 0
      %v1841 = vsel %vm1815, %v1779, 0
      %v1844 = vsel %vm1815, %v1780, 0
      %v1847 = vsel %vm1815, %v1781, 0
      %v1850 = vsel %vm1815, %v1782, 0
      %v1853 = vsel %vm1815, %v1783, 0
      %v1856 = vsel %vm1815, %v1784, 0
      %v1859 = vsel %vm1815, %v1785, 0
      %v1862 = vsel %vm1815, %v1786, 0
      %v1865 = vsel %vm1815, %v1787, 0
      %v1868 = vsel %vm1815, %v1788, 0
      %v1871 = vsel %vm1815, %v1789, 0
      %v1874 = vsel %vm1815, %v1790, 0
      %v1877 = vsel %vm1815, %v1791, 0
      %v1880 = vsel %vm1815, %v1792, 0
      %v1883 = vsel %vm1815, %v1793, 0
      %v1886 = vsel %vm1815, %v1794, 0
      %v1889 = vsel %vm1815, %v1795, 0
      %v1892 = vsel %vm1815, %v1796, 0
      %v1895 = vsel %vm1815, %v1797, 0
      %v1898 = vsel %vm1815, %v1798, 0
      %v1901 = vsel %vm1815, %v1799, 0
      %v1904 = vsel %vm1815, %v1800, 0
      %v1907 = vsel %vm1815, %v1801, 0
      %v1910 = vsel %vm1815, %v1802, 0
      %vm1912 = vcmask 1043456
      %v1914 = vsel %vm1912, %v1807, 0
      %1916 = vmatprep.subr.mxu0 0.0
      %1917 = vmatpush1.msra.mxu0 %v1803
      %1918 = vmatprep.subr.mxu0 0.0
      %1919 = vmatpush1.msra.mxu0 %v1804
      %1920 = vmatprep.subr.mxu0 0.0
      %1921 = vmatpush1.msra.mxu0 %v1805
      %1922 = vmatprep.subr.mxu0 0.0
      %1923 = vmatpush1.msra.mxu0 %v1806
      %1924 = vmatprep.subr.mxu0 0.0
      %1925 = vmatpush1.msra.mxu0 %v1914
      %1926 = vmatprep.subr.mxu0 0.0
      %1927 = vmatpush1.msra.mxu0 0.0
      %1928 = vmatprep.subr.mxu0 0.0
      %1929 = vmatpush1.msra.mxu0 0.0
      %1930 = vmatprep.subr.mxu0 0.0
      %1931 = vmatpush1.msra.mxu0 0.0
      %1932 = vmatprep.subr.mxu0 0.0
      %1933 = vmatpush1.msra.mxu0 0.0
      %1934 = vmatprep.subr.mxu0 0.0
      %1935 = vmatpush1.msra.mxu0 0.0
      %1936 = vmatprep.subr.mxu0 0.0
      %1937 = vmatpush1.msra.mxu0 0.0
      %1938 = vmatprep.subr.mxu0 0.0
      %1939 = vmatpush1.msra.mxu0 0.0
      %1940 = vmatprep.subr.mxu0 0.0
      %1941 = vmatpush1.msra.mxu0 0.0
      %1942 = vmatprep.subr.mxu0 0.0
      %1943 = vmatpush1.msra.mxu0 0.0
      %1944 = vmatprep.subr.mxu0 0.0
      %1945 = vmatpush1.msra.mxu0 0.0
      %1946 = vmatprep.subr.mxu0 0.0
      %1947 = vmatpush1.msra.mxu0 0.0
      %1948 = vmatprep.subr.mxu0 0.0
      %1949 = vmatpush1.msra.mxu0 0.0
      %1950 = vmatprep.subr.mxu0 0.0
      %1951 = vmatpush1.msra.mxu0 0.0
      %1952 = vmatprep.subr.mxu0 0.0
      %1953 = vmatpush1.msra.mxu0 0.0
      %1954 = vmatprep.subr.mxu0 0.0
      %1955 = vmatpush1.msra.mxu0 0.0
      %1956 = vmatprep.subr.mxu0 0.0
      %1957 = vmatpush1.msra.mxu0 0.0
      %1958 = vmatprep.subr.mxu0 0.0
      %1959 = vmatpush1.msra.mxu0 0.0
      %1960 = vmatprep.subr.mxu0 0.0
      %1961 = vmatpush1.msra.mxu0 0.0
      %1962 = vmatprep.subr.mxu0 0.0
      %1963 = vmatpush1.msra.mxu0 0.0
      %1964 = vmatprep.subr.mxu0 0.0
      %1965 = vmatpush1.msra.mxu0 0.0
      %1966 = vmatprep.subr.mxu0 0.0
      %1967 = vmatpush1.msra.mxu0 0.0
      %1968 = vmatprep.subr.mxu0 0.0
      %1969 = vmatpush1.msra.mxu0 0.0
      %1970 = vmatprep.subr.mxu0 0.0
      %1971 = vmatpush1.msra.mxu0 0.0
      %1972 = vmatprep.subr.mxu0 0.0
      %1973 = vmatpush1.msra.mxu0 0.0
      %1974 = vmatprep.subr.mxu0 0.0
      %1975 = vmatpush1.msra.mxu0 0.0
      %1976 = vmatprep.subr.mxu0 0.0
      %1977 = vmatpush1.msra.mxu0 0.0
      %1978 = vmatprep.subr.mxu0 0.0
      %1979 = vmatpush1.msra.mxu0 0.0
      %1980 = vmatprep.mubr.f32.mxu0 0.0
      %1981 = vmatmul.mubr.f32.gmra.mrb[0].mxu0 %v1817
      %v1982 = vpop.f32.mrb[0].mxu0
      %v1983 = vadd.f32 %v1813, %v1982
      %v1984 = vpop.f32.mrb[0].mxu0
      %1985 = vmatprep.mubr.f32.mxu0 0.0
      %1986 = vmatmul.mubr.f32.gmra.mrb[0].mxu0 %v1820
      %v1987 = vpop.f32.mrb[0].mxu0
      %v1988 = vadd.f32 %v1813, %v1987
      %v1989 = vpop.f32.mrb[0].mxu0
      %1990 = vmatprep.mubr.f32.mxu0 0.0
      %1991 = vmatmul.mubr.f32.gmra.mrb[0].mxu0 %v1823
      %v1992 = vpop.f32.mrb[0].mxu0
      %v1993 = vadd.f32 %v1813, %v1992
      %v1994 = vpop.f32.mrb[0].mxu0
      %1995 = vmatprep.mubr.f32.mxu0 0.0
      %1996 = vmatmul.mubr.f32.gmra.mrb[0].mxu0 %v1826
      %v1997 = vpop.f32.mrb[0].mxu0
      %v1998 = vadd.f32 %v1813, %v1997
      %v1999 = vpop.f32.mrb[0].mxu0
      %2000 = vmatprep.mubr.f32.mxu0 0.0
      %2001 = vmatmul.mubr.f32.gmra.mrb[0].mxu0 %v1829
      %v2002 = vpop.f32.mrb[0].mxu0
      %v2003 = vadd.f32 %v1813, %v2002
      %v2004 = vpop.f32.mrb[0].mxu0
      %2005 = vmatprep.mubr.f32.mxu0 0.0
      %2006 = vmatmul.mubr.f32.gmra.mrb[0].mxu0 %v1832
      %v2007 = vpop.f32.mrb[0].mxu0
      %v2008 = vadd.f32 %v1813, %v2007
      %v2009 = vpop.f32.mrb[0].mxu0
      %2010 = vmatprep.mubr.f32.mxu0 0.0
      %2011 = vmatmul.mubr.f32.gmra.mrb[0].mxu0 %v1835
      %v2012 = vpop.f32.mrb[0].mxu0
      %v2013 = vadd.f32 %v1813, %v2012
      %v2014 = vpop.f32.mrb[0].mxu0
      %2015 = vmatprep.mubr.f32.mxu0 0.0
      %2016 = vmatmul.mubr.f32.gmra.mrb[0].mxu0 %v1838
      %v2017 = vpop.f32.mrb[0].mxu0
      %v2018 = vadd.f32 %v1813, %v2017
      %v2019 = vpop.f32.mrb[0].mxu0
      %2020 = vmatprep.mubr.f32.mxu0 0.0
      %2021 = vmatmul.mubr.f32.gmra.mrb[0].mxu0 %v1841
      %v2022 = vpop.f32.mrb[0].mxu0
      %v2023 = vadd.f32 %v1813, %v2022
      %v2024 = vpop.f32.mrb[0].mxu0
      %2025 = vmatprep.mubr.f32.mxu0 0.0
      %2026 = vmatmul.mubr.f32.gmra.mrb[0].mxu0 %v1844
      %v2027 = vpop.f32.mrb[0].mxu0
      %v2028 = vadd.f32 %v1813, %v2027
      %v2029 = vpop.f32.mrb[0].mxu0
      %2030 = vmatprep.mubr.f32.mxu0 0.0
      %2031 = vmatmul.mubr.f32.gmra.mrb[0].mxu0 %v1847
      %v2032 = vpop.f32.mrb[0].mxu0
      %v2033 = vadd.f32 %v1813, %v2032
      %v2034 = vpop.f32.mrb[0].mxu0
      %2035 = vmatprep.mubr.f32.mxu0 0.0
      %2036 = vmatmul.mubr.f32.gmra.mrb[0].mxu0 %v1850
      %v2037 = vpop.f32.mrb[0].mxu0
      %v2038 = vadd.f32 %v1813, %v2037
      %v2039 = vpop.f32.mrb[0].mxu0
      %2040 = vmatprep.mubr.f32.mxu0 0.0
      %2041 = vmatmul.mubr.f32.gmra.mrb[0].mxu0 %v1853
      %v2042 = vpop.f32.mrb[0].mxu0
      %v2043 = vadd.f32 %v1813, %v2042
      %v2044 = vpop.f32.mrb[0].mxu0
      %2045 = vmatprep.mubr.f32.mxu0 0.0
      %2046 = vmatmul.mubr.f32.gmra.mrb[0].mxu0 %v1856
      %v2047 = vpop.f32.mrb[0].mxu0
      %v2048 = vadd.f32 %v1813, %v2047
      %v2049 = vpop.f32.mrb[0].mxu0
      %2050 = vmatprep.mubr.f32.mxu0 0.0
      %2051 = vmatmul.mubr.f32.gmra.mrb[0].mxu0 %v1859
      %v2052 = vpop.f32.mrb[0].mxu0
      %v2053 = vadd.f32 %v1813, %v2052
      %v2054 = vpop.f32.mrb[0].mxu0
      %2055 = vmatprep.mubr.f32.mxu0 0.0
      %2056 = vmatmul.mubr.f32.gmra.mrb[0].mxu0 %v1862
      %v2057 = vpop.f32.mrb[0].mxu0
      %v2058 = vadd.f32 %v1813, %v2057
      %v2059 = vpop.f32.mrb[0].mxu0
      %2060 = vmatprep.mubr.f32.mxu0 0.0
      %2061 = vmatmul.mubr.f32.gmra.mrb[0].mxu0 %v1865
      %v2062 = vpop.f32.mrb[0].mxu0
      %v2063 = vadd.f32 %v1813, %v2062
      %v2064 = vpop.f32.mrb[0].mxu0
      %2065 = vmatprep.mubr.f32.mxu0 0.0
      %2066 = vmatmul.mubr.f32.gmra.mrb[0].mxu0 %v1868
      %v2067 = vpop.f32.mrb[0].mxu0
      %v2068 = vadd.f32 %v1813, %v2067
      %v2069 = vpop.f32.mrb[0].mxu0
      %2070 = vmatprep.mubr.f32.mxu0 0.0
      %2071 = vmatmul.mubr.f32.gmra.mrb[0].mxu0 %v1871
      %v2072 = vpop.f32.mrb[0].mxu0
      %v2073 = vadd.f32 %v1813, %v2072
      %v2074 = vpop.f32.mrb[0].mxu0
      %2075 = vmatprep.mubr.f32.mxu0 0.0
      %2076 = vmatmul.mubr.f32.gmra.mrb[0].mxu0 %v1874
      %v2077 = vpop.f32.mrb[0].mxu0
      %v2078 = vadd.f32 %v1813, %v2077
      %v2079 = vpop.f32.mrb[0].mxu0
      %2080 = vmatprep.mubr.f32.mxu0 0.0
      %2081 = vmatmul.mubr.f32.gmra.mrb[0].mxu0 %v1877
      %v2082 = vpop.f32.mrb[0].mxu0
      %v2083 = vadd.f32 %v1813, %v2082
      %v2084 = vpop.f32.mrb[0].mxu0
      %2085 = vmatprep.mubr.f32.mxu0 0.0
      %2086 = vmatmul.mubr.f32.gmra.mrb[0].mxu0 %v1880
      %v2087 = vpop.f32.mrb[0].mxu0
      %v2088 = vadd.f32 %v1813, %v2087
      %v2089 = vpop.f32.mrb[0].mxu0
      %2090 = vmatprep.mubr.f32.mxu0 0.0
      %2091 = vmatmul.mubr.f32.gmra.mrb[0].mxu0 %v1883
      %v2092 = vpop.f32.mrb[0].mxu0
      %v2093 = vadd.f32 %v1813, %v2092
      %v2094 = vpop.f32.mrb[0].mxu0
      %2095 = vmatprep.mubr.f32.mxu0 0.0
      %2096 = vmatmul.mubr.f32.gmra.mrb[0].mxu0 %v1886
      %v2097 = vpop.f32.mrb[0].mxu0
      %v2098 = vadd.f32 %v1813, %v2097
      %v2099 = vpop.f32.mrb[0].mxu0
      %2100 = vmatprep.mubr.f32.mxu0 0.0
      %2101 = vmatmul.mubr.f32.gmra.mrb[0].mxu0 %v1889
      %v2102 = vpop.f32.mrb[0].mxu0
      %v2103 = vadd.f32 %v1813, %v2102
      %v2104 = vpop.f32.mrb[0].mxu0
      %2105 = vmatprep.mubr.f32.mxu0 0.0
      %2106 = vmatmul.mubr.f32.gmra.mrb[0].mxu0 %v1892
      %v2107 = vpop.f32.mrb[0].mxu0
      %v2108 = vadd.f32 %v1813, %v2107
      %v2109 = vpop.f32.mrb[0].mxu0
      %2110 = vmatprep.mubr.f32.mxu0 0.0
      %2111 = vmatmul.mubr.f32.gmra.mrb[0].mxu0 %v1895
      %v2112 = vpop.f32.mrb[0].mxu0
      %v2113 = vadd.f32 %v1813, %v2112
      %v2114 = vpop.f32.mrb[0].mxu0
      %2115 = vmatprep.mubr.f32.mxu0 0.0
      %2116 = vmatmul.mubr.f32.gmra.mrb[0].mxu0 %v1898
      %v2117 = vpop.f32.mrb[0].mxu0
      %v2118 = vadd.f32 %v1813, %v2117
      %v2119 = vpop.f32.mrb[0].mxu0
      %2120 = vmatprep.mubr.f32.mxu0 0.0
      %2121 = vmatmul.mubr.f32.gmra.mrb[0].mxu0 %v1901
      %v2122 = vpop.f32.mrb[0].mxu0
      %v2123 = vadd.f32 %v1813, %v2122
      %v2124 = vpop.f32.mrb[0].mxu0
      %2125 = vmatprep.mubr.f32.mxu0 0.0
      %2126 = vmatmul.mubr.f32.gmra.mrb[0].mxu0 %v1904
      %v2127 = vpop.f32.mrb[0].mxu0
      %v2128 = vadd.f32 %v1813, %v2127
      %v2129 = vpop.f32.mrb[0].mxu0
      %2130 = vmatprep.mubr.f32.mxu0 0.0
      %2131 = vmatmul.mubr.f32.gmra.mrb[0].mxu0 %v1907
      %v2132 = vpop.f32.mrb[0].mxu0
      %v2133 = vadd.f32 %v1813, %v2132
      %v2134 = vpop.f32.mrb[0].mxu0
      %2135 = vmatprep.mubr.f32.mxu0 0.0
      %2136 = vmatmul.mubr.f32.gmra.mrb[0].mxu0 %v1910
      %v2137 = vpop.f32.mrb[0].mxu0
      %v2138 = vadd.f32 %v1813, %v2137
      %v2139 = vpop.f32.mrb[0].mxu0
      %2140 = vdwg.mxu0
      %vm2141 = vcmp.ge.f32.partialorder %v1983, 0.0
      %vm2142 = vcmp.ge.f32.partialorder %v1988, 0.0
      %vm2143 = vcmp.ge.f32.partialorder %v1993, 0.0
      %vm2144 = vcmp.ge.f32.partialorder %v1998, 0.0
      %vm2145 = vcmp.ge.f32.partialorder %v2003, 0.0
      %vm2146 = vcmp.ge.f32.partialorder %v2008, 0.0
      %vm2147 = vcmp.ge.f32.partialorder %v2013, 0.0
      %vm2148 = vcmp.ge.f32.partialorder %v2018, 0.0
      %vm2149 = vcmp.ge.f32.partialorder %v2023, 0.0
      %vm2150 = vcmp.ge.f32.partialorder %v2028, 0.0
      %vm2151 = vcmp.ge.f32.partialorder %v2033, 0.0
      %vm2152 = vcmp.ge.f32.partialorder %v2038, 0.0
      %vm2153 = vcmp.ge.f32.partialorder %v2043, 0.0
      %vm2154 = vcmp.ge.f32.partialorder %v2048, 0.0
      %vm2155 = vcmp.ge.f32.partialorder %v2053, 0.0
      %vm2156 = vcmp.ge.f32.partialorder %v2058, 0.0
      %vm2157 = vcmp.ge.f32.partialorder %v2063, 0.0
      %vm2158 = vcmp.ge.f32.partialorder %v2068, 0.0
      %vm2159 = vcmp.ge.f32.partialorder %v2073, 0.0
      %vm2160 = vcmp.ge.f32.partialorder %v2078, 0.0
      %vm2161 = vcmp.ge.f32.partialorder %v2083, 0.0
      %vm2162 = vcmp.ge.f32.partialorder %v2088, 0.0
      %vm2163 = vcmp.ge.f32.partialorder %v2093, 0.0
      %vm2164 = vcmp.ge.f32.partialorder %v2098, 0.0
      %vm2165 = vcmp.ge.f32.partialorder %v2103, 0.0
      %vm2166 = vcmp.ge.f32.partialorder %v2108, 0.0
      %vm2167 = vcmp.ge.f32.partialorder %v2113, 0.0
      %vm2168 = vcmp.ge.f32.partialorder %v2118, 0.0
      %vm2169 = vcmp.ge.f32.partialorder %v2123, 0.0
      %vm2170 = vcmp.ge.f32.partialorder %v2128, 0.0
      %vm2171 = vcmp.ge.f32.partialorder %v2133, 0.0
      %vm2172 = vcmp.ge.f32.partialorder %v2138, 0.0
      %v2173 = vmul.f32 %v1983, 0.2
      %v2174 = vmul.f32 %v1988, 0.2
      %v2175 = vmul.f32 %v1993, 0.2
      %v2176 = vmul.f32 %v1998, 0.2
      %v2177 = vmul.f32 %v2003, 0.2
      %v2178 = vmul.f32 %v2008, 0.2
      %v2179 = vmul.f32 %v2013, 0.2
      %v2180 = vmul.f32 %v2018, 0.2
      %v2181 = vmul.f32 %v2023, 0.2
      %v2182 = vmul.f32 %v2028, 0.2
      %v2183 = vmul.f32 %v2033, 0.2
      %v2184 = vmul.f32 %v2038, 0.2
      %v2185 = vmul.f32 %v2043, 0.2
      %v2186 = vmul.f32 %v2048, 0.2
      %v2187 = vmul.f32 %v2053, 0.2
      %v2188 = vmul.f32 %v2058, 0.2
      %v2189 = vmul.f32 %v2063, 0.2
      %v2190 = vmul.f32 %v2068, 0.2
      %v2191 = vmul.f32 %v2073, 0.2
      %v2192 = vmul.f32 %v2078, 0.2
      %v2193 = vmul.f32 %v2083, 0.2
      %v2194 = vmul.f32 %v2088, 0.2
      %v2195 = vmul.f32 %v2093, 0.2
      %v2196 = vmul.f32 %v2098, 0.2
      %v2197 = vmul.f32 %v2103, 0.2
      %v2198 = vmul.f32 %v2108, 0.2
      %v2199 = vmul.f32 %v2113, 0.2
      %v2200 = vmul.f32 %v2118, 0.2
      %v2201 = vmul.f32 %v2123, 0.2
      %v2202 = vmul.f32 %v2128, 0.2
      %v2203 = vmul.f32 %v2133, 0.2
      %v2204 = vmul.f32 %v2138, 0.2
      %v2205 = vsel %vm2141, %v1983, %v2173
      %v2206 = vsel %vm2142, %v1988, %v2174
      %v2207 = vsel %vm2143, %v1993, %v2175
      %v2208 = vsel %vm2144, %v1998, %v2176
      %v2209 = vsel %vm2145, %v2003, %v2177
      %v2210 = vsel %vm2146, %v2008, %v2178
      %v2211 = vsel %vm2147, %v2013, %v2179
      %v2212 = vsel %vm2148, %v2018, %v2180
      %v2213 = vsel %vm2149, %v2023, %v2181
      %v2214 = vsel %vm2150, %v2028, %v2182
      %v2215 = vsel %vm2151, %v2033, %v2183
      %v2216 = vsel %vm2152, %v2038, %v2184
      %v2217 = vsel %vm2153, %v2043, %v2185
      %v2218 = vsel %vm2154, %v2048, %v2186
      %v2219 = vsel %vm2155, %v2053, %v2187
      %v2220 = vsel %vm2156, %v2058, %v2188
      %v2221 = vsel %vm2157, %v2063, %v2189
      %v2222 = vsel %vm2158, %v2068, %v2190
      %v2223 = vsel %vm2159, %v2073, %v2191
      %v2224 = vsel %vm2160, %v2078, %v2192
      %v2225 = vsel %vm2161, %v2083, %v2193
      %v2226 = vsel %vm2162, %v2088, %v2194
      %v2227 = vsel %vm2163, %v2093, %v2195
      %v2228 = vsel %vm2164, %v2098, %v2196
      %v2229 = vsel %vm2165, %v2103, %v2197
      %v2230 = vsel %vm2166, %v2108, %v2198
      %v2231 = vsel %vm2167, %v2113, %v2199
      %v2232 = vsel %vm2168, %v2118, %v2200
      %v2233 = vsel %vm2169, %v2123, %v2201
      %v2234 = vsel %vm2170, %v2128, %v2202
      %v2235 = vsel %vm2171, %v2133, %v2203
      %v2236 = vsel %vm2172, %v2138, %v2204
      %2237 = vst.msk [vmem:[#allocation2] sm:$0xff] %vm1539, 0.0
      %2238 = vst.msk [vmem:[#allocation2 + $0x8] sm:$0xff] %vm1539, 0.0
      %2239 = vst.msk [vmem:[#allocation2 + $0x10] sm:$0xff] %vm1539, 0.0
      %2240 = vst.msk [vmem:[#allocation2 + $0x18] sm:$0xff] %vm1539, 0.0
      %2241 = vst.msk [vmem:[#allocation2 + $0x20] sm:$0xff] %vm1539, 0.0
      %2242 = vst.msk [vmem:[#allocation2 + $0x28] sm:$0xff] %vm1539, 0.0
      %2243 = vst.msk [vmem:[#allocation2 + $0x30] sm:$0xff] %vm1539, 0.0
      %2244 = vst.msk [vmem:[#allocation2 + $0x38] sm:$0xff] %vm1539, 0.0
      %2245 = vst.msk [vmem:[#allocation2 + $0x40] sm:$0xff] %vm1539, 0.0
      %2246 = vst.msk [vmem:[#allocation2 + $0x48] sm:$0xff] %vm1539, 0.0
      %2247 = vst.msk [vmem:[#allocation2 + $0x50] sm:$0xff] %vm1539, 0.0
      %2248 = vst.msk [vmem:[#allocation2 + $0x58] sm:$0xff] %vm1539, 0.0
      %2249 = vst.msk [vmem:[#allocation2 + $0x60] sm:$0xff] %vm1539, 0.0
      %2250 = vst.msk [vmem:[#allocation2 + $0x68] sm:$0xff] %vm1539, 0.0
      %2251 = vst.msk [vmem:[#allocation2 + $0x70] sm:$0xff] %vm1539, 0.0
      %2252 = vst.msk [vmem:[#allocation2 + $0x78] sm:$0xff] %vm1539, 0.0
      %2253 = vst.msk [vmem:[#allocation2 + $0x80] sm:$0xff] %vm1539, 0.0
      %2254 = vst.msk [vmem:[#allocation2 + $0x88] sm:$0xff] %vm1539, 0.0
      %2255 = vst.msk [vmem:[#allocation2 + $0x90] sm:$0xff] %vm1539, 0.0
      %2256 = vst.msk [vmem:[#allocation2 + $0x98] sm:$0xff] %vm1539, 0.0
      %2257 = vst.msk [vmem:[#allocation2 + $0xa0] sm:$0xff] %vm1539, 0.0
      %2258 = vst.msk [vmem:[#allocation2 + $0xa8] sm:$0xff] %vm1539, 0.0
      %2259 = vst.msk [vmem:[#allocation2 + $0xb0] sm:$0xff] %vm1539, 0.0
      %2260 = vst.msk [vmem:[#allocation2 + $0xb8] sm:$0xff] %vm1539, 0.0
      %2261 = vst.msk [vmem:[#allocation2 + $0xc0] sm:$0xff] %vm1539, 0.0
      %2262 = vst.msk [vmem:[#allocation2 + $0xc8] sm:$0xff] %vm1539, 0.0
      %2263 = vst.msk [vmem:[#allocation2 + $0xd0] sm:$0xff] %vm1539, 0.0
      %2264 = vst.msk [vmem:[#allocation2 + $0xd8] sm:$0xff] %vm1539, 0.0
      %2265 = vst.msk [vmem:[#allocation2 + $0xe0] sm:$0xff] %vm1539, 0.0
      %2266 = vst.msk [vmem:[#allocation2 + $0xe8] sm:$0xff] %vm1539, 0.0
      %2267 = vst.msk [vmem:[#allocation2 + $0xf0] sm:$0xff] %vm1539, 0.0
      %2268 = vst.msk [vmem:[#allocation2 + $0xf8] sm:$0xff] %vm1539, 0.0
      %2269 = vst.msk [vmem:[#allocation2 + $0x100] sm:$0xff] %vm1539, 0.0
      %2270 = vst.msk [vmem:[#allocation2 + $0x108] sm:$0xff] %vm1539, 0.0
      %2271 = vst.msk [vmem:[#allocation2 + $0x110] sm:$0xff] %vm1539, 0.0
      %2272 = vst.msk [vmem:[#allocation2 + $0x118] sm:$0xff] %vm1539, 0.0
      %2273 = vst.msk [vmem:[#allocation2 + $0x120] sm:$0xff] %vm1539, 0.0
      %2274 = vst.msk [vmem:[#allocation2 + $0x128] sm:$0xff] %vm1539, 0.0
      %2275 = vst.msk [vmem:[#allocation2 + $0x130] sm:$0xff] %vm1539, 0.0
      %2276 = vst.msk [vmem:[#allocation2 + $0x138] sm:$0xff] %vm1539, 0.0
      %2277 = vst.msk [vmem:[#allocation2 + $0x140] sm:$0xff] %vm1539, 0.0
      %2278 = vst.msk [vmem:[#allocation2 + $0x148] sm:$0xff] %vm1539, 0.0
      %2279 = vst.msk [vmem:[#allocation2 + $0x150] sm:$0xff] %vm1539, 0.0
      %2280 = vst.msk [vmem:[#allocation2 + $0x158] sm:$0xff] %vm1539, 0.0
      %2281 = vst.msk [vmem:[#allocation2 + $0x160] sm:$0xff] %vm1539, 0.0
      %2282 = vst.msk [vmem:[#allocation2 + $0x168] sm:$0xff] %vm1539, 0.0
      %2283 = vst.msk [vmem:[#allocation2 + $0x170] sm:$0xff] %vm1539, 0.0
      %2284 = vst.msk [vmem:[#allocation2 + $0x178] sm:$0xff] %vm1539, 0.0
      %2285 = vst.msk [vmem:[#allocation2 + $0x180] sm:$0xff] %vm1539, 0.0
      %2286 = vst.msk [vmem:[#allocation2 + $0x188] sm:$0xff] %vm1539, 0.0
      %2287 = vst.msk [vmem:[#allocation2 + $0x190] sm:$0xff] %vm1539, 0.0
      %2288 = vst.msk [vmem:[#allocation2 + $0x198] sm:$0xff] %vm1539, 0.0
      %2289 = vst.msk [vmem:[#allocation2 + $0x1a0] sm:$0xff] %vm1539, 0.0
      %2290 = vst.msk [vmem:[#allocation2 + $0x1a8] sm:$0xff] %vm1539, 0.0
      %2291 = vst.msk [vmem:[#allocation2 + $0x1b0] sm:$0xff] %vm1539, 0.0
      %2292 = vst.msk [vmem:[#allocation2 + $0x1b8] sm:$0xff] %vm1539, 0.0
      %2293 = vst.msk [vmem:[#allocation2 + $0x1c0] sm:$0xff] %vm1539, 0.0
      %2294 = vst.msk [vmem:[#allocation2 + $0x1c8] sm:$0xff] %vm1539, 0.0
      %2295 = vst.msk [vmem:[#allocation2 + $0x1d0] sm:$0xff] %vm1539, 0.0
      %2296 = vst.msk [vmem:[#allocation2 + $0x1d8] sm:$0xff] %vm1539, 0.0
      %2297 = vst.msk [vmem:[#allocation2 + $0x1e0] sm:$0xff] %vm1539, 0.0
      %2298 = vst.msk [vmem:[#allocation2 + $0x1e8] sm:$0xff] %vm1539, 0.0
      %2299 = vst.msk [vmem:[#allocation2 + $0x1f0] sm:$0xff] %vm1539, 0.0
      %2300 = vst.msk [vmem:[#allocation2 + $0x1f8] sm:$0xff] %vm1539, 0.0
      %2301 = vst.msk [vmem:[#allocation2 + $0x200] sm:$0xff] %vm1539, 0.0
      %2302 = vst.msk [vmem:[#allocation2 + $0x208] sm:$0xff] %vm1539, 0.0
      %2303 = vst.msk [vmem:[#allocation2 + $0x210] sm:$0xff] %vm1539, 0.0
      %2304 = vst.msk [vmem:[#allocation2 + $0x218] sm:$0xff] %vm1539, 0.0
      %2305 = vst.msk [vmem:[#allocation2 + $0x220] sm:$0xff] %vm1539, 0.0
      %2306 = vst.msk [vmem:[#allocation2 + $0x228] sm:$0xff] %vm1539, 0.0
      %2307 = vst.msk [vmem:[#allocation2 + $0x230] sm:$0xff] %vm1539, 0.0
      %2308 = vst.msk [vmem:[#allocation2 + $0x238] sm:$0xff] %vm1539, 0.0
      %s2309 = scalar_lea.vmem [#allocation2], 32
      %2310 = vst.msk [vmem:[%s2309 + $0x8] sm:$0xff] %vm1539, %v2205
      %2311 = vst.msk [vmem:[%s2309 + $0x10] sm:$0xff] %vm1539, %v2206
      %2312 = vst.msk [vmem:[%s2309 + $0x28] sm:$0xff] %vm1539, %v2207
      %2313 = vst.msk [vmem:[%s2309 + $0x30] sm:$0xff] %vm1539, %v2208
      %2314 = vst.msk [vmem:[%s2309 + $0x48] sm:$0xff] %vm1539, %v2209
      %2315 = vst.msk [vmem:[%s2309 + $0x50] sm:$0xff] %vm1539, %v2210
      %2316 = vst.msk [vmem:[%s2309 + $0x68] sm:$0xff] %vm1539, %v2211
      %2317 = vst.msk [vmem:[%s2309 + $0x70] sm:$0xff] %vm1539, %v2212
      %2318 = vst.msk [vmem:[%s2309 + $0x88] sm:$0xff] %vm1539, %v2213
      %2319 = vst.msk [vmem:[%s2309 + $0x90] sm:$0xff] %vm1539, %v2214
      %2320 = vst.msk [vmem:[%s2309 + $0xa8] sm:$0xff] %vm1539, %v2215
      %2321 = vst.msk [vmem:[%s2309 + $0xb0] sm:$0xff] %vm1539, %v2216
      %2322 = vst.msk [vmem:[%s2309 + $0xc8] sm:$0xff] %vm1539, %v2217
      %2323 = vst.msk [vmem:[%s2309 + $0xd0] sm:$0xff] %vm1539, %v2218
      %2324 = vst.msk [vmem:[%s2309 + $0xe8] sm:$0xff] %vm1539, %v2219
      %2325 = vst.msk [vmem:[%s2309 + $0xf0] sm:$0xff] %vm1539, %v2220
      %2326 = vst.msk [vmem:[%s2309 + $0x108] sm:$0xff] %vm1539, %v2221
      %2327 = vst.msk [vmem:[%s2309 + $0x110] sm:$0xff] %vm1539, %v2222
      %2328 = vst.msk [vmem:[%s2309 + $0x128] sm:$0xff] %vm1539, %v2223
      %2329 = vst.msk [vmem:[%s2309 + $0x130] sm:$0xff] %vm1539, %v2224
      %2330 = vst.msk [vmem:[%s2309 + $0x148] sm:$0xff] %vm1539, %v2225
      %2331 = vst.msk [vmem:[%s2309 + $0x150] sm:$0xff] %vm1539, %v2226
      %2332 = vst.msk [vmem:[%s2309 + $0x168] sm:$0xff] %vm1539, %v2227
      %2333 = vst.msk [vmem:[%s2309 + $0x170] sm:$0xff] %vm1539, %v2228
      %2334 = vst.msk [vmem:[%s2309 + $0x188] sm:$0xff] %vm1539, %v2229
      %2335 = vst.msk [vmem:[%s2309 + $0x190] sm:$0xff] %vm1539, %v2230
      %2336 = vst.msk [vmem:[%s2309 + $0x1a8] sm:$0xff] %vm1539, %v2231
      %2337 = vst.msk [vmem:[%s2309 + $0x1b0] sm:$0xff] %vm1539, %v2232
      %2338 = vst.msk [vmem:[%s2309 + $0x1c8] sm:$0xff] %vm1539, %v2233
      %2339 = vst.msk [vmem:[%s2309 + $0x1d0] sm:$0xff] %vm1539, %v2234
      %2340 = vst.msk [vmem:[%s2309 + $0x1e8] sm:$0xff] %vm1539, %v2235
      %2341 = vst.msk [vmem:[%s2309 + $0x1f0] sm:$0xff] %vm1539, %v2236
      %v2342 = vld [vmem:[#allocation2 + $0x7] sm:$0xff]
      %v2343 = vld [vmem:[#allocation2 + $0xf] sm:$0xff]
      %v2344 = vld [vmem:[#allocation2 + $0x27] sm:$0xff]
      %v2345 = vld [vmem:[#allocation2 + $0x2f] sm:$0xff]
      %v2346 = vld [vmem:[#allocation2 + $0x47] sm:$0xff]
      %v2347 = vld [vmem:[#allocation2 + $0x4f] sm:$0xff]
      %v2348 = vld [vmem:[#allocation2 + $0x67] sm:$0xff]
      %v2349 = vld [vmem:[#allocation2 + $0x6f] sm:$0xff]
      %v2350 = vld [vmem:[#allocation2 + $0x87] sm:$0xff]
      %v2351 = vld [vmem:[#allocation2 + $0x8f] sm:$0xff]
      %v2352 = vld [vmem:[#allocation2 + $0xa7] sm:$0xff]
      %v2353 = vld [vmem:[#allocation2 + $0xaf] sm:$0xff]
      %v2354 = vld [vmem:[#allocation2 + $0xc7] sm:$0xff]
      %v2355 = vld [vmem:[#allocation2 + $0xcf] sm:$0xff]
      %v2356 = vld [vmem:[#allocation2 + $0xe7] sm:$0xff]
      %v2357 = vld [vmem:[#allocation2 + $0xef] sm:$0xff]
      %v2358 = vld [vmem:[#allocation2 + $0x107] sm:$0xff]
      %v2359 = vld [vmem:[#allocation2 + $0x10f] sm:$0xff]
      %v2360 = vld [vmem:[#allocation2 + $0x127] sm:$0xff]
      %v2361 = vld [vmem:[#allocation2 + $0x12f] sm:$0xff]
      %v2362 = vld [vmem:[#allocation2 + $0x147] sm:$0xff]
      %v2363 = vld [vmem:[#allocation2 + $0x14f] sm:$0xff]
      %v2364 = vld [vmem:[#allocation2 + $0x167] sm:$0xff]
      %v2365 = vld [vmem:[#allocation2 + $0x16f] sm:$0xff]
      %v2366 = vld [vmem:[#allocation2 + $0x187] sm:$0xff]
      %v2367 = vld [vmem:[#allocation2 + $0x18f] sm:$0xff]
      %v2368 = vld [vmem:[#allocation2 + $0x1a7] sm:$0xff]
      %v2369 = vld [vmem:[#allocation2 + $0x1af] sm:$0xff]
      %v2370 = vld [vmem:[#allocation2 + $0x1c7] sm:$0xff]
      %v2371 = vld [vmem:[#allocation2 + $0x1cf] sm:$0xff]
      %v2372 = vld [vmem:[#allocation2 + $0x1e7] sm:$0xff]
      %v2373 = vld [vmem:[#allocation2 + $0x1ef] sm:$0xff]
      %v2374 = vld [vmem:[#allocation2 + $0x8] sm:$0xff]
      %v2375 = vld [vmem:[#allocation2 + $0x10] sm:$0xff]
      %v2376 = vld [vmem:[#allocation2 + $0x28] sm:$0xff]
      %v2377 = vld [vmem:[#allocation2 + $0x30] sm:$0xff]
      %v2378 = vld [vmem:[#allocation2 + $0x48] sm:$0xff]
      %v2379 = vld [vmem:[#allocation2 + $0x50] sm:$0xff]
      %v2380 = vld [vmem:[#allocation2 + $0x68] sm:$0xff]
      %v2381 = vld [vmem:[#allocation2 + $0x70] sm:$0xff]
      %v2382 = vld [vmem:[#allocation2 + $0x88] sm:$0xff]
      %v2383 = vld [vmem:[#allocation2 + $0x90] sm:$0xff]
      %v2384 = vld [vmem:[#allocation2 + $0xa8] sm:$0xff]
      %v2385 = vld [vmem:[#allocation2 + $0xb0] sm:$0xff]
      %v2386 = vld [vmem:[#allocation2 + $0xc8] sm:$0xff]
      %v2387 = vld [vmem:[#allocation2 + $0xd0] sm:$0xff]
      %v2388 = vld [vmem:[#allocation2 + $0xe8] sm:$0xff]
      %v2389 = vld [vmem:[#allocation2 + $0xf0] sm:$0xff]
      %v2390 = vld [vmem:[#allocation2 + $0x108] sm:$0xff]
      %v2391 = vld [vmem:[#allocation2 + $0x110] sm:$0xff]
      %v2392 = vld [vmem:[#allocation2 + $0x128] sm:$0xff]
      %v2393 = vld [vmem:[#allocation2 + $0x130] sm:$0xff]
      %v2394 = vld [vmem:[#allocation2 + $0x148] sm:$0xff]
      %v2395 = vld [vmem:[#allocation2 + $0x150] sm:$0xff]
      %v2396 = vld [vmem:[#allocation2 + $0x168] sm:$0xff]
      %v2397 = vld [vmem:[#allocation2 + $0x170] sm:$0xff]
      %v2398 = vld [vmem:[#allocation2 + $0x188] sm:$0xff]
      %v2399 = vld [vmem:[#allocation2 + $0x190] sm:$0xff]
      %v2400 = vld [vmem:[#allocation2 + $0x1a8] sm:$0xff]
      %v2401 = vld [vmem:[#allocation2 + $0x1b0] sm:$0xff]
      %v2402 = vld [vmem:[#allocation2 + $0x1c8] sm:$0xff]
      %v2403 = vld [vmem:[#allocation2 + $0x1d0] sm:$0xff]
      %v2404 = vld [vmem:[#allocation2 + $0x1e8] sm:$0xff]
      %v2405 = vld [vmem:[#allocation2 + $0x1f0] sm:$0xff]
      %v2406 = vld [vmem:[#allocation2 + $0x9] sm:$0xff]
      %v2407 = vld [vmem:[#allocation2 + $0x11] sm:$0xff]
      %v2408 = vld [vmem:[#allocation2 + $0x29] sm:$0xff]
      %v2409 = vld [vmem:[#allocation2 + $0x31] sm:$0xff]
      %v2410 = vld [vmem:[#allocation2 + $0x49] sm:$0xff]
      %v2411 = vld [vmem:[#allocation2 + $0x51] sm:$0xff]
      %v2412 = vld [vmem:[#allocation2 + $0x69] sm:$0xff]
      %v2413 = vld [vmem:[#allocation2 + $0x71] sm:$0xff]
      %v2414 = vld [vmem:[#allocation2 + $0x89] sm:$0xff]
      %v2415 = vld [vmem:[#allocation2 + $0x91] sm:$0xff]
      %v2416 = vld [vmem:[#allocation2 + $0xa9] sm:$0xff]
      %v2417 = vld [vmem:[#allocation2 + $0xb1] sm:$0xff]
      %v2418 = vld [vmem:[#allocation2 + $0xc9] sm:$0xff]
      %v2419 = vld [vmem:[#allocation2 + $0xd1] sm:$0xff]
      %v2420 = vld [vmem:[#allocation2 + $0xe9] sm:$0xff]
      %v2421 = vld [vmem:[#allocation2 + $0xf1] sm:$0xff]
      %v2422 = vld [vmem:[#allocation2 + $0x109] sm:$0xff]
      %v2423 = vld [vmem:[#allocation2 + $0x111] sm:$0xff]
      %v2424 = vld [vmem:[#allocation2 + $0x129] sm:$0xff]
      %v2425 = vld [vmem:[#allocation2 + $0x131] sm:$0xff]
      %v2426 = vld [vmem:[#allocation2 + $0x149] sm:$0xff]
      %v2427 = vld [vmem:[#allocation2 + $0x151] sm:$0xff]
      %v2428 = vld [vmem:[#allocation2 + $0x169] sm:$0xff]
      %v2429 = vld [vmem:[#allocation2 + $0x171] sm:$0xff]
      %v2430 = vld [vmem:[#allocation2 + $0x189] sm:$0xff]
      %v2431 = vld [vmem:[#allocation2 + $0x191] sm:$0xff]
      %v2432 = vld [vmem:[#allocation2 + $0x1a9] sm:$0xff]
      %v2433 = vld [vmem:[#allocation2 + $0x1b1] sm:$0xff]
      %v2434 = vld [vmem:[#allocation2 + $0x1c9] sm:$0xff]
      %v2435 = vld [vmem:[#allocation2 + $0x1d1] sm:$0xff]
      %v2436 = vld [vmem:[#allocation2 + $0x1e9] sm:$0xff]
      %v2437 = vld [vmem:[#allocation2 + $0x1f1] sm:$0xff]
      %v2438 = vld [vmem:[%s2309 + $0x7] sm:$0xff]
      %v2439 = vld [vmem:[%s2309 + $0xf] sm:$0xff]
      %v2440 = vld [vmem:[%s2309 + $0x27] sm:$0xff]
      %v2441 = vld [vmem:[%s2309 + $0x2f] sm:$0xff]
      %v2442 = vld [vmem:[%s2309 + $0x47] sm:$0xff]
      %v2443 = vld [vmem:[%s2309 + $0x4f] sm:$0xff]
      %v2444 = vld [vmem:[%s2309 + $0x67] sm:$0xff]
      %v2445 = vld [vmem:[%s2309 + $0x6f] sm:$0xff]
      %v2446 = vld [vmem:[%s2309 + $0x87] sm:$0xff]
      %v2447 = vld [vmem:[%s2309 + $0x8f] sm:$0xff]
      %v2448 = vld [vmem:[%s2309 + $0xa7] sm:$0xff]
      %v2449 = vld [vmem:[%s2309 + $0xaf] sm:$0xff]
      %v2450 = vld [vmem:[%s2309 + $0xc7] sm:$0xff]
      %v2451 = vld [vmem:[%s2309 + $0xcf] sm:$0xff]
      %v2452 = vld [vmem:[%s2309 + $0xe7] sm:$0xff]
      %v2453 = vld [vmem:[%s2309 + $0xef] sm:$0xff]
      %v2454 = vld [vmem:[%s2309 + $0x107] sm:$0xff]
      %v2455 = vld [vmem:[%s2309 + $0x10f] sm:$0xff]
      %v2456 = vld [vmem:[%s2309 + $0x127] sm:$0xff]
      %v2457 = vld [vmem:[%s2309 + $0x12f] sm:$0xff]
      %v2458 = vld [vmem:[%s2309 + $0x147] sm:$0xff]
      %v2459 = vld [vmem:[%s2309 + $0x14f] sm:$0xff]
      %v2460 = vld [vmem:[%s2309 + $0x167] sm:$0xff]
      %v2461 = vld [vmem:[%s2309 + $0x16f] sm:$0xff]
      %v2462 = vld [vmem:[%s2309 + $0x187] sm:$0xff]
      %v2463 = vld [vmem:[%s2309 + $0x18f] sm:$0xff]
      %v2464 = vld [vmem:[%s2309 + $0x1a7] sm:$0xff]
      %v2465 = vld [vmem:[%s2309 + $0x1af] sm:$0xff]
      %v2466 = vld [vmem:[%s2309 + $0x1c7] sm:$0xff]
      %v2467 = vld [vmem:[%s2309 + $0x1cf] sm:$0xff]
      %v2468 = vld [vmem:[%s2309 + $0x1e7] sm:$0xff]
      %v2469 = vld [vmem:[%s2309 + $0x1ef] sm:$0xff]
      %v2470 = vld [vmem:[%s2309 + $0x8] sm:$0xff]
      %v2471 = vld [vmem:[%s2309 + $0x10] sm:$0xff]
      %v2472 = vld [vmem:[%s2309 + $0x28] sm:$0xff]
      %v2473 = vld [vmem:[%s2309 + $0x30] sm:$0xff]
      %v2474 = vld [vmem:[%s2309 + $0x48] sm:$0xff]
      %v2475 = vld [vmem:[%s2309 + $0x50] sm:$0xff]
      %v2476 = vld [vmem:[%s2309 + $0x68] sm:$0xff]
      %v2477 = vld [vmem:[%s2309 + $0x70] sm:$0xff]
      %v2478 = vld [vmem:[%s2309 + $0x88] sm:$0xff]
      %v2479 = vld [vmem:[%s2309 + $0x90] sm:$0xff]
      %v2480 = vld [vmem:[%s2309 + $0xa8] sm:$0xff]
      %v2481 = vld [vmem:[%s2309 + $0xb0] sm:$0xff]
      %v2482 = vld [vmem:[%s2309 + $0xc8] sm:$0xff]
      %v2483 = vld [vmem:[%s2309 + $0xd0] sm:$0xff]
      %v2484 = vld [vmem:[%s2309 + $0xe8] sm:$0xff]
      %v2485 = vld [vmem:[%s2309 + $0xf0] sm:$0xff]
      %v2486 = vld [vmem:[%s2309 + $0x108] sm:$0xff]
      %v2487 = vld [vmem:[%s2309 + $0x110] sm:$0xff]
      %v2488 = vld [vmem:[%s2309 + $0x128] sm:$0xff]
      %v2489 = vld [vmem:[%s2309 + $0x130] sm:$0xff]
      %v2490 = vld [vmem:[%s2309 + $0x148] sm:$0xff]
      %v2491 = vld [vmem:[%s2309 + $0x150] sm:$0xff]
      %v2492 = vld [vmem:[%s2309 + $0x168] sm:$0xff]
      %v2493 = vld [vmem:[%s2309 + $0x170] sm:$0xff]
      %v2494 = vld [vmem:[%s2309 + $0x188] sm:$0xff]
      %v2495 = vld [vmem:[%s2309 + $0x190] sm:$0xff]
      %v2496 = vld [vmem:[%s2309 + $0x1a8] sm:$0xff]
      %v2497 = vld [vmem:[%s2309 + $0x1b0] sm:$0xff]
      %v2498 = vld [vmem:[%s2309 + $0x1c8] sm:$0xff]
      %v2499 = vld [vmem:[%s2309 + $0x1d0] sm:$0xff]
      %v2500 = vld [vmem:[%s2309 + $0x1e8] sm:$0xff]
      %v2501 = vld [vmem:[%s2309 + $0x1f0] sm:$0xff]
      %v2502 = vld [vmem:[%s2309 + $0x9] sm:$0xff]
      %v2503 = vld [vmem:[%s2309 + $0x11] sm:$0xff]
      %v2504 = vld [vmem:[%s2309 + $0x29] sm:$0xff]
      %v2505 = vld [vmem:[%s2309 + $0x31] sm:$0xff]
      %v2506 = vld [vmem:[%s2309 + $0x49] sm:$0xff]
      %v2507 = vld [vmem:[%s2309 + $0x51] sm:$0xff]
      %v2508 = vld [vmem:[%s2309 + $0x69] sm:$0xff]
      %v2509 = vld [vmem:[%s2309 + $0x71] sm:$0xff]
      %v2510 = vld [vmem:[%s2309 + $0x89] sm:$0xff]
      %v2511 = vld [vmem:[%s2309 + $0x91] sm:$0xff]
      %v2512 = vld [vmem:[%s2309 + $0xa9] sm:$0xff]
      %v2513 = vld [vmem:[%s2309 + $0xb1] sm:$0xff]
      %v2514 = vld [vmem:[%s2309 + $0xc9] sm:$0xff]
      %v2515 = vld [vmem:[%s2309 + $0xd1] sm:$0xff]
      %v2516 = vld [vmem:[%s2309 + $0xe9] sm:$0xff]
      %v2517 = vld [vmem:[%s2309 + $0xf1] sm:$0xff]
      %v2518 = vld [vmem:[%s2309 + $0x109] sm:$0xff]
      %v2519 = vld [vmem:[%s2309 + $0x111] sm:$0xff]
      %v2520 = vld [vmem:[%s2309 + $0x129] sm:$0xff]
      %v2521 = vld [vmem:[%s2309 + $0x131] sm:$0xff]
      %v2522 = vld [vmem:[%s2309 + $0x149] sm:$0xff]
      %v2523 = vld [vmem:[%s2309 + $0x151] sm:$0xff]
      %v2524 = vld [vmem:[%s2309 + $0x169] sm:$0xff]
      %v2525 = vld [vmem:[%s2309 + $0x171] sm:$0xff]
      %v2526 = vld [vmem:[%s2309 + $0x189] sm:$0xff]
      %v2527 = vld [vmem:[%s2309 + $0x191] sm:$0xff]
      %v2528 = vld [vmem:[%s2309 + $0x1a9] sm:$0xff]
      %v2529 = vld [vmem:[%s2309 + $0x1b1] sm:$0xff]
      %v2530 = vld [vmem:[%s2309 + $0x1c9] sm:$0xff]
      %v2531 = vld [vmem:[%s2309 + $0x1d1] sm:$0xff]
      %v2532 = vld [vmem:[%s2309 + $0x1e9] sm:$0xff]
      %v2533 = vld [vmem:[%s2309 + $0x1f1] sm:$0xff]
      %s2534 = scalar_lea.vmem [#allocation2], 64
      %v2535 = vld [vmem:[%s2534 + $0x7] sm:$0xff]
      %v2536 = vld [vmem:[%s2534 + $0xf] sm:$0xff]
      %v2537 = vld [vmem:[%s2534 + $0x27] sm:$0xff]
      %v2538 = vld [vmem:[%s2534 + $0x2f] sm:$0xff]
      %v2539 = vld [vmem:[%s2534 + $0x47] sm:$0xff]
      %v2540 = vld [vmem:[%s2534 + $0x4f] sm:$0xff]
      %v2541 = vld [vmem:[%s2534 + $0x67] sm:$0xff]
      %v2542 = vld [vmem:[%s2534 + $0x6f] sm:$0xff]
      %v2543 = vld [vmem:[%s2534 + $0x87] sm:$0xff]
      %v2544 = vld [vmem:[%s2534 + $0x8f] sm:$0xff]
      %v2545 = vld [vmem:[%s2534 + $0xa7] sm:$0xff]
      %v2546 = vld [vmem:[%s2534 + $0xaf] sm:$0xff]
      %v2547 = vld [vmem:[%s2534 + $0xc7] sm:$0xff]
      %v2548 = vld [vmem:[%s2534 + $0xcf] sm:$0xff]
      %v2549 = vld [vmem:[%s2534 + $0xe7] sm:$0xff]
      %v2550 = vld [vmem:[%s2534 + $0xef] sm:$0xff]
      %v2551 = vld [vmem:[%s2534 + $0x107] sm:$0xff]
      %v2552 = vld [vmem:[%s2534 + $0x10f] sm:$0xff]
      %v2553 = vld [vmem:[%s2534 + $0x127] sm:$0xff]
      %v2554 = vld [vmem:[%s2534 + $0x12f] sm:$0xff]
      %v2555 = vld [vmem:[%s2534 + $0x147] sm:$0xff]
      %v2556 = vld [vmem:[%s2534 + $0x14f] sm:$0xff]
      %v2557 = vld [vmem:[%s2534 + $0x167] sm:$0xff]
      %v2558 = vld [vmem:[%s2534 + $0x16f] sm:$0xff]
      %v2559 = vld [vmem:[%s2534 + $0x187] sm:$0xff]
      %v2560 = vld [vmem:[%s2534 + $0x18f] sm:$0xff]
      %v2561 = vld [vmem:[%s2534 + $0x1a7] sm:$0xff]
      %v2562 = vld [vmem:[%s2534 + $0x1af] sm:$0xff]
      %v2563 = vld [vmem:[%s2534 + $0x1c7] sm:$0xff]
      %v2564 = vld [vmem:[%s2534 + $0x1cf] sm:$0xff]
      %v2565 = vld [vmem:[%s2534 + $0x1e7] sm:$0xff]
      %v2566 = vld [vmem:[%s2534 + $0x1ef] sm:$0xff]
      %v2567 = vld [vmem:[%s2534 + $0x8] sm:$0xff]
      %v2568 = vld [vmem:[%s2534 + $0x10] sm:$0xff]
      %v2569 = vld [vmem:[%s2534 + $0x28] sm:$0xff]
      %v2570 = vld [vmem:[%s2534 + $0x30] sm:$0xff]
      %v2571 = vld [vmem:[%s2534 + $0x48] sm:$0xff]
      %v2572 = vld [vmem:[%s2534 + $0x50] sm:$0xff]
      %v2573 = vld [vmem:[%s2534 + $0x68] sm:$0xff]
      %v2574 = vld [vmem:[%s2534 + $0x70] sm:$0xff]
      %v2575 = vld [vmem:[%s2534 + $0x88] sm:$0xff]
      %v2576 = vld [vmem:[%s2534 + $0x90] sm:$0xff]
      %v2577 = vld [vmem:[%s2534 + $0xa8] sm:$0xff]
      %v2578 = vld [vmem:[%s2534 + $0xb0] sm:$0xff]
      %v2579 = vld [vmem:[%s2534 + $0xc8] sm:$0xff]
      %v2580 = vld [vmem:[%s2534 + $0xd0] sm:$0xff]
      %v2581 = vld [vmem:[%s2534 + $0xe8] sm:$0xff]
      %v2582 = vld [vmem:[%s2534 + $0xf0] sm:$0xff]
      %v2583 = vld [vmem:[%s2534 + $0x108] sm:$0xff]
      %v2584 = vld [vmem:[%s2534 + $0x110] sm:$0xff]
      %v2585 = vld [vmem:[%s2534 + $0x128] sm:$0xff]
      %v2586 = vld [vmem:[%s2534 + $0x130] sm:$0xff]
      %v2587 = vld [vmem:[%s2534 + $0x148] sm:$0xff]
      %v2588 = vld [vmem:[%s2534 + $0x150] sm:$0xff]
      %v2589 = vld [vmem:[%s2534 + $0x168] sm:$0xff]
      %v2590 = vld [vmem:[%s2534 + $0x170] sm:$0xff]
      %v2591 = vld [vmem:[%s2534 + $0x188] sm:$0xff]
      %v2592 = vld [vmem:[%s2534 + $0x190] sm:$0xff]
      %v2593 = vld [vmem:[%s2534 + $0x1a8] sm:$0xff]
      %v2594 = vld [vmem:[%s2534 + $0x1b0] sm:$0xff]
      %v2595 = vld [vmem:[%s2534 + $0x1c8] sm:$0xff]
      %v2596 = vld [vmem:[%s2534 + $0x1d0] sm:$0xff]
      %v2597 = vld [vmem:[%s2534 + $0x1e8] sm:$0xff]
      %v2598 = vld [vmem:[%s2534 + $0x1f0] sm:$0xff]
      %v2599 = vld [vmem:[%s2534 + $0x9] sm:$0xff]
      %v2600 = vld [vmem:[%s2534 + $0x11] sm:$0xff]
      %v2601 = vld [vmem:[%s2534 + $0x29] sm:$0xff]
      %v2602 = vld [vmem:[%s2534 + $0x31] sm:$0xff]
      %v2603 = vld [vmem:[%s2534 + $0x49] sm:$0xff]
      %v2604 = vld [vmem:[%s2534 + $0x51] sm:$0xff]
      %v2605 = vld [vmem:[%s2534 + $0x69] sm:$0xff]
      %v2606 = vld [vmem:[%s2534 + $0x71] sm:$0xff]
      %v2607 = vld [vmem:[%s2534 + $0x89] sm:$0xff]
      %v2608 = vld [vmem:[%s2534 + $0x91] sm:$0xff]
      %v2609 = vld [vmem:[%s2534 + $0xa9] sm:$0xff]
      %v2610 = vld [vmem:[%s2534 + $0xb1] sm:$0xff]
      %v2611 = vld [vmem:[%s2534 + $0xc9] sm:$0xff]
      %v2612 = vld [vmem:[%s2534 + $0xd1] sm:$0xff]
      %v2613 = vld [vmem:[%s2534 + $0xe9] sm:$0xff]
      %v2614 = vld [vmem:[%s2534 + $0xf1] sm:$0xff]
      %v2615 = vld [vmem:[%s2534 + $0x109] sm:$0xff]
      %v2616 = vld [vmem:[%s2534 + $0x111] sm:$0xff]
      %v2617 = vld [vmem:[%s2534 + $0x129] sm:$0xff]
      %v2618 = vld [vmem:[%s2534 + $0x131] sm:$0xff]
      %v2619 = vld [vmem:[%s2534 + $0x149] sm:$0xff]
      %v2620 = vld [vmem:[%s2534 + $0x151] sm:$0xff]
      %v2621 = vld [vmem:[%s2534 + $0x169] sm:$0xff]
      %v2622 = vld [vmem:[%s2534 + $0x171] sm:$0xff]
      %v2623 = vld [vmem:[%s2534 + $0x189] sm:$0xff]
      %v2624 = vld [vmem:[%s2534 + $0x191] sm:$0xff]
      %v2625 = vld [vmem:[%s2534 + $0x1a9] sm:$0xff]
      %v2626 = vld [vmem:[%s2534 + $0x1b1] sm:$0xff]
      %v2627 = vld [vmem:[%s2534 + $0x1c9] sm:$0xff]
      %v2628 = vld [vmem:[%s2534 + $0x1d1] sm:$0xff]
      %v2629 = vld [vmem:[%s2534 + $0x1e9] sm:$0xff]
      %v2630 = vld [vmem:[%s2534 + $0x1f1] sm:$0xff]
      %2663 = vrot.lane.b32.xlu0 %v2374, 4
      %v2664 = vpop.permute.xlu0 %2663
      %2665 = vrot.lane.b32.xlu0 %v2375, 4
      %v2666 = vpop.permute.xlu0 %2665
      %2667 = vrot.lane.b32.xlu0 %v2376, 4
      %v2668 = vpop.permute.xlu0 %2667
      %2669 = vrot.lane.b32.xlu0 %v2377, 4
      %v2670 = vpop.permute.xlu0 %2669
      %2671 = vrot.lane.b32.xlu0 %v2378, 4
      %v2672 = vpop.permute.xlu0 %2671
      %2673 = vrot.lane.b32.xlu0 %v2379, 4
      %v2674 = vpop.permute.xlu0 %2673
      %2675 = vrot.lane.b32.xlu0 %v2380, 4
      %v2676 = vpop.permute.xlu0 %2675
      %2677 = vrot.lane.b32.xlu0 %v2381, 4
      %v2678 = vpop.permute.xlu0 %2677
      %2679 = vrot.lane.b32.xlu0 %v2382, 4
      %v2680 = vpop.permute.xlu0 %2679
      %2681 = vrot.lane.b32.xlu0 %v2383, 4
      %v2682 = vpop.permute.xlu0 %2681
      %2683 = vrot.lane.b32.xlu0 %v2384, 4
      %v2684 = vpop.permute.xlu0 %2683
      %2685 = vrot.lane.b32.xlu0 %v2385, 4
      %v2686 = vpop.permute.xlu0 %2685
      %2687 = vrot.lane.b32.xlu0 %v2386, 4
      %v2688 = vpop.permute.xlu0 %2687
      %2689 = vrot.lane.b32.xlu0 %v2387, 4
      %v2690 = vpop.permute.xlu0 %2689
      %2691 = vrot.lane.b32.xlu0 %v2388, 4
      %v2692 = vpop.permute.xlu0 %2691
      %2693 = vrot.lane.b32.xlu0 %v2389, 4
      %v2694 = vpop.permute.xlu0 %2693
      %2695 = vrot.lane.b32.xlu0 %v2390, 4
      %v2696 = vpop.permute.xlu0 %2695
      %2697 = vrot.lane.b32.xlu0 %v2391, 4
      %v2698 = vpop.permute.xlu0 %2697
      %2699 = vrot.lane.b32.xlu0 %v2392, 4
      %v2700 = vpop.permute.xlu0 %2699
      %2701 = vrot.lane.b32.xlu0 %v2393, 4
      %v2702 = vpop.permute.xlu0 %2701
      %2703 = vrot.lane.b32.xlu0 %v2394, 4
      %v2704 = vpop.permute.xlu0 %2703
      %2705 = vrot.lane.b32.xlu0 %v2395, 4
      %v2706 = vpop.permute.xlu0 %2705
      %2707 = vrot.lane.b32.xlu0 %v2396, 4
      %v2708 = vpop.permute.xlu0 %2707
      %2709 = vrot.lane.b32.xlu0 %v2397, 4
      %v2710 = vpop.permute.xlu0 %2709
      %2711 = vrot.lane.b32.xlu0 %v2398, 4
      %v2712 = vpop.permute.xlu0 %2711
      %2713 = vrot.lane.b32.xlu0 %v2399, 4
      %v2714 = vpop.permute.xlu0 %2713
      %2715 = vrot.lane.b32.xlu0 %v2400, 4
      %v2716 = vpop.permute.xlu0 %2715
      %2717 = vrot.lane.b32.xlu0 %v2401, 4
      %v2718 = vpop.permute.xlu0 %2717
      %2719 = vrot.lane.b32.xlu0 %v2402, 4
      %v2720 = vpop.permute.xlu0 %2719
      %2721 = vrot.lane.b32.xlu0 %v2403, 4
      %v2722 = vpop.permute.xlu0 %2721
      %2723 = vrot.lane.b32.xlu0 %v2404, 4
      %v2724 = vpop.permute.xlu0 %2723
      %2725 = vrot.lane.b32.xlu0 %v2405, 4
      %v2726 = vpop.permute.xlu0 %2725
      %2791 = vrot.lane.b32.xlu0 %v2406, 8
      %v2792 = vpop.permute.xlu0 %2791
      %2793 = vrot.lane.b32.xlu0 %v2407, 8
      %v2794 = vpop.permute.xlu0 %2793
      %2795 = vrot.lane.b32.xlu0 %v2408, 8
      %v2796 = vpop.permute.xlu0 %2795
      %2797 = vrot.lane.b32.xlu0 %v2409, 8
      %v2798 = vpop.permute.xlu0 %2797
      %2799 = vrot.lane.b32.xlu0 %v2410, 8
      %v2800 = vpop.permute.xlu0 %2799
      %2801 = vrot.lane.b32.xlu0 %v2411, 8
      %v2802 = vpop.permute.xlu0 %2801
      %2803 = vrot.lane.b32.xlu0 %v2412, 8
      %v2804 = vpop.permute.xlu0 %2803
      %2805 = vrot.lane.b32.xlu0 %v2413, 8
      %v2806 = vpop.permute.xlu0 %2805
      %2807 = vrot.lane.b32.xlu0 %v2414, 8
      %v2808 = vpop.permute.xlu0 %2807
      %2809 = vrot.lane.b32.xlu0 %v2415, 8
      %v2810 = vpop.permute.xlu0 %2809
      %2811 = vrot.lane.b32.xlu0 %v2416, 8
      %v2812 = vpop.permute.xlu0 %2811
      %2813 = vrot.lane.b32.xlu0 %v2417, 8
      %v2814 = vpop.permute.xlu0 %2813
      %2815 = vrot.lane.b32.xlu0 %v2418, 8
      %v2816 = vpop.permute.xlu0 %2815
      %2817 = vrot.lane.b32.xlu0 %v2419, 8
      %v2818 = vpop.permute.xlu0 %2817
      %2819 = vrot.lane.b32.xlu0 %v2420, 8
      %v2820 = vpop.permute.xlu0 %2819
      %2821 = vrot.lane.b32.xlu0 %v2421, 8
      %v2822 = vpop.permute.xlu0 %2821
      %2823 = vrot.lane.b32.xlu0 %v2422, 8
      %v2824 = vpop.permute.xlu0 %2823
      %2825 = vrot.lane.b32.xlu0 %v2423, 8
      %v2826 = vpop.permute.xlu0 %2825
      %2827 = vrot.lane.b32.xlu0 %v2424, 8
      %v2828 = vpop.permute.xlu0 %2827
      %2829 = vrot.lane.b32.xlu0 %v2425, 8
      %v2830 = vpop.permute.xlu0 %2829
      %2831 = vrot.lane.b32.xlu0 %v2426, 8
      %v2832 = vpop.permute.xlu0 %2831
      %2833 = vrot.lane.b32.xlu0 %v2427, 8
      %v2834 = vpop.permute.xlu0 %2833
      %2835 = vrot.lane.b32.xlu0 %v2428, 8
      %v2836 = vpop.permute.xlu0 %2835
      %2837 = vrot.lane.b32.xlu0 %v2429, 8
      %v2838 = vpop.permute.xlu0 %2837
      %2839 = vrot.lane.b32.xlu0 %v2430, 8
      %v2840 = vpop.permute.xlu0 %2839
      %2841 = vrot.lane.b32.xlu0 %v2431, 8
      %v2842 = vpop.permute.xlu0 %2841
      %2843 = vrot.lane.b32.xlu0 %v2432, 8
      %v2844 = vpop.permute.xlu0 %2843
      %2845 = vrot.lane.b32.xlu0 %v2433, 8
      %v2846 = vpop.permute.xlu0 %2845
      %2847 = vrot.lane.b32.xlu0 %v2434, 8
      %v2848 = vpop.permute.xlu0 %2847
      %2849 = vrot.lane.b32.xlu0 %v2435, 8
      %v2850 = vpop.permute.xlu0 %2849
      %2851 = vrot.lane.b32.xlu0 %v2436, 8
      %v2852 = vpop.permute.xlu0 %2851
      %2853 = vrot.lane.b32.xlu0 %v2437, 8
      %v2854 = vpop.permute.xlu0 %2853
      %2919 = vrot.lane.b32.xlu0 %v2438, 12
      %v2920 = vpop.permute.xlu0 %2919
      %2921 = vrot.lane.b32.xlu0 %v2439, 12
      %v2922 = vpop.permute.xlu0 %2921
      %2923 = vrot.lane.b32.xlu0 %v2440, 12
      %v2924 = vpop.permute.xlu0 %2923
      %2925 = vrot.lane.b32.xlu0 %v2441, 12
      %v2926 = vpop.permute.xlu0 %2925
      %2927 = vrot.lane.b32.xlu0 %v2442, 12
      %v2928 = vpop.permute.xlu0 %2927
      %2929 = vrot.lane.b32.xlu0 %v2443, 12
      %v2930 = vpop.permute.xlu0 %2929
      %2931 = vrot.lane.b32.xlu0 %v2444, 12
      %v2932 = vpop.permute.xlu0 %2931
      %2933 = vrot.lane.b32.xlu0 %v2445, 12
      %v2934 = vpop.permute.xlu0 %2933
      %2935 = vrot.lane.b32.xlu0 %v2446, 12
      %v2936 = vpop.permute.xlu0 %2935
      %2937 = vrot.lane.b32.xlu0 %v2447, 12
      %v2938 = vpop.permute.xlu0 %2937
      %2939 = vrot.lane.b32.xlu0 %v2448, 12
      %v2940 = vpop.permute.xlu0 %2939
      %2941 = vrot.lane.b32.xlu0 %v2449, 12
      %v2942 = vpop.permute.xlu0 %2941
      %2943 = vrot.lane.b32.xlu0 %v2450, 12
      %v2944 = vpop.permute.xlu0 %2943
      %2945 = vrot.lane.b32.xlu0 %v2451, 12
      %v2946 = vpop.permute.xlu0 %2945
      %2947 = vrot.lane.b32.xlu0 %v2452, 12
      %v2948 = vpop.permute.xlu0 %2947
      %2949 = vrot.lane.b32.xlu0 %v2453, 12
      %v2950 = vpop.permute.xlu0 %2949
      %2951 = vrot.lane.b32.xlu0 %v2454, 12
      %v2952 = vpop.permute.xlu0 %2951
      %2953 = vrot.lane.b32.xlu0 %v2455, 12
      %v2954 = vpop.permute.xlu0 %2953
      %2955 = vrot.lane.b32.xlu0 %v2456, 12
      %v2956 = vpop.permute.xlu0 %2955
      %2957 = vrot.lane.b32.xlu0 %v2457, 12
      %v2958 = vpop.permute.xlu0 %2957
      %2959 = vrot.lane.b32.xlu0 %v2458, 12
      %v2960 = vpop.permute.xlu0 %2959
      %2961 = vrot.lane.b32.xlu0 %v2459, 12
      %v2962 = vpop.permute.xlu0 %2961
      %2963 = vrot.lane.b32.xlu0 %v2460, 12
      %v2964 = vpop.permute.xlu0 %2963
      %2965 = vrot.lane.b32.xlu0 %v2461, 12
      %v2966 = vpop.permute.xlu0 %2965
      %2967 = vrot.lane.b32.xlu0 %v2462, 12
      %v2968 = vpop.permute.xlu0 %2967
      %2969 = vrot.lane.b32.xlu0 %v2463, 12
      %v2970 = vpop.permute.xlu0 %2969
      %2971 = vrot.lane.b32.xlu0 %v2464, 12
      %v2972 = vpop.permute.xlu0 %2971
      %2973 = vrot.lane.b32.xlu0 %v2465, 12
      %v2974 = vpop.permute.xlu0 %2973
      %2975 = vrot.lane.b32.xlu0 %v2466, 12
      %v2976 = vpop.permute.xlu0 %2975
      %2977 = vrot.lane.b32.xlu0 %v2467, 12
      %v2978 = vpop.permute.xlu0 %2977
      %2979 = vrot.lane.b32.xlu0 %v2468, 12
      %v2980 = vpop.permute.xlu0 %2979
      %2981 = vrot.lane.b32.xlu0 %v2469, 12
      %v2982 = vpop.permute.xlu0 %2981
      %3047 = vrot.lane.b32.xlu0 %v2470, 16
      %v3048 = vpop.permute.xlu0 %3047
      %3049 = vrot.lane.b32.xlu0 %v2471, 16
      %v3050 = vpop.permute.xlu0 %3049
      %3051 = vrot.lane.b32.xlu0 %v2472, 16
      %v3052 = vpop.permute.xlu0 %3051
      %3053 = vrot.lane.b32.xlu0 %v2473, 16
      %v3054 = vpop.permute.xlu0 %3053
      %3055 = vrot.lane.b32.xlu0 %v2474, 16
      %v3056 = vpop.permute.xlu0 %3055
      %3057 = vrot.lane.b32.xlu0 %v2475, 16
      %v3058 = vpop.permute.xlu0 %3057
      %3059 = vrot.lane.b32.xlu0 %v2476, 16
      %v3060 = vpop.permute.xlu0 %3059
      %3061 = vrot.lane.b32.xlu0 %v2477, 16
      %v3062 = vpop.permute.xlu0 %3061
      %3063 = vrot.lane.b32.xlu0 %v2478, 16
      %v3064 = vpop.permute.xlu0 %3063
      %3065 = vrot.lane.b32.xlu0 %v2479, 16
      %v3066 = vpop.permute.xlu0 %3065
      %3067 = vrot.lane.b32.xlu0 %v2480, 16
      %v3068 = vpop.permute.xlu0 %3067
      %3069 = vrot.lane.b32.xlu0 %v2481, 16
      %v3070 = vpop.permute.xlu0 %3069
      %3071 = vrot.lane.b32.xlu0 %v2482, 16
      %v3072 = vpop.permute.xlu0 %3071
      %3073 = vrot.lane.b32.xlu0 %v2483, 16
      %v3074 = vpop.permute.xlu0 %3073
      %3075 = vrot.lane.b32.xlu0 %v2484, 16
      %v3076 = vpop.permute.xlu0 %3075
      %3077 = vrot.lane.b32.xlu0 %v2485, 16
      %v3078 = vpop.permute.xlu0 %3077
      %3079 = vrot.lane.b32.xlu0 %v2486, 16
      %v3080 = vpop.permute.xlu0 %3079
      %3081 = vrot.lane.b32.xlu0 %v2487, 16
      %v3082 = vpop.permute.xlu0 %3081
      %3083 = vrot.lane.b32.xlu0 %v2488, 16
      %v3084 = vpop.permute.xlu0 %3083
      %3085 = vrot.lane.b32.xlu0 %v2489, 16
      %v3086 = vpop.permute.xlu0 %3085
      %3087 = vrot.lane.b32.xlu0 %v2490, 16
      %v3088 = vpop.permute.xlu0 %3087
      %3089 = vrot.lane.b32.xlu0 %v2491, 16
      %v3090 = vpop.permute.xlu0 %3089
      %3091 = vrot.lane.b32.xlu0 %v2492, 16
      %v3092 = vpop.permute.xlu0 %3091
      %3093 = vrot.lane.b32.xlu0 %v2493, 16
      %v3094 = vpop.permute.xlu0 %3093
      %3095 = vrot.lane.b32.xlu0 %v2494, 16
      %v3096 = vpop.permute.xlu0 %3095
      %3097 = vrot.lane.b32.xlu0 %v2495, 16
      %v3098 = vpop.permute.xlu0 %3097
      %3099 = vrot.lane.b32.xlu0 %v2496, 16
      %v3100 = vpop.permute.xlu0 %3099
      %3101 = vrot.lane.b32.xlu0 %v2497, 16
      %v3102 = vpop.permute.xlu0 %3101
      %3103 = vrot.lane.b32.xlu0 %v2498, 16
      %v3104 = vpop.permute.xlu0 %3103
      %3105 = vrot.lane.b32.xlu0 %v2499, 16
      %v3106 = vpop.permute.xlu0 %3105
      %3107 = vrot.lane.b32.xlu0 %v2500, 16
      %v3108 = vpop.permute.xlu0 %3107
      %3109 = vrot.lane.b32.xlu0 %v2501, 16
      %v3110 = vpop.permute.xlu0 %3109
      %3175 = vrot.lane.b32.xlu0 %v2502, 20
      %v3176 = vpop.permute.xlu0 %3175
      %3177 = vrot.lane.b32.xlu0 %v2503, 20
      %v3178 = vpop.permute.xlu0 %3177
      %3179 = vrot.lane.b32.xlu0 %v2504, 20
      %v3180 = vpop.permute.xlu0 %3179
      %3181 = vrot.lane.b32.xlu0 %v2505, 20
      %v3182 = vpop.permute.xlu0 %3181
      %3183 = vrot.lane.b32.xlu0 %v2506, 20
      %v3184 = vpop.permute.xlu0 %3183
      %3185 = vrot.lane.b32.xlu0 %v2507, 20
      %v3186 = vpop.permute.xlu0 %3185
      %3187 = vrot.lane.b32.xlu0 %v2508, 20
      %v3188 = vpop.permute.xlu0 %3187
      %3189 = vrot.lane.b32.xlu0 %v2509, 20
      %v3190 = vpop.permute.xlu0 %3189
      %3191 = vrot.lane.b32.xlu0 %v2510, 20
      %v3192 = vpop.permute.xlu0 %3191
      %3193 = vrot.lane.b32.xlu0 %v2511, 20
      %v3194 = vpop.permute.xlu0 %3193
      %3195 = vrot.lane.b32.xlu0 %v2512, 20
      %v3196 = vpop.permute.xlu0 %3195
      %3197 = vrot.lane.b32.xlu0 %v2513, 20
      %v3198 = vpop.permute.xlu0 %3197
      %3199 = vrot.lane.b32.xlu0 %v2514, 20
      %v3200 = vpop.permute.xlu0 %3199
      %3201 = vrot.lane.b32.xlu0 %v2515, 20
      %v3202 = vpop.permute.xlu0 %3201
      %3203 = vrot.lane.b32.xlu0 %v2516, 20
      %v3204 = vpop.permute.xlu0 %3203
      %3205 = vrot.lane.b32.xlu0 %v2517, 20
      %v3206 = vpop.permute.xlu0 %3205
      %3207 = vrot.lane.b32.xlu0 %v2518, 20
      %v3208 = vpop.permute.xlu0 %3207
      %3209 = vrot.lane.b32.xlu0 %v2519, 20
      %v3210 = vpop.permute.xlu0 %3209
      %3211 = vrot.lane.b32.xlu0 %v2520, 20
      %v3212 = vpop.permute.xlu0 %3211
      %3213 = vrot.lane.b32.xlu0 %v2521, 20
      %v3214 = vpop.permute.xlu0 %3213
      %3215 = vrot.lane.b32.xlu0 %v2522, 20
      %v3216 = vpop.permute.xlu0 %3215
      %3217 = vrot.lane.b32.xlu0 %v2523, 20
      %v3218 = vpop.permute.xlu0 %3217
      %3219 = vrot.lane.b32.xlu0 %v2524, 20
      %v3220 = vpop.permute.xlu0 %3219
      %3221 = vrot.lane.b32.xlu0 %v2525, 20
      %v3222 = vpop.permute.xlu0 %3221
      %3223 = vrot.lane.b32.xlu0 %v2526, 20
      %v3224 = vpop.permute.xlu0 %3223
      %3225 = vrot.lane.b32.xlu0 %v2527, 20
      %v3226 = vpop.permute.xlu0 %3225
      %3227 = vrot.lane.b32.xlu0 %v2528, 20
      %v3228 = vpop.permute.xlu0 %3227
      %3229 = vrot.lane.b32.xlu0 %v2529, 20
      %v3230 = vpop.permute.xlu0 %3229
      %3231 = vrot.lane.b32.xlu0 %v2530, 20
      %v3232 = vpop.permute.xlu0 %3231
      %3233 = vrot.lane.b32.xlu0 %v2531, 20
      %v3234 = vpop.permute.xlu0 %3233
      %3235 = vrot.lane.b32.xlu0 %v2532, 20
      %v3236 = vpop.permute.xlu0 %3235
      %3237 = vrot.lane.b32.xlu0 %v2533, 20
      %v3238 = vpop.permute.xlu0 %3237
      %3303 = vrot.lane.b32.xlu0 %v2535, 24
      %v3304 = vpop.permute.xlu0 %3303
      %3305 = vrot.lane.b32.xlu0 %v2536, 24
      %v3306 = vpop.permute.xlu0 %3305
      %3307 = vrot.lane.b32.xlu0 %v2537, 24
      %v3308 = vpop.permute.xlu0 %3307
      %3309 = vrot.lane.b32.xlu0 %v2538, 24
      %v3310 = vpop.permute.xlu0 %3309
      %3311 = vrot.lane.b32.xlu0 %v2539, 24
      %v3312 = vpop.permute.xlu0 %3311
      %3313 = vrot.lane.b32.xlu0 %v2540, 24
      %v3314 = vpop.permute.xlu0 %3313
      %3315 = vrot.lane.b32.xlu0 %v2541, 24
      %v3316 = vpop.permute.xlu0 %3315
      %3317 = vrot.lane.b32.xlu0 %v2542, 24
      %v3318 = vpop.permute.xlu0 %3317
      %3319 = vrot.lane.b32.xlu0 %v2543, 24
      %v3320 = vpop.permute.xlu0 %3319
      %3321 = vrot.lane.b32.xlu0 %v2544, 24
      %v3322 = vpop.permute.xlu0 %3321
      %3323 = vrot.lane.b32.xlu0 %v2545, 24
      %v3324 = vpop.permute.xlu0 %3323
      %3325 = vrot.lane.b32.xlu0 %v2546, 24
      %v3326 = vpop.permute.xlu0 %3325
      %3327 = vrot.lane.b32.xlu0 %v2547, 24
      %v3328 = vpop.permute.xlu0 %3327
      %3329 = vrot.lane.b32.xlu0 %v2548, 24
      %v3330 = vpop.permute.xlu0 %3329
      %3331 = vrot.lane.b32.xlu0 %v2549, 24
      %v3332 = vpop.permute.xlu0 %3331
      %3333 = vrot.lane.b32.xlu0 %v2550, 24
      %v3334 = vpop.permute.xlu0 %3333
      %3335 = vrot.lane.b32.xlu0 %v2551, 24
      %v3336 = vpop.permute.xlu0 %3335
      %3337 = vrot.lane.b32.xlu0 %v2552, 24
      %v3338 = vpop.permute.xlu0 %3337
      %3339 = vrot.lane.b32.xlu0 %v2553, 24
      %v3340 = vpop.permute.xlu0 %3339
      %3341 = vrot.lane.b32.xlu0 %v2554, 24
      %v3342 = vpop.permute.xlu0 %3341
      %3343 = vrot.lane.b32.xlu0 %v2555, 24
      %v3344 = vpop.permute.xlu0 %3343
      %3345 = vrot.lane.b32.xlu0 %v2556, 24
      %v3346 = vpop.permute.xlu0 %3345
      %3347 = vrot.lane.b32.xlu0 %v2557, 24
      %v3348 = vpop.permute.xlu0 %3347
      %3349 = vrot.lane.b32.xlu0 %v2558, 24
      %v3350 = vpop.permute.xlu0 %3349
      %3351 = vrot.lane.b32.xlu0 %v2559, 24
      %v3352 = vpop.permute.xlu0 %3351
      %3353 = vrot.lane.b32.xlu0 %v2560, 24
      %v3354 = vpop.permute.xlu0 %3353
      %3355 = vrot.lane.b32.xlu0 %v2561, 24
      %v3356 = vpop.permute.xlu0 %3355
      %3357 = vrot.lane.b32.xlu0 %v2562, 24
      %v3358 = vpop.permute.xlu0 %3357
      %3359 = vrot.lane.b32.xlu0 %v2563, 24
      %v3360 = vpop.permute.xlu0 %3359
      %3361 = vrot.lane.b32.xlu0 %v2564, 24
      %v3362 = vpop.permute.xlu0 %3361
      %3363 = vrot.lane.b32.xlu0 %v2565, 24
      %v3364 = vpop.permute.xlu0 %3363
      %3365 = vrot.lane.b32.xlu0 %v2566, 24
      %v3366 = vpop.permute.xlu0 %3365
      %3431 = vrot.lane.b32.xlu0 %v2567, 28
      %v3432 = vpop.permute.xlu0 %3431
      %3433 = vrot.lane.b32.xlu0 %v2568, 28
      %v3434 = vpop.permute.xlu0 %3433
      %3435 = vrot.lane.b32.xlu0 %v2569, 28
      %v3436 = vpop.permute.xlu0 %3435
      %3437 = vrot.lane.b32.xlu0 %v2570, 28
      %v3438 = vpop.permute.xlu0 %3437
      %3439 = vrot.lane.b32.xlu0 %v2571, 28
      %v3440 = vpop.permute.xlu0 %3439
      %3441 = vrot.lane.b32.xlu0 %v2572, 28
      %v3442 = vpop.permute.xlu0 %3441
      %3443 = vrot.lane.b32.xlu0 %v2573, 28
      %v3444 = vpop.permute.xlu0 %3443
      %3445 = vrot.lane.b32.xlu0 %v2574, 28
      %v3446 = vpop.permute.xlu0 %3445
      %3447 = vrot.lane.b32.xlu0 %v2575, 28
      %v3448 = vpop.permute.xlu0 %3447
      %3449 = vrot.lane.b32.xlu0 %v2576, 28
      %v3450 = vpop.permute.xlu0 %3449
      %3451 = vrot.lane.b32.xlu0 %v2577, 28
      %v3452 = vpop.permute.xlu0 %3451
      %3453 = vrot.lane.b32.xlu0 %v2578, 28
      %v3454 = vpop.permute.xlu0 %3453
      %3455 = vrot.lane.b32.xlu0 %v2579, 28
      %v3456 = vpop.permute.xlu0 %3455
      %3457 = vrot.lane.b32.xlu0 %v2580, 28
      %v3458 = vpop.permute.xlu0 %3457
      %3459 = vrot.lane.b32.xlu0 %v2581, 28
      %v3460 = vpop.permute.xlu0 %3459
      %3461 = vrot.lane.b32.xlu0 %v2582, 28
      %v3462 = vpop.permute.xlu0 %3461
      %3463 = vrot.lane.b32.xlu0 %v2583, 28
      %v3464 = vpop.permute.xlu0 %3463
      %3465 = vrot.lane.b32.xlu0 %v2584, 28
      %v3466 = vpop.permute.xlu0 %3465
      %3467 = vrot.lane.b32.xlu0 %v2585, 28
      %v3468 = vpop.permute.xlu0 %3467
      %3469 = vrot.lane.b32.xlu0 %v2586, 28
      %v3470 = vpop.permute.xlu0 %3469
      %3471 = vrot.lane.b32.xlu0 %v2587, 28
      %v3472 = vpop.permute.xlu0 %3471
      %3473 = vrot.lane.b32.xlu0 %v2588, 28
      %v3474 = vpop.permute.xlu0 %3473
      %3475 = vrot.lane.b32.xlu0 %v2589, 28
      %v3476 = vpop.permute.xlu0 %3475
      %3477 = vrot.lane.b32.xlu0 %v2590, 28
      %v3478 = vpop.permute.xlu0 %3477
      %3479 = vrot.lane.b32.xlu0 %v2591, 28
      %v3480 = vpop.permute.xlu0 %3479
      %3481 = vrot.lane.b32.xlu0 %v2592, 28
      %v3482 = vpop.permute.xlu0 %3481
      %3483 = vrot.lane.b32.xlu0 %v2593, 28
      %v3484 = vpop.permute.xlu0 %3483
      %3485 = vrot.lane.b32.xlu0 %v2594, 28
      %v3486 = vpop.permute.xlu0 %3485
      %3487 = vrot.lane.b32.xlu0 %v2595, 28
      %v3488 = vpop.permute.xlu0 %3487
      %3489 = vrot.lane.b32.xlu0 %v2596, 28
      %v3490 = vpop.permute.xlu0 %3489
      %3491 = vrot.lane.b32.xlu0 %v2597, 28
      %v3492 = vpop.permute.xlu0 %3491
      %3493 = vrot.lane.b32.xlu0 %v2598, 28
      %v3494 = vpop.permute.xlu0 %3493
      %3559 = vrot.lane.b32.xlu0 %v2599, 32
      %v3560 = vpop.permute.xlu0 %3559
      %3561 = vrot.lane.b32.xlu0 %v2600, 32
      %v3562 = vpop.permute.xlu0 %3561
      %3563 = vrot.lane.b32.xlu0 %v2601, 32
      %v3564 = vpop.permute.xlu0 %3563
      %3565 = vrot.lane.b32.xlu0 %v2602, 32
      %v3566 = vpop.permute.xlu0 %3565
      %3567 = vrot.lane.b32.xlu0 %v2603, 32
      %v3568 = vpop.permute.xlu0 %3567
      %3569 = vrot.lane.b32.xlu0 %v2604, 32
      %v3570 = vpop.permute.xlu0 %3569
      %3571 = vrot.lane.b32.xlu0 %v2605, 32
      %v3572 = vpop.permute.xlu0 %3571
      %3573 = vrot.lane.b32.xlu0 %v2606, 32
      %v3574 = vpop.permute.xlu0 %3573
      %3575 = vrot.lane.b32.xlu0 %v2607, 32
      %v3576 = vpop.permute.xlu0 %3575
      %3577 = vrot.lane.b32.xlu0 %v2608, 32
      %v3578 = vpop.permute.xlu0 %3577
      %3579 = vrot.lane.b32.xlu0 %v2609, 32
      %v3580 = vpop.permute.xlu0 %3579
      %3581 = vrot.lane.b32.xlu0 %v2610, 32
      %v3582 = vpop.permute.xlu0 %3581
      %3583 = vrot.lane.b32.xlu0 %v2611, 32
      %v3584 = vpop.permute.xlu0 %3583
      %3585 = vrot.lane.b32.xlu0 %v2612, 32
      %v3586 = vpop.permute.xlu0 %3585
      %3587 = vrot.lane.b32.xlu0 %v2613, 32
      %v3588 = vpop.permute.xlu0 %3587
      %3589 = vrot.lane.b32.xlu0 %v2614, 32
      %v3590 = vpop.permute.xlu0 %3589
      %3591 = vrot.lane.b32.xlu0 %v2615, 32
      %v3592 = vpop.permute.xlu0 %3591
      %3593 = vrot.lane.b32.xlu0 %v2616, 32
      %v3594 = vpop.permute.xlu0 %3593
      %3595 = vrot.lane.b32.xlu0 %v2617, 32
      %v3596 = vpop.permute.xlu0 %3595
      %3597 = vrot.lane.b32.xlu0 %v2618, 32
      %v3598 = vpop.permute.xlu0 %3597
      %3599 = vrot.lane.b32.xlu0 %v2619, 32
      %v3600 = vpop.permute.xlu0 %3599
      %3601 = vrot.lane.b32.xlu0 %v2620, 32
      %v3602 = vpop.permute.xlu0 %3601
      %3603 = vrot.lane.b32.xlu0 %v2621, 32
      %v3604 = vpop.permute.xlu0 %3603
      %3605 = vrot.lane.b32.xlu0 %v2622, 32
      %v3606 = vpop.permute.xlu0 %3605
      %3607 = vrot.lane.b32.xlu0 %v2623, 32
      %v3608 = vpop.permute.xlu0 %3607
      %3609 = vrot.lane.b32.xlu0 %v2624, 32
      %v3610 = vpop.permute.xlu0 %3609
      %3611 = vrot.lane.b32.xlu0 %v2625, 32
      %v3612 = vpop.permute.xlu0 %3611
      %3613 = vrot.lane.b32.xlu0 %v2626, 32
      %v3614 = vpop.permute.xlu0 %3613
      %3615 = vrot.lane.b32.xlu0 %v2627, 32
      %v3616 = vpop.permute.xlu0 %3615
      %3617 = vrot.lane.b32.xlu0 %v2628, 32
      %v3618 = vpop.permute.xlu0 %3617
      %3619 = vrot.lane.b32.xlu0 %v2629, 32
      %v3620 = vpop.permute.xlu0 %3619
      %3621 = vrot.lane.b32.xlu0 %v2630, 32
      %v3622 = vpop.permute.xlu0 %3621
      %v3655 = vsel %vm1539, %v2342, %v2664
      %v3656 = vsel %vm1539, %v2343, %v2666
      %v3657 = vsel %vm1539, %v2344, %v2668
      %v3658 = vsel %vm1539, %v2345, %v2670
      %v3659 = vsel %vm1539, %v2346, %v2672
      %v3660 = vsel %vm1539, %v2347, %v2674
      %v3661 = vsel %vm1539, %v2348, %v2676
      %v3662 = vsel %vm1539, %v2349, %v2678
      %v3663 = vsel %vm1539, %v2350, %v2680
      %v3664 = vsel %vm1539, %v2351, %v2682
      %v3665 = vsel %vm1539, %v2352, %v2684
      %v3666 = vsel %vm1539, %v2353, %v2686
      %v3667 = vsel %vm1539, %v2354, %v2688
      %v3668 = vsel %vm1539, %v2355, %v2690
      %v3669 = vsel %vm1539, %v2356, %v2692
      %v3670 = vsel %vm1539, %v2357, %v2694
      %v3671 = vsel %vm1539, %v2358, %v2696
      %v3672 = vsel %vm1539, %v2359, %v2698
      %v3673 = vsel %vm1539, %v2360, %v2700
      %v3674 = vsel %vm1539, %v2361, %v2702
      %v3675 = vsel %vm1539, %v2362, %v2704
      %v3676 = vsel %vm1539, %v2363, %v2706
      %v3677 = vsel %vm1539, %v2364, %v2708
      %v3678 = vsel %vm1539, %v2365, %v2710
      %v3679 = vsel %vm1539, %v2366, %v2712
      %v3680 = vsel %vm1539, %v2367, %v2714
      %v3681 = vsel %vm1539, %v2368, %v2716
      %v3682 = vsel %vm1539, %v2369, %v2718
      %v3683 = vsel %vm1539, %v2370, %v2720
      %v3684 = vsel %vm1539, %v2371, %v2722
      %v3685 = vsel %vm1539, %v2372, %v2724
      %v3686 = vsel %vm1539, %v2373, %v2726
      %v3687 = vsel %vm1572, %v3655, %v2792
      %v3688 = vsel %vm1572, %v3656, %v2794
      %v3689 = vsel %vm1572, %v3657, %v2796
      %v3690 = vsel %vm1572, %v3658, %v2798
      %v3691 = vsel %vm1572, %v3659, %v2800
      %v3692 = vsel %vm1572, %v3660, %v2802
      %v3693 = vsel %vm1572, %v3661, %v2804
      %v3694 = vsel %vm1572, %v3662, %v2806
      %v3695 = vsel %vm1572, %v3663, %v2808
      %v3696 = vsel %vm1572, %v3664, %v2810
      %v3697 = vsel %vm1572, %v3665, %v2812
      %v3698 = vsel %vm1572, %v3666, %v2814
      %v3699 = vsel %vm1572, %v3667, %v2816
      %v3700 = vsel %vm1572, %v3668, %v2818
      %v3701 = vsel %vm1572, %v3669, %v2820
      %v3702 = vsel %vm1572, %v3670, %v2822
      %v3703 = vsel %vm1572, %v3671, %v2824
      %v3704 = vsel %vm1572, %v3672, %v2826
      %v3705 = vsel %vm1572, %v3673, %v2828
      %v3706 = vsel %vm1572, %v3674, %v2830
      %v3707 = vsel %vm1572, %v3675, %v2832
      %v3708 = vsel %vm1572, %v3676, %v2834
      %v3709 = vsel %vm1572, %v3677, %v2836
      %v3710 = vsel %vm1572, %v3678, %v2838
      %v3711 = vsel %vm1572, %v3679, %v2840
      %v3712 = vsel %vm1572, %v3680, %v2842
      %v3713 = vsel %vm1572, %v3681, %v2844
      %v3714 = vsel %vm1572, %v3682, %v2846
      %v3715 = vsel %vm1572, %v3683, %v2848
      %v3716 = vsel %vm1572, %v3684, %v2850
      %v3717 = vsel %vm1572, %v3685, %v2852
      %v3718 = vsel %vm1572, %v3686, %v2854
      %v3719 = vsel %vm1605, %v3687, %v2920
      %v3720 = vsel %vm1605, %v3688, %v2922
      %v3721 = vsel %vm1605, %v3689, %v2924
      %v3722 = vsel %vm1605, %v3690, %v2926
      %v3723 = vsel %vm1605, %v3691, %v2928
      %v3724 = vsel %vm1605, %v3692, %v2930
      %v3725 = vsel %vm1605, %v3693, %v2932
      %v3726 = vsel %vm1605, %v3694, %v2934
      %v3727 = vsel %vm1605, %v3695, %v2936
      %v3728 = vsel %vm1605, %v3696, %v2938
      %v3729 = vsel %vm1605, %v3697, %v2940
      %v3730 = vsel %vm1605, %v3698, %v2942
      %v3731 = vsel %vm1605, %v3699, %v2944
      %v3732 = vsel %vm1605, %v3700, %v2946
      %v3733 = vsel %vm1605, %v3701, %v2948
      %v3734 = vsel %vm1605, %v3702, %v2950
      %v3735 = vsel %vm1605, %v3703, %v2952
      %v3736 = vsel %vm1605, %v3704, %v2954
      %v3737 = vsel %vm1605, %v3705, %v2956
      %v3738 = vsel %vm1605, %v3706, %v2958
      %v3739 = vsel %vm1605, %v3707, %v2960
      %v3740 = vsel %vm1605, %v3708, %v2962
      %v3741 = vsel %vm1605, %v3709, %v2964
      %v3742 = vsel %vm1605, %v3710, %v2966
      %v3743 = vsel %vm1605, %v3711, %v2968
      %v3744 = vsel %vm1605, %v3712, %v2970
      %v3745 = vsel %vm1605, %v3713, %v2972
      %v3746 = vsel %vm1605, %v3714, %v2974
      %v3747 = vsel %vm1605, %v3715, %v2976
      %v3748 = vsel %vm1605, %v3716, %v2978
      %v3749 = vsel %vm1605, %v3717, %v2980
      %v3750 = vsel %vm1605, %v3718, %v2982
      %v3751 = vsel %vm1638, %v3719, %v3048
      %v3752 = vsel %vm1638, %v3720, %v3050
      %v3753 = vsel %vm1638, %v3721, %v3052
      %v3754 = vsel %vm1638, %v3722, %v3054
      %v3755 = vsel %vm1638, %v3723, %v3056
      %v3756 = vsel %vm1638, %v3724, %v3058
      %v3757 = vsel %vm1638, %v3725, %v3060
      %v3758 = vsel %vm1638, %v3726, %v3062
      %v3759 = vsel %vm1638, %v3727, %v3064
      %v3760 = vsel %vm1638, %v3728, %v3066
      %v3761 = vsel %vm1638, %v3729, %v3068
      %v3762 = vsel %vm1638, %v3730, %v3070
      %v3763 = vsel %vm1638, %v3731, %v3072
      %v3764 = vsel %vm1638, %v3732, %v3074
      %v3765 = vsel %vm1638, %v3733, %v3076
      %v3766 = vsel %vm1638, %v3734, %v3078
      %v3767 = vsel %vm1638, %v3735, %v3080
      %v3768 = vsel %vm1638, %v3736, %v3082
      %v3769 = vsel %vm1638, %v3737, %v3084
      %v3770 = vsel %vm1638, %v3738, %v3086
      %v3771 = vsel %vm1638, %v3739, %v3088
      %v3772 = vsel %vm1638, %v3740, %v3090
      %v3773 = vsel %vm1638, %v3741, %v3092
      %v3774 = vsel %vm1638, %v3742, %v3094
      %v3775 = vsel %vm1638, %v3743, %v3096
      %v3776 = vsel %vm1638, %v3744, %v3098
      %v3777 = vsel %vm1638, %v3745, %v3100
      %v3778 = vsel %vm1638, %v3746, %v3102
      %v3779 = vsel %vm1638, %v3747, %v3104
      %v3780 = vsel %vm1638, %v3748, %v3106
      %v3781 = vsel %vm1638, %v3749, %v3108
      %v3782 = vsel %vm1638, %v3750, %v3110
      %v3783 = vsel %vm1671, %v3751, %v3176
      %v3784 = vsel %vm1671, %v3752, %v3178
      %v3785 = vsel %vm1671, %v3753, %v3180
      %v3786 = vsel %vm1671, %v3754, %v3182
      %v3787 = vsel %vm1671, %v3755, %v3184
      %v3788 = vsel %vm1671, %v3756, %v3186
      %v3789 = vsel %vm1671, %v3757, %v3188
      %v3790 = vsel %vm1671, %v3758, %v3190
      %v3791 = vsel %vm1671, %v3759, %v3192
      %v3792 = vsel %vm1671, %v3760, %v3194
      %v3793 = vsel %vm1671, %v3761, %v3196
      %v3794 = vsel %vm1671, %v3762, %v3198
      %v3795 = vsel %vm1671, %v3763, %v3200
      %v3796 = vsel %vm1671, %v3764, %v3202
      %v3797 = vsel %vm1671, %v3765, %v3204
      %v3798 = vsel %vm1671, %v3766, %v3206
      %v3799 = vsel %vm1671, %v3767, %v3208
      %v3800 = vsel %vm1671, %v3768, %v3210
      %v3801 = vsel %vm1671, %v3769, %v3212
      %v3802 = vsel %vm1671, %v3770, %v3214
      %v3803 = vsel %vm1671, %v3771, %v3216
      %v3804 = vsel %vm1671, %v3772, %v3218
      %v3805 = vsel %vm1671, %v3773, %v3220
      %v3806 = vsel %vm1671, %v3774, %v3222
      %v3807 = vsel %vm1671, %v3775, %v3224
      %v3808 = vsel %vm1671, %v3776, %v3226
      %v3809 = vsel %vm1671, %v3777, %v3228
      %v3810 = vsel %vm1671, %v3778, %v3230
      %v3811 = vsel %vm1671, %v3779, %v3232
      %v3812 = vsel %vm1671, %v3780, %v3234
      %v3813 = vsel %vm1671, %v3781, %v3236
      %v3814 = vsel %vm1671, %v3782, %v3238
      %v3815 = vsel %vm1704, %v3783, %v3304
      %v3816 = vsel %vm1704, %v3784, %v3306
      %v3817 = vsel %vm1704, %v3785, %v3308
      %v3818 = vsel %vm1704, %v3786, %v3310
      %v3819 = vsel %vm1704, %v3787, %v3312
      %v3820 = vsel %vm1704, %v3788, %v3314
      %v3821 = vsel %vm1704, %v3789, %v3316
      %v3822 = vsel %vm1704, %v3790, %v3318
      %v3823 = vsel %vm1704, %v3791, %v3320
      %v3824 = vsel %vm1704, %v3792, %v3322
      %v3825 = vsel %vm1704, %v3793, %v3324
      %v3826 = vsel %vm1704, %v3794, %v3326
      %v3827 = vsel %vm1704, %v3795, %v3328
      %v3828 = vsel %vm1704, %v3796, %v3330
      %v3829 = vsel %vm1704, %v3797, %v3332
      %v3830 = vsel %vm1704, %v3798, %v3334
      %v3831 = vsel %vm1704, %v3799, %v3336
      %v3832 = vsel %vm1704, %v3800, %v3338
      %v3833 = vsel %vm1704, %v3801, %v3340
      %v3834 = vsel %vm1704, %v3802, %v3342
      %v3835 = vsel %vm1704, %v3803, %v3344
      %v3836 = vsel %vm1704, %v3804, %v3346
      %v3837 = vsel %vm1704, %v3805, %v3348
      %v3838 = vsel %vm1704, %v3806, %v3350
      %v3839 = vsel %vm1704, %v3807, %v3352
      %v3840 = vsel %vm1704, %v3808, %v3354
      %v3841 = vsel %vm1704, %v3809, %v3356
      %v3842 = vsel %vm1704, %v3810, %v3358
      %v3843 = vsel %vm1704, %v3811, %v3360
      %v3844 = vsel %vm1704, %v3812, %v3362
      %v3845 = vsel %vm1704, %v3813, %v3364
      %v3846 = vsel %vm1704, %v3814, %v3366
      %v3847 = vsel %vm1737, %v3815, %v3432
      %v3848 = vsel %vm1737, %v3816, %v3434
      %v3849 = vsel %vm1737, %v3817, %v3436
      %v3850 = vsel %vm1737, %v3818, %v3438
      %v3851 = vsel %vm1737, %v3819, %v3440
      %v3852 = vsel %vm1737, %v3820, %v3442
      %v3853 = vsel %vm1737, %v3821, %v3444
      %v3854 = vsel %vm1737, %v3822, %v3446
      %v3855 = vsel %vm1737, %v3823, %v3448
      %v3856 = vsel %vm1737, %v3824, %v3450
      %v3857 = vsel %vm1737, %v3825, %v3452
      %v3858 = vsel %vm1737, %v3826, %v3454
      %v3859 = vsel %vm1737, %v3827, %v3456
      %v3860 = vsel %vm1737, %v3828, %v3458
      %v3861 = vsel %vm1737, %v3829, %v3460
      %v3862 = vsel %vm1737, %v3830, %v3462
      %v3863 = vsel %vm1737, %v3831, %v3464
      %v3864 = vsel %vm1737, %v3832, %v3466
      %v3865 = vsel %vm1737, %v3833, %v3468
      %v3866 = vsel %vm1737, %v3834, %v3470
      %v3867 = vsel %vm1737, %v3835, %v3472
      %v3868 = vsel %vm1737, %v3836, %v3474
      %v3869 = vsel %vm1737, %v3837, %v3476
      %v3870 = vsel %vm1737, %v3838, %v3478
      %v3871 = vsel %vm1737, %v3839, %v3480
      %v3872 = vsel %vm1737, %v3840, %v3482
      %v3873 = vsel %vm1737, %v3841, %v3484
      %v3874 = vsel %vm1737, %v3842, %v3486
      %v3875 = vsel %vm1737, %v3843, %v3488
      %v3876 = vsel %vm1737, %v3844, %v3490
      %v3877 = vsel %vm1737, %v3845, %v3492
      %v3878 = vsel %vm1737, %v3846, %v3494
      %v3879 = vsel %vm1770, %v3847, %v3560
      %v3880 = vsel %vm1770, %v3848, %v3562
      %v3881 = vsel %vm1770, %v3849, %v3564
      %v3882 = vsel %vm1770, %v3850, %v3566
      %v3883 = vsel %vm1770, %v3851, %v3568
      %v3884 = vsel %vm1770, %v3852, %v3570
      %v3885 = vsel %vm1770, %v3853, %v3572
      %v3886 = vsel %vm1770, %v3854, %v3574
      %v3887 = vsel %vm1770, %v3855, %v3576
      %v3888 = vsel %vm1770, %v3856, %v3578
      %v3889 = vsel %vm1770, %v3857, %v3580
      %v3890 = vsel %vm1770, %v3858, %v3582
      %v3891 = vsel %vm1770, %v3859, %v3584
      %v3892 = vsel %vm1770, %v3860, %v3586
      %v3893 = vsel %vm1770, %v3861, %v3588
      %v3894 = vsel %vm1770, %v3862, %v3590
      %v3895 = vsel %vm1770, %v3863, %v3592
      %v3896 = vsel %vm1770, %v3864, %v3594
      %v3897 = vsel %vm1770, %v3865, %v3596
      %v3898 = vsel %vm1770, %v3866, %v3598
      %v3899 = vsel %vm1770, %v3867, %v3600
      %v3900 = vsel %vm1770, %v3868, %v3602
      %v3901 = vsel %vm1770, %v3869, %v3604
      %v3902 = vsel %vm1770, %v3870, %v3606
      %v3903 = vsel %vm1770, %v3871, %v3608
      %v3904 = vsel %vm1770, %v3872, %v3610
      %v3905 = vsel %vm1770, %v3873, %v3612
      %v3906 = vsel %vm1770, %v3874, %v3614
      %v3907 = vsel %vm1770, %v3875, %v3616
      %v3908 = vsel %vm1770, %v3876, %v3618
      %v3909 = vsel %vm1770, %v3877, %v3620
      %v3910 = vsel %vm1770, %v3878, %v3622
      %v3911 = vld [vmem:[%s3] sm:$0xff]
      %v3912 = vld [vmem:[%s3 + $0x8] sm:$0xff]
      %v3913 = vld [vmem:[%s3 + $0x10] sm:$0xff]
      %v3914 = vld [vmem:[%s3 + $0x18] sm:$0xff]
      %v3915 = vld [vmem:[%s3 + $0x20] sm:$0xf]
      %v3916 = vld [vmem:[%s4] sm:$0x1]
      %v3918 = vlaneseq
      %v3919 = vshrl.u32 %v3918, 7
      %v3920 = vsub.s32 0, %v3919
      %v3921 = vrot.slane %v3916, %v3920
      %v3924 = vsel %vm1815, %v3879, 0
      %v3927 = vsel %vm1815, %v3880, 0
      %v3930 = vsel %vm1815, %v3881, 0
      %v3933 = vsel %vm1815, %v3882, 0
      %v3936 = vsel %vm1815, %v3883, 0
      %v3939 = vsel %vm1815, %v3884, 0
      %v3942 = vsel %vm1815, %v3885, 0
      %v3945 = vsel %vm1815, %v3886, 0
      %v3948 = vsel %vm1815, %v3887, 0
      %v3951 = vsel %vm1815, %v3888, 0
      %v3954 = vsel %vm1815, %v3889, 0
      %v3957 = vsel %vm1815, %v3890, 0
      %v3960 = vsel %vm1815, %v3891, 0
      %v3963 = vsel %vm1815, %v3892, 0
      %v3966 = vsel %vm1815, %v3893, 0
      %v3969 = vsel %vm1815, %v3894, 0
      %v3972 = vsel %vm1815, %v3895, 0
      %v3975 = vsel %vm1815, %v3896, 0
      %v3978 = vsel %vm1815, %v3897, 0
      %v3981 = vsel %vm1815, %v3898, 0
      %v3984 = vsel %vm1815, %v3899, 0
      %v3987 = vsel %vm1815, %v3900, 0
      %v3990 = vsel %vm1815, %v3901, 0
      %v3993 = vsel %vm1815, %v3902, 0
      %v3996 = vsel %vm1815, %v3903, 0
      %v3999 = vsel %vm1815, %v3904, 0
      %v4002 = vsel %vm1815, %v3905, 0
      %v4005 = vsel %vm1815, %v3906, 0
      %v4008 = vsel %vm1815, %v3907, 0
      %v4011 = vsel %vm1815, %v3908, 0
      %v4014 = vsel %vm1815, %v3909, 0
      %v4017 = vsel %vm1815, %v3910, 0
      %v4020 = vsel %vm1912, %v3915, 0
      %4022 = vmatprep.subr.mxu0 0.0
      %4023 = vmatpush1.msra.mxu0 %v3911
      %4024 = vmatprep.subr.mxu0 0.0
      %4025 = vmatpush1.msra.mxu0 %v3912
      %4026 = vmatprep.subr.mxu0 0.0
      %4027 = vmatpush1.msra.mxu0 %v3913
      %4028 = vmatprep.subr.mxu0 0.0
      %4029 = vmatpush1.msra.mxu0 %v3914
      %4030 = vmatprep.subr.mxu0 0.0
      %4031 = vmatpush1.msra.mxu0 %v4020
      %4032 = vmatprep.subr.mxu0 0.0
      %4033 = vmatpush1.msra.mxu0 0.0
      %4034 = vmatprep.subr.mxu0 0.0
      %4035 = vmatpush1.msra.mxu0 0.0
      %4036 = vmatprep.subr.mxu0 0.0
      %4037 = vmatpush1.msra.mxu0 0.0
      %4038 = vmatprep.subr.mxu0 0.0
      %4039 = vmatpush1.msra.mxu0 0.0
      %4040 = vmatprep.subr.mxu0 0.0
      %4041 = vmatpush1.msra.mxu0 0.0
      %4042 = vmatprep.subr.mxu0 0.0
      %4043 = vmatpush1.msra.mxu0 0.0
      %4044 = vmatprep.subr.mxu0 0.0
      %4045 = vmatpush1.msra.mxu0 0.0
      %4046 = vmatprep.subr.mxu0 0.0
      %4047 = vmatpush1.msra.mxu0 0.0
      %4048 = vmatprep.subr.mxu0 0.0
      %4049 = vmatpush1.msra.mxu0 0.0
      %4050 = vmatprep.subr.mxu0 0.0
      %4051 = vmatpush1.msra.mxu0 0.0
      %4052 = vmatprep.subr.mxu0 0.0
      %4053 = vmatpush1.msra.mxu0 0.0
      %4054 = vmatprep.subr.mxu0 0.0
      %4055 = vmatpush1.msra.mxu0 0.0
      %4056 = vmatprep.subr.mxu0 0.0
      %4057 = vmatpush1.msra.mxu0 0.0
      %4058 = vmatprep.subr.mxu0 0.0
      %4059 = vmatpush1.msra.mxu0 0.0
      %4060 = vmatprep.subr.mxu0 0.0
      %4061 = vmatpush1.msra.mxu0 0.0
      %4062 = vmatprep.subr.mxu0 0.0
      %4063 = vmatpush1.msra.mxu0 0.0
      %4064 = vmatprep.subr.mxu0 0.0
      %4065 = vmatpush1.msra.mxu0 0.0
      %4066 = vmatprep.subr.mxu0 0.0
      %4067 = vmatpush1.msra.mxu0 0.0
      %4068 = vmatprep.subr.mxu0 0.0
      %4069 = vmatpush1.msra.mxu0 0.0
      %4070 = vmatprep.subr.mxu0 0.0
      %4071 = vmatpush1.msra.mxu0 0.0
      %4072 = vmatprep.subr.mxu0 0.0
      %4073 = vmatpush1.msra.mxu0 0.0
      %4074 = vmatprep.subr.mxu0 0.0
      %4075 = vmatpush1.msra.mxu0 0.0
      %4076 = vmatprep.subr.mxu0 0.0
      %4077 = vmatpush1.msra.mxu0 0.0
      %4078 = vmatprep.subr.mxu0 0.0
      %4079 = vmatpush1.msra.mxu0 0.0
      %4080 = vmatprep.subr.mxu0 0.0
      %4081 = vmatpush1.msra.mxu0 0.0
      %4082 = vmatprep.subr.mxu0 0.0
      %4083 = vmatpush1.msra.mxu0 0.0
      %4084 = vmatprep.subr.mxu0 0.0
      %4085 = vmatpush1.msra.mxu0 0.0
      %4086 = vmatprep.mubr.f32.mxu0 0.0
      %4087 = vmatmul.mubr.f32.gmra.mrb[0].mxu0 %v3924
      %v4088 = vpop.f32.mrb[0].mxu0
      %v4089 = vadd.f32 %v3921, %v4088
      %v4090 = vpop.f32.mrb[0].mxu0
      %4091 = vmatprep.mubr.f32.mxu0 0.0
      %4092 = vmatmul.mubr.f32.gmra.mrb[0].mxu0 %v3927
      %v4093 = vpop.f32.mrb[0].mxu0
      %v4094 = vadd.f32 %v3921, %v4093
      %v4095 = vpop.f32.mrb[0].mxu0
      %4096 = vmatprep.mubr.f32.mxu0 0.0
      %4097 = vmatmul.mubr.f32.gmra.mrb[0].mxu0 %v3930
      %v4098 = vpop.f32.mrb[0].mxu0
      %v4099 = vadd.f32 %v3921, %v4098
      %v4100 = vpop.f32.mrb[0].mxu0
      %4101 = vmatprep.mubr.f32.mxu0 0.0
      %4102 = vmatmul.mubr.f32.gmra.mrb[0].mxu0 %v3933
      %v4103 = vpop.f32.mrb[0].mxu0
      %v4104 = vadd.f32 %v3921, %v4103
      %v4105 = vpop.f32.mrb[0].mxu0
      %4106 = vmatprep.mubr.f32.mxu0 0.0
      %4107 = vmatmul.mubr.f32.gmra.mrb[0].mxu0 %v3936
      %v4108 = vpop.f32.mrb[0].mxu0
      %v4109 = vadd.f32 %v3921, %v4108
      %v4110 = vpop.f32.mrb[0].mxu0
      %4111 = vmatprep.mubr.f32.mxu0 0.0
      %4112 = vmatmul.mubr.f32.gmra.mrb[0].mxu0 %v3939
      %v4113 = vpop.f32.mrb[0].mxu0
      %v4114 = vadd.f32 %v3921, %v4113
      %v4115 = vpop.f32.mrb[0].mxu0
      %4116 = vmatprep.mubr.f32.mxu0 0.0
      %4117 = vmatmul.mubr.f32.gmra.mrb[0].mxu0 %v3942
      %v4118 = vpop.f32.mrb[0].mxu0
      %v4119 = vadd.f32 %v3921, %v4118
      %v4120 = vpop.f32.mrb[0].mxu0
      %4121 = vmatprep.mubr.f32.mxu0 0.0
      %4122 = vmatmul.mubr.f32.gmra.mrb[0].mxu0 %v3945
      %v4123 = vpop.f32.mrb[0].mxu0
      %v4124 = vadd.f32 %v3921, %v4123
      %v4125 = vpop.f32.mrb[0].mxu0
      %4126 = vmatprep.mubr.f32.mxu0 0.0
      %4127 = vmatmul.mubr.f32.gmra.mrb[0].mxu0 %v3948
      %v4128 = vpop.f32.mrb[0].mxu0
      %v4129 = vadd.f32 %v3921, %v4128
      %v4130 = vpop.f32.mrb[0].mxu0
      %4131 = vmatprep.mubr.f32.mxu0 0.0
      %4132 = vmatmul.mubr.f32.gmra.mrb[0].mxu0 %v3951
      %v4133 = vpop.f32.mrb[0].mxu0
      %v4134 = vadd.f32 %v3921, %v4133
      %v4135 = vpop.f32.mrb[0].mxu0
      %4136 = vmatprep.mubr.f32.mxu0 0.0
      %4137 = vmatmul.mubr.f32.gmra.mrb[0].mxu0 %v3954
      %v4138 = vpop.f32.mrb[0].mxu0
      %v4139 = vadd.f32 %v3921, %v4138
      %v4140 = vpop.f32.mrb[0].mxu0
      %4141 = vmatprep.mubr.f32.mxu0 0.0
      %4142 = vmatmul.mubr.f32.gmra.mrb[0].mxu0 %v3957
      %v4143 = vpop.f32.mrb[0].mxu0
      %v4144 = vadd.f32 %v3921, %v4143
      %v4145 = vpop.f32.mrb[0].mxu0
      %4146 = vmatprep.mubr.f32.mxu0 0.0
      %4147 = vmatmul.mubr.f32.gmra.mrb[0].mxu0 %v3960
      %v4148 = vpop.f32.mrb[0].mxu0
      %v4149 = vadd.f32 %v3921, %v4148
      %v4150 = vpop.f32.mrb[0].mxu0
      %4151 = vmatprep.mubr.f32.mxu0 0.0
      %4152 = vmatmul.mubr.f32.gmra.mrb[0].mxu0 %v3963
      %v4153 = vpop.f32.mrb[0].mxu0
      %v4154 = vadd.f32 %v3921, %v4153
      %v4155 = vpop.f32.mrb[0].mxu0
      %4156 = vmatprep.mubr.f32.mxu0 0.0
      %4157 = vmatmul.mubr.f32.gmra.mrb[0].mxu0 %v3966
      %v4158 = vpop.f32.mrb[0].mxu0
      %v4159 = vadd.f32 %v3921, %v4158
      %v4160 = vpop.f32.mrb[0].mxu0
      %4161 = vmatprep.mubr.f32.mxu0 0.0
      %4162 = vmatmul.mubr.f32.gmra.mrb[0].mxu0 %v3969
      %v4163 = vpop.f32.mrb[0].mxu0
      %v4164 = vadd.f32 %v3921, %v4163
      %v4165 = vpop.f32.mrb[0].mxu0
      %4166 = vmatprep.mubr.f32.mxu0 0.0
      %4167 = vmatmul.mubr.f32.gmra.mrb[0].mxu0 %v3972
      %v4168 = vpop.f32.mrb[0].mxu0
      %v4169 = vadd.f32 %v3921, %v4168
      %v4170 = vpop.f32.mrb[0].mxu0
      %4171 = vmatprep.mubr.f32.mxu0 0.0
      %4172 = vmatmul.mubr.f32.gmra.mrb[0].mxu0 %v3975
      %v4173 = vpop.f32.mrb[0].mxu0
      %v4174 = vadd.f32 %v3921, %v4173
      %v4175 = vpop.f32.mrb[0].mxu0
      %4176 = vmatprep.mubr.f32.mxu0 0.0
      %4177 = vmatmul.mubr.f32.gmra.mrb[0].mxu0 %v3978
      %v4178 = vpop.f32.mrb[0].mxu0
      %v4179 = vadd.f32 %v3921, %v4178
      %v4180 = vpop.f32.mrb[0].mxu0
      %4181 = vmatprep.mubr.f32.mxu0 0.0
      %4182 = vmatmul.mubr.f32.gmra.mrb[0].mxu0 %v3981
      %v4183 = vpop.f32.mrb[0].mxu0
      %v4184 = vadd.f32 %v3921, %v4183
      %v4185 = vpop.f32.mrb[0].mxu0
      %4186 = vmatprep.mubr.f32.mxu0 0.0
      %4187 = vmatmul.mubr.f32.gmra.mrb[0].mxu0 %v3984
      %v4188 = vpop.f32.mrb[0].mxu0
      %v4189 = vadd.f32 %v3921, %v4188
      %v4190 = vpop.f32.mrb[0].mxu0
      %4191 = vmatprep.mubr.f32.mxu0 0.0
      %4192 = vmatmul.mubr.f32.gmra.mrb[0].mxu0 %v3987
      %v4193 = vpop.f32.mrb[0].mxu0
      %v4194 = vadd.f32 %v3921, %v4193
      %v4195 = vpop.f32.mrb[0].mxu0
      %4196 = vmatprep.mubr.f32.mxu0 0.0
      %4197 = vmatmul.mubr.f32.gmra.mrb[0].mxu0 %v3990
      %v4198 = vpop.f32.mrb[0].mxu0
      %v4199 = vadd.f32 %v3921, %v4198
      %v4200 = vpop.f32.mrb[0].mxu0
      %4201 = vmatprep.mubr.f32.mxu0 0.0
      %4202 = vmatmul.mubr.f32.gmra.mrb[0].mxu0 %v3993
      %v4203 = vpop.f32.mrb[0].mxu0
      %v4204 = vadd.f32 %v3921, %v4203
      %v4205 = vpop.f32.mrb[0].mxu0
      %4206 = vmatprep.mubr.f32.mxu0 0.0
      %4207 = vmatmul.mubr.f32.gmra.mrb[0].mxu0 %v3996
      %v4208 = vpop.f32.mrb[0].mxu0
      %v4209 = vadd.f32 %v3921, %v4208
      %v4210 = vpop.f32.mrb[0].mxu0
      %4211 = vmatprep.mubr.f32.mxu0 0.0
      %4212 = vmatmul.mubr.f32.gmra.mrb[0].mxu0 %v3999
      %v4213 = vpop.f32.mrb[0].mxu0
      %v4214 = vadd.f32 %v3921, %v4213
      %v4215 = vpop.f32.mrb[0].mxu0
      %4216 = vmatprep.mubr.f32.mxu0 0.0
      %4217 = vmatmul.mubr.f32.gmra.mrb[0].mxu0 %v4002
      %v4218 = vpop.f32.mrb[0].mxu0
      %v4219 = vadd.f32 %v3921, %v4218
      %v4220 = vpop.f32.mrb[0].mxu0
      %4221 = vmatprep.mubr.f32.mxu0 0.0
      %4222 = vmatmul.mubr.f32.gmra.mrb[0].mxu0 %v4005
      %v4223 = vpop.f32.mrb[0].mxu0
      %v4224 = vadd.f32 %v3921, %v4223
      %v4225 = vpop.f32.mrb[0].mxu0
      %4226 = vmatprep.mubr.f32.mxu0 0.0
      %4227 = vmatmul.mubr.f32.gmra.mrb[0].mxu0 %v4008
      %v4228 = vpop.f32.mrb[0].mxu0
      %v4229 = vadd.f32 %v3921, %v4228
      %v4230 = vpop.f32.mrb[0].mxu0
      %4231 = vmatprep.mubr.f32.mxu0 0.0
      %4232 = vmatmul.mubr.f32.gmra.mrb[0].mxu0 %v4011
      %v4233 = vpop.f32.mrb[0].mxu0
      %v4234 = vadd.f32 %v3921, %v4233
      %v4235 = vpop.f32.mrb[0].mxu0
      %4236 = vmatprep.mubr.f32.mxu0 0.0
      %4237 = vmatmul.mubr.f32.gmra.mrb[0].mxu0 %v4014
      %v4238 = vpop.f32.mrb[0].mxu0
      %v4239 = vadd.f32 %v3921, %v4238
      %v4240 = vpop.f32.mrb[0].mxu0
      %4241 = vmatprep.mubr.f32.mxu0 0.0
      %4242 = vmatmul.mubr.f32.gmra.mrb[0].mxu0 %v4017
      %v4243 = vpop.f32.mrb[0].mxu0
      %v4244 = vadd.f32 %v3921, %v4243
      %v4245 = vpop.f32.mrb[0].mxu0
      %4246 = vdwg.mxu0
      %vm4247 = vcmp.ge.f32.partialorder %v4089, 0.0
      %vm4248 = vcmp.ge.f32.partialorder %v4094, 0.0
      %vm4249 = vcmp.ge.f32.partialorder %v4099, 0.0
      %vm4250 = vcmp.ge.f32.partialorder %v4104, 0.0
      %vm4251 = vcmp.ge.f32.partialorder %v4109, 0.0
      %vm4252 = vcmp.ge.f32.partialorder %v4114, 0.0
      %vm4253 = vcmp.ge.f32.partialorder %v4119, 0.0
      %vm4254 = vcmp.ge.f32.partialorder %v4124, 0.0
      %vm4255 = vcmp.ge.f32.partialorder %v4129, 0.0
      %vm4256 = vcmp.ge.f32.partialorder %v4134, 0.0
      %vm4257 = vcmp.ge.f32.partialorder %v4139, 0.0
      %vm4258 = vcmp.ge.f32.partialorder %v4144, 0.0
      %vm4259 = vcmp.ge.f32.partialorder %v4149, 0.0
      %vm4260 = vcmp.ge.f32.partialorder %v4154, 0.0
      %vm4261 = vcmp.ge.f32.partialorder %v4159, 0.0
      %vm4262 = vcmp.ge.f32.partialorder %v4164, 0.0
      %vm4263 = vcmp.ge.f32.partialorder %v4169, 0.0
      %vm4264 = vcmp.ge.f32.partialorder %v4174, 0.0
      %vm4265 = vcmp.ge.f32.partialorder %v4179, 0.0
      %vm4266 = vcmp.ge.f32.partialorder %v4184, 0.0
      %vm4267 = vcmp.ge.f32.partialorder %v4189, 0.0
      %vm4268 = vcmp.ge.f32.partialorder %v4194, 0.0
      %vm4269 = vcmp.ge.f32.partialorder %v4199, 0.0
      %vm4270 = vcmp.ge.f32.partialorder %v4204, 0.0
      %vm4271 = vcmp.ge.f32.partialorder %v4209, 0.0
      %vm4272 = vcmp.ge.f32.partialorder %v4214, 0.0
      %vm4273 = vcmp.ge.f32.partialorder %v4219, 0.0
      %vm4274 = vcmp.ge.f32.partialorder %v4224, 0.0
      %vm4275 = vcmp.ge.f32.partialorder %v4229, 0.0
      %vm4276 = vcmp.ge.f32.partialorder %v4234, 0.0
      %vm4277 = vcmp.ge.f32.partialorder %v4239, 0.0
      %vm4278 = vcmp.ge.f32.partialorder %v4244, 0.0
      %v4279 = vmul.f32 %v4089, 0.2
      %v4280 = vmul.f32 %v4094, 0.2
      %v4281 = vmul.f32 %v4099, 0.2
      %v4282 = vmul.f32 %v4104, 0.2
      %v4283 = vmul.f32 %v4109, 0.2
      %v4284 = vmul.f32 %v4114, 0.2
      %v4285 = vmul.f32 %v4119, 0.2
      %v4286 = vmul.f32 %v4124, 0.2
      %v4287 = vmul.f32 %v4129, 0.2
      %v4288 = vmul.f32 %v4134, 0.2
      %v4289 = vmul.f32 %v4139, 0.2
      %v4290 = vmul.f32 %v4144, 0.2
      %v4291 = vmul.f32 %v4149, 0.2
      %v4292 = vmul.f32 %v4154, 0.2
      %v4293 = vmul.f32 %v4159, 0.2
      %v4294 = vmul.f32 %v4164, 0.2
      %v4295 = vmul.f32 %v4169, 0.2
      %v4296 = vmul.f32 %v4174, 0.2
      %v4297 = vmul.f32 %v4179, 0.2
      %v4298 = vmul.f32 %v4184, 0.2
      %v4299 = vmul.f32 %v4189, 0.2
      %v4300 = vmul.f32 %v4194, 0.2
      %v4301 = vmul.f32 %v4199, 0.2
      %v4302 = vmul.f32 %v4204, 0.2
      %v4303 = vmul.f32 %v4209, 0.2
      %v4304 = vmul.f32 %v4214, 0.2
      %v4305 = vmul.f32 %v4219, 0.2
      %v4306 = vmul.f32 %v4224, 0.2
      %v4307 = vmul.f32 %v4229, 0.2
      %v4308 = vmul.f32 %v4234, 0.2
      %v4309 = vmul.f32 %v4239, 0.2
      %v4310 = vmul.f32 %v4244, 0.2
      %v4311 = vsel %vm4247, %v4089, %v4279
      %v4312 = vsel %vm4248, %v4094, %v4280
      %v4313 = vsel %vm4249, %v4099, %v4281
      %v4314 = vsel %vm4250, %v4104, %v4282
      %v4315 = vsel %vm4251, %v4109, %v4283
      %v4316 = vsel %vm4252, %v4114, %v4284
      %v4317 = vsel %vm4253, %v4119, %v4285
      %v4318 = vsel %vm4254, %v4124, %v4286
      %v4319 = vsel %vm4255, %v4129, %v4287
      %v4320 = vsel %vm4256, %v4134, %v4288
      %v4321 = vsel %vm4257, %v4139, %v4289
      %v4322 = vsel %vm4258, %v4144, %v4290
      %v4323 = vsel %vm4259, %v4149, %v4291
      %v4324 = vsel %vm4260, %v4154, %v4292
      %v4325 = vsel %vm4261, %v4159, %v4293
      %v4326 = vsel %vm4262, %v4164, %v4294
      %v4327 = vsel %vm4263, %v4169, %v4295
      %v4328 = vsel %vm4264, %v4174, %v4296
      %v4329 = vsel %vm4265, %v4179, %v4297
      %v4330 = vsel %vm4266, %v4184, %v4298
      %v4331 = vsel %vm4267, %v4189, %v4299
      %v4332 = vsel %vm4268, %v4194, %v4300
      %v4333 = vsel %vm4269, %v4199, %v4301
      %v4334 = vsel %vm4270, %v4204, %v4302
      %v4335 = vsel %vm4271, %v4209, %v4303
      %v4336 = vsel %vm4272, %v4214, %v4304
      %v4337 = vsel %vm4273, %v4219, %v4305
      %v4338 = vsel %vm4274, %v4224, %v4306
      %v4339 = vsel %vm4275, %v4229, %v4307
      %v4340 = vsel %vm4276, %v4234, %v4308
      %v4341 = vsel %vm4277, %v4239, %v4309
      %v4342 = vsel %vm4278, %v4244, %v4310
      %v4343 = vld [vmem:[%s321 + $0x1] sm:$0xff]
      %v4344 = vld [vmem:[%s321 + $0x9] sm:$0xff]
      %v4345 = vld [vmem:[%s321 + $0x19] sm:$0xff]
      %v4346 = vld [vmem:[%s321 + $0x21] sm:$0xff]
      %v4347 = vld [vmem:[%s321 + $0x31] sm:$0xff]
      %v4348 = vld [vmem:[%s321 + $0x39] sm:$0xff]
      %v4349 = vld [vmem:[%s321 + $0x49] sm:$0xff]
      %v4350 = vld [vmem:[%s321 + $0x51] sm:$0xff]
      %v4351 = vld [vmem:[%s321 + $0x61] sm:$0xff]
      %v4352 = vld [vmem:[%s321 + $0x69] sm:$0xff]
      %v4353 = vld [vmem:[%s321 + $0x79] sm:$0xff]
      %v4354 = vld [vmem:[%s321 + $0x81] sm:$0xff]
      %v4355 = vld [vmem:[%s321 + $0x91] sm:$0xff]
      %v4356 = vld [vmem:[%s321 + $0x99] sm:$0xff]
      %v4357 = vld [vmem:[%s321 + $0xa9] sm:$0xff]
      %v4358 = vld [vmem:[%s321 + $0xb1] sm:$0xff]
      %v4359 = vld [vmem:[%s321 + $0xc1] sm:$0xff]
      %v4360 = vld [vmem:[%s321 + $0xc9] sm:$0xff]
      %v4361 = vld [vmem:[%s321 + $0xd9] sm:$0xff]
      %v4362 = vld [vmem:[%s321 + $0xe1] sm:$0xff]
      %v4363 = vld [vmem:[%s321 + $0xf1] sm:$0xff]
      %v4364 = vld [vmem:[%s321 + $0xf9] sm:$0xff]
      %v4365 = vld [vmem:[%s321 + $0x109] sm:$0xff]
      %v4366 = vld [vmem:[%s321 + $0x111] sm:$0xff]
      %v4367 = vld [vmem:[%s321 + $0x121] sm:$0xff]
      %v4368 = vld [vmem:[%s321 + $0x129] sm:$0xff]
      %v4369 = vld [vmem:[%s321 + $0x139] sm:$0xff]
      %v4370 = vld [vmem:[%s321 + $0x141] sm:$0xff]
      %v4371 = vld [vmem:[%s321 + $0x151] sm:$0xff]
      %v4372 = vld [vmem:[%s321 + $0x159] sm:$0xff]
      %v4373 = vld [vmem:[%s321 + $0x169] sm:$0xff]
      %v4374 = vld [vmem:[%s321 + $0x171] sm:$0xff]
      %v4375 = vadd.f32 %v4343, %v4311
      %v4376 = vadd.f32 %v4344, %v4312
      %v4377 = vadd.f32 %v4345, %v4313
      %v4378 = vadd.f32 %v4346, %v4314
      %v4379 = vadd.f32 %v4347, %v4315
      %v4380 = vadd.f32 %v4348, %v4316
      %v4381 = vadd.f32 %v4349, %v4317
      %v4382 = vadd.f32 %v4350, %v4318
      %v4383 = vadd.f32 %v4351, %v4319
      %v4384 = vadd.f32 %v4352, %v4320
      %v4385 = vadd.f32 %v4353, %v4321
      %v4386 = vadd.f32 %v4354, %v4322
      %v4387 = vadd.f32 %v4355, %v4323
      %v4388 = vadd.f32 %v4356, %v4324
      %v4389 = vadd.f32 %v4357, %v4325
      %v4390 = vadd.f32 %v4358, %v4326
      %v4391 = vadd.f32 %v4359, %v4327
      %v4392 = vadd.f32 %v4360, %v4328
      %v4393 = vadd.f32 %v4361, %v4329
      %v4394 = vadd.f32 %v4362, %v4330
      %v4395 = vadd.f32 %v4363, %v4331
      %v4396 = vadd.f32 %v4364, %v4332
      %v4397 = vadd.f32 %v4365, %v4333
      %v4398 = vadd.f32 %v4366, %v4334
      %v4399 = vadd.f32 %v4367, %v4335
      %v4400 = vadd.f32 %v4368, %v4336
      %v4401 = vadd.f32 %v4369, %v4337
      %v4402 = vadd.f32 %v4370, %v4338
      %v4403 = vadd.f32 %v4371, %v4339
      %v4404 = vadd.f32 %v4372, %v4340
      %v4405 = vadd.f32 %v4373, %v4341
      %v4406 = vadd.f32 %v4374, %v4342
      %4407 = vst.msk [vmem:[%s224] sm:$0xff] %vm1539, %v4375
      %4408 = vst.msk [vmem:[%s224 + $0x8] sm:$0xff] %vm1539, %v4376
      %4409 = vst.msk [vmem:[%s224 + $0x10] sm:$0xff] %vm1539, %v4377
      %4410 = vst.msk [vmem:[%s224 + $0x18] sm:$0xff] %vm1539, %v4378
      %4411 = vst.msk [vmem:[%s224 + $0x20] sm:$0xff] %vm1539, %v4379
      %4412 = vst.msk [vmem:[%s224 + $0x28] sm:$0xff] %vm1539, %v4380
      %4413 = vst.msk [vmem:[%s224 + $0x30] sm:$0xff] %vm1539, %v4381
      %4414 = vst.msk [vmem:[%s224 + $0x38] sm:$0xff] %vm1539, %v4382
      %4415 = vst.msk [vmem:[%s224 + $0x40] sm:$0xff] %vm1539, %v4383
      %4416 = vst.msk [vmem:[%s224 + $0x48] sm:$0xff] %vm1539, %v4384
      %4417 = vst.msk [vmem:[%s224 + $0x50] sm:$0xff] %vm1539, %v4385
      %4418 = vst.msk [vmem:[%s224 + $0x58] sm:$0xff] %vm1539, %v4386
      %4419 = vst.msk [vmem:[%s224 + $0x60] sm:$0xff] %vm1539, %v4387
      %4420 = vst.msk [vmem:[%s224 + $0x68] sm:$0xff] %vm1539, %v4388
      %4421 = vst.msk [vmem:[%s224 + $0x70] sm:$0xff] %vm1539, %v4389
      %4422 = vst.msk [vmem:[%s224 + $0x78] sm:$0xff] %vm1539, %v4390
      %4423 = vst.msk [vmem:[%s224 + $0x80] sm:$0xff] %vm1539, %v4391
      %4424 = vst.msk [vmem:[%s224 + $0x88] sm:$0xff] %vm1539, %v4392
      %4425 = vst.msk [vmem:[%s224 + $0x90] sm:$0xff] %vm1539, %v4393
      %4426 = vst.msk [vmem:[%s224 + $0x98] sm:$0xff] %vm1539, %v4394
      %4427 = vst.msk [vmem:[%s224 + $0xa0] sm:$0xff] %vm1539, %v4395
      %4428 = vst.msk [vmem:[%s224 + $0xa8] sm:$0xff] %vm1539, %v4396
      %4429 = vst.msk [vmem:[%s224 + $0xb0] sm:$0xff] %vm1539, %v4397
      %4430 = vst.msk [vmem:[%s224 + $0xb8] sm:$0xff] %vm1539, %v4398
      %4431 = vst.msk [vmem:[%s224 + $0xc0] sm:$0xff] %vm1539, %v4399
      %4432 = vst.msk [vmem:[%s224 + $0xc8] sm:$0xff] %vm1539, %v4400
      %4433 = vst.msk [vmem:[%s224 + $0xd0] sm:$0xff] %vm1539, %v4401
      %4434 = vst.msk [vmem:[%s224 + $0xd8] sm:$0xff] %vm1539, %v4402
      %4435 = vst.msk [vmem:[%s224 + $0xe0] sm:$0xff] %vm1539, %v4403
      %4436 = vst.msk [vmem:[%s224 + $0xe8] sm:$0xff] %vm1539, %v4404
      %4437 = vst.msk [vmem:[%s224 + $0xf0] sm:$0xff] %vm1539, %v4405
      %4438 = vst.msk [vmem:[%s224 + $0xf8] sm:$0xff] %vm1539, %v4406
      %p4439 = scmp.lt.s32.totalorder %s16, 1
      %s4440 = scalar_select %p4439, %s16, 1
      %s4441 = smul.addr %s4440, 32
      %s4442 = smul.addr %s4441, 8
      %s4443 = scalar_lea.vmem %s5, %s4442
      // Predicated region
      $region41: #{tpu_custom_call.1} parent=39 // pred_check
        %p4444 = pneg %p144
      $region42: #{tpu_custom_call.1} parent=39 // pred_check_branch
        %4446 = sbr.rel (%p4444) target = $region44
      $region43: #{tpu_custom_call.1} parent=39 // pred_region
        _
      $region44: #{tpu_custom_call.1} parent=39 // pred_fallthru
        _
    $region40: #{tpu_custom_call.1} parent=5 // pred_fallthru
      _
    %p4447 = scmp.le.s32.totalorder 2, %s11
    // Predicated region
    $region45: #{tpu_custom_call.1} parent=5 // pred_check
      %p4448 = pneg %p4447
    $region46: #{tpu_custom_call.1} parent=5 // pred_check_branch
      %4450 = sbr.rel (%p4448) target = $region48
    $region47: #{tpu_custom_call.1} parent=5 // pred_region
      %s4451 = ssub.s32 %s11, 2
      // Predicated region
      $region49: #{tpu_custom_call.1} parent=47 // pred_check
        %p4452 = pneg %p150
      $region50: #{tpu_custom_call.1} parent=47 // pred_check_branch
        %4454 = sbr.rel (%p4452) target = $region52
      $region51: #{tpu_custom_call.1} parent=47 // pred_region
        %p4455 = scmp.lt.s32.totalorder %s17, 1
        %s4456 = scalar_select %p4455, %s17, 1
        %s4457 = smul.addr %s4456, 32
        %s4458 = smul.addr %s4457, 8
        %s4459 = scalar_lea.vmem %s5, %s4458
      $region52: #{tpu_custom_call.1} parent=47 // pred_fallthru
        _
    $region48: #{tpu_custom_call.1} parent=5 // pred_fallthru
      _
  $region6: #{tpu_custom_call.1} parent=0 // loop_footer
    %s15 = sadd.s32 1, %s11
  $region7: #{tpu_custom_call.1} parent=0 // loop_footer_branch
    %10 = sbr.rel target = $region3
  $region8: #{tpu_custom_call.1} parent=0 // loop_exit
    _

</llo_original>
